<compile_context>
chip_gen: v7x
topology: tpu7x:2x2x1
jax: 0.10.0
libtpu: 0.0.40
codegen_flags: <defaults>
</compile_context>

<pallas_src>
import functools

import numpy as np
import jax
import jax.numpy as jnp
from jax.experimental import pallas as pl
from jax.experimental.pallas import tpu as pltpu


def _round_up(x, m):
    return (x + m - 1) // m * m


def _pick_tile(total, cap):
    """Largest tile <= cap that divides `total` (multiple of 128 when tiled)."""
    if total <= cap:
        return total
    t = (cap // 128) * 128
    while t > 0 and total % t:
        t -= 128
    return t if t > 0 else total


# -----------------------------------------------------------------------------
# Kernel 1: token matmul  y = act(x @ w + bias)   (BN scale pre-folded into w)
#   used for the backbone stand-in conv (wrapper im2col, K=9*Cin, stride-2
#   fused).  Batch is folded into the M (token) dimension -> 512-row MXU tiles.
# -----------------------------------------------------------------------------
def _matmul_bias_act_kernel(x_ref, w_ref, b_ref, o_ref, *, relu):
    y = jnp.dot(x_ref[...], w_ref[...], preferred_element_type=jnp.float32)
    y = y + b_ref[...]
    if relu:
        y = jnp.maximum(y, 0.0)
    o_ref[...] = y.astype(o_ref.dtype)


def matmul_bias_act(x2d, w, b, *, relu, out_dtype=jnp.bfloat16, tm_cap=512):
    M, K = x2d.shape
    Cout = w.shape[-1]
    tm = min(tm_cap, _round_up(M, 8))
    Mp = _round_up(M, tm)
    if Mp != M:
        x2d = jnp.pad(x2d, ((0, Mp - M), (0, 0)))
    kern = functools.partial(_matmul_bias_act_kernel, relu=relu)
    out = pl.pallas_call(
        kern,
        out_shape=jax.ShapeDtypeStruct((Mp, Cout), out_dtype),
        grid=(Mp // tm,),
        in_specs=[
            pl.BlockSpec((tm, K), lambda i: (i, 0)),
            pl.BlockSpec((K, Cout), lambda i: (0, 0)),
            pl.BlockSpec((1, Cout), lambda i: (0, 0)),
        ],
        out_specs=pl.BlockSpec((tm, Cout), lambda i: (i, 0)),
        compiler_params=pltpu.CompilerParams(dimension_semantics=("parallel",)),
    )(x2d, w, b)
    return out[:M]


# -----------------------------------------------------------------------------
# Kernel 2: context 3x3 conv (stride 1, pad 1) + folded BatchNorm, fused with
#   the BaseOC f_key/f_query (1x1 + BN + ReLU, attention scale folded) and
#   f_value (1x1) projections while f is still in VMEM.
#   In-kernel im2col: 9 shifted views packed into a VMEM patch buffer
#   (HW, 9*Cin) so the conv is ONE matmul with K = 9*Cin.
#   Emits three token-major bf16 outputs: f (HW,C), kq (HW,Ck), v (HW,Cv).
# -----------------------------------------------------------------------------
def _ctx_conv_kv_kernel(x_ref, wc_ref, bc_ref, wk_ref, bk_ref, wv_ref, bv_ref,
                        f_ref, kq_ref, v_ref, patch_sc, *, H, W):
    cin = x_ref.shape[-1]
    x = x_ref[0].astype(jnp.float32)                      # (H+2, W+2, Cin)
    # TODO(synk): at large resolutions, tile H with a 1-row halo grid axis and
    # keep the im2col patch buffer in bf16 (or use 9 accumulating matmuls on
    # v7x's MRB) instead of one full-image f32 patch buffer.
    for ky in range(3):
        for kx in range(3):
            tap = x[ky:ky + H, kx:kx + W, :].reshape(H * W, cin)
            patch_sc[:, pl.ds((ky * 3 + kx) * cin, cin)] = tap
    f = jnp.dot(patch_sc[...].astype(jnp.bfloat16), wc_ref[...],
                preferred_element_type=jnp.float32) + bc_ref[...]
    f_bf = f.astype(jnp.bfloat16)
    f_ref[0] = f_bf
    kq = jnp.dot(f_bf, wk_ref[...], preferred_element_type=jnp.float32) + bk_ref[...]
    kq_ref[0] = jnp.maximum(kq, 0.0).astype(jnp.bfloat16)
    val = jnp.dot(f_bf, wv_ref[...], preferred_element_type=jnp.float32) + bv_ref[...]
    v_ref[0] = val.astype(jnp.bfloat16)


def ctx_conv_kv(x_pad_nhwc, wc, bc, wk, bk, wv, bv):
    N, H2, W2, Cin = x_pad_nhwc.shape          # input already halo-padded by 1
    H, W = H2 - 2, W2 - 2
    C, Ck, Cv = wc.shape[-1], wk.shape[-1], wv.shape[-1]
    kern = functools.partial(_ctx_conv_kv_kernel, H=H, W=W)
    return pl.pallas_call(
        kern,
        out_shape=(jax.ShapeDtypeStruct((N, H * W, C), jnp.bfloat16),
                   jax.ShapeDtypeStruct((N, H * W, Ck), jnp.bfloat16),
                   jax.ShapeDtypeStruct((N, H * W, Cv), jnp.bfloat16)),
        grid=(N,),
        in_specs=[
            pl.BlockSpec((1, H2, W2, Cin), lambda n: (n, 0, 0, 0)),
            pl.BlockSpec((9 * Cin, C), lambda n: (0, 0)),
            pl.BlockSpec((1, C), lambda n: (0, 0)),
            pl.BlockSpec((C, Ck), lambda n: (0, 0)),
            pl.BlockSpec((1, Ck), lambda n: (0, 0)),
            pl.BlockSpec((C, Cv), lambda n: (0, 0)),
            pl.BlockSpec((1, Cv), lambda n: (0, 0)),
        ],
        out_specs=(pl.BlockSpec((1, H * W, C), lambda n: (n, 0, 0)),
                   pl.BlockSpec((1, H * W, Ck), lambda n: (n, 0, 0)),
                   pl.BlockSpec((1, H * W, Cv), lambda n: (n, 0, 0))),
        scratch_shapes=[pltpu.VMEM((H * W, 9 * Cin), jnp.float32)],
        compiler_params=pltpu.CompilerParams(dimension_semantics=("parallel",)),
    )(x_pad_nhwc, wc, bc, wk, bk, wv, bv)


# -----------------------------------------------------------------------------
# Kernel 3: BaseOC self-attention, flash-style (online softmax over KV blocks).
#   Q == K (shared f_key/f_query); the key_ch**-0.5 scale is pre-folded into
#   the shared projection, so no per-step scaling here.
#   Epilogue fuses: deferred softmax normalization (approx reciprocal),
#   W 1x1 + concat([ctx, feats]) 1x1 + BN + ReLU (weights pre-folded),
#   and the cls 1x1 conv with a lane-dense (128-wide, zero-padded) output.
# -----------------------------------------------------------------------------
def _baseoc_flash_kernel(kq_ref, fq_ref, k_ref, v_ref, w1_ref, w2_ref, b_ref,
                         clsw_ref, clsb_ref, o_ref, m_sc, l_sc, acc_sc):
    kv = pl.program_id(2)

    @pl.when(kv == 0)
    def _():
        m_sc[...] = jnp.full(m_sc.shape, -jnp.inf, jnp.float32)
        l_sc[...] = jnp.zeros(l_sc.shape, jnp.float32)
        acc_sc[...] = jnp.zeros(acc_sc.shape, jnp.float32)

    q = kq_ref[0]                                           # (TQ, Ck) bf16
    k = k_ref[0]                                            # (TK, Ck) bf16
    v = v_ref[0]                                            # (TK, Cv) bf16

    s = jax.lax.dot_general(q, k, (((1,), (1,)), ((), ())),
                            preferred_element_type=jnp.float32)
    m_prev = m_sc[...]
    m_new = jnp.maximum(m_prev, jnp.max(s, axis=-1, keepdims=True))
    alpha = jnp.exp(m_prev - m_new)
    p = jnp.exp(s - m_new)
    l_sc[...] = alpha * l_sc[...] + jnp.sum(p, axis=-1, keepdims=True)
    acc_sc[...] = alpha * acc_sc[...] + jnp.dot(
        p.astype(jnp.bfloat16), v, preferred_element_type=jnp.float32)
    m_sc[...] = m_new

    @pl.when(kv == pl.num_programs(2) - 1)
    def _():
        ctx = acc_sc[...] * pl.reciprocal(l_sc[...], approx=True)   # (TQ, Cv)
        f = fq_ref[0]                                               # (TQ, C) bf16
        y = (jnp.dot(ctx.astype(jnp.bfloat16), w1_ref[...],
                     preferred_element_type=jnp.float32)
             + jnp.dot(f, w2_ref[...], preferred_element_type=jnp.float32)
             + b_ref[...])
        # TODO(synk): InPlaceABNSync activation approximated as plain BN + ReLU;
        # Dropout2d(0.05) is identity in eval mode.
        y = jnp.maximum(y, 0.0).astype(jnp.bfloat16)
        logits = (jnp.dot(y, clsw_ref[...], preferred_element_type=jnp.float32)
                  + clsb_ref[...])                                  # (TQ, NCp)
        o_ref[0] = logits.astype(o_ref.dtype)


def baseoc_cls_flash(kq_tok, f_tok, v_tok, w1, w2, b, cls_w, cls_b):
    N, HW, Ck = kq_tok.shape
    Cv = v_tok.shape[-1]
    C = f_tok.shape[-1]
    NCp = cls_w.shape[-1]
    TQ = _pick_tile(HW, 256)
    TK = _pick_tile(HW, 512)
    assert HW % TQ == 0 and HW % TK == 0, (HW, TQ, TK)
    return pl.pallas_call(
        _baseoc_flash_kernel,
        out_shape=jax.ShapeDtypeStruct((N, HW, NCp), jnp.bfloat16),
        grid=(N, HW // TQ, HW // TK),
        in_specs=[
            pl.BlockSpec((1, TQ, Ck), lambda n, qi, ki: (n, qi, 0)),   # Q
            pl.BlockSpec((1, TQ, C), lambda n, qi, ki: (n, qi, 0)),    # feats
            pl.BlockSpec((1, TK, Ck), lambda n, qi, ki: (n, ki, 0)),   # K (=Q)
            pl.BlockSpec((1, TK, Cv), lambda n, qi, ki: (n, ki, 0)),   # V
            pl.BlockSpec((Cv, C), lambda n, qi, ki: (0, 0)),
            pl.BlockSpec((C, C), lambda n, qi, ki: (0, 0)),
            pl.BlockSpec((1, C), lambda n, qi, ki: (0, 0)),
            pl.BlockSpec((C, NCp), lambda n, qi, ki: (0, 0)),
            pl.BlockSpec((1, NCp), lambda n, qi, ki: (0, 0)),
        ],
        out_specs=pl.BlockSpec((1, TQ, NCp), lambda n, qi, ki: (n, qi, 0)),
        scratch_shapes=[pltpu.VMEM((TQ, 1), jnp.float32),
                        pltpu.VMEM((TQ, 1), jnp.float32),
                        pltpu.VMEM((TQ, Cv), jnp.float32)],
        compiler_params=pltpu.CompilerParams(
            dimension_semantics=("parallel", "parallel", "arbitrary")),
    )(kq_tok, f_tok, kq_tok, v_tok, w1, w2, b, cls_w, cls_b)


# -----------------------------------------------------------------------------
# Kernel 4: bilinear upsample (align_corners=True) as one interpolation matmul
#   per image:  out[n] = kron(A_h, A_w) @ logits_tok[n]   (lane-dense 128 out)
# -----------------------------------------------------------------------------
def _upsample_kernel(a_ref, x_ref, o_ref):
    o_ref[0] = jnp.dot(a_ref[...], x_ref[0], preferred_element_type=jnp.float32)


def upsample_tokens(a, x_tok):
    N, HW, Cp = x_tok.shape
    O = a.shape[0]
    return pl.pallas_call(
        _upsample_kernel,
        out_shape=jax.ShapeDtypeStruct((N, O, Cp), jnp.float32),
        grid=(N,),
        in_specs=[pl.BlockSpec((O, HW), lambda n: (0, 0)),
                  pl.BlockSpec((1, HW, Cp), lambda n: (n, 0, 0))],
        out_specs=pl.BlockSpec((1, O, Cp), lambda n: (n, 0, 0)),
        compiler_params=pltpu.CompilerParams(dimension_semantics=("parallel",)),
    )(a, x_tok)


# -----------------------------------------------------------------------------
# Wrapper glue: stride-2 im2col (tiny first layer), bilinear operator, params
# -----------------------------------------------------------------------------
def _im2col_3x3_stride2(x):
    # x: (N, H, W, Cin) -> (N, Ho, Wo, 9*Cin) patches of a 3x3/stride-2/pad-1 conv.
    N, H, W, Cin = x.shape
    Ho, Wo = (H + 1) // 2, (W + 1) // 2
    xp = jnp.pad(x, ((0, 0), (1, 1), (1, 1), (0, 0)))
    taps = []
    for ky in range(3):
        for kx in range(3):
            taps.append(xp[:, ky:ky + 2 * Ho - 1:2, kx:kx + 2 * Wo - 1:2, :])
    return jnp.concatenate(taps, axis=-1)


def _bilinear_matrix(out_size, in_size):
    # PyTorch F.interpolate(mode='bilinear', align_corners=True), one axis.
    src = np.arange(out_size, dtype=np.float64) * (in_size - 1) / max(out_size - 1, 1)
    i0 = np.floor(src).astype(np.int64)
    i1 = np.minimum(i0 + 1, in_size - 1)
    w1 = src - i0
    w0 = 1.0 - w1
    A = np.zeros((out_size, in_size), np.float64)
    A[np.arange(out_size), i0] += w0
    A[np.arange(out_size), i1] += w1
    return A


def _folded_bn(key, c, conv_bias, eps=1e-5):
    kg, kb, km, kv = jax.random.split(key, 4)
    gamma = 1.0 + 0.1 * jax.random.normal(kg, (c,), jnp.float32)
    beta = 0.1 * jax.random.normal(kb, (c,), jnp.float32)
    mean = 0.1 * jax.random.normal(km, (c,), jnp.float32)
    var = 1.0 + 0.1 * jax.random.uniform(kv, (c,), jnp.float32)
    scale = gamma / jnp.sqrt(var + eps)
    bias = beta - mean * scale + conv_bias * scale
    return scale.reshape(1, c), bias.reshape(1, c)


def init_params(key, cin_img, inplanes, outplanes, num_classes, hw_in, hw_out):
    ks = list(jax.random.split(key, 24))
    nxt = iter(ks).__next__
    nrm = lambda k, shp, s=0.1: s * jax.random.normal(k, shp, jnp.float32)
    bf = lambda a: a.astype(jnp.bfloat16)
    C, Ck, Cv = outplanes, outplanes // 2, outplanes // 2
    att = float(Ck) ** -0.25      # sqrt of key_channels**-0.5, folded into q==k
    P = {}
    # synthetic backbone stand-in: stride-2 conv3x3 + BN + ReLU (scale folded)
    bb_w = nrm(nxt(), (9 * cin_img, inplanes))
    bb_scale, bb_bias = _folded_bn(nxt(), inplanes, nrm(nxt(), (inplanes,)))
    P["bb_w"] = bf(bb_w * bb_scale)
    P["bb_b"] = bb_bias
    # context: conv3x3 + BN (no activation), scale folded into weights
    ctx_w = nrm(nxt(), (9 * inplanes, C))
    ctx_scale, ctx_bias = _folded_bn(nxt(), C, nrm(nxt(), (C,)))
    P["ctx_w"] = bf(ctx_w * ctx_scale)
    P["ctx_b"] = ctx_bias
    # BaseOC: shared f_key/f_query (1x1 + BN + ReLU), attention scale folded in
    # TODO(synk): InPlaceABNSync activation approximated as plain BN + ReLU.
    wk = nrm(nxt(), (C, Ck))
    k_scale, k_bias = _folded_bn(nxt(), Ck, nrm(nxt(), (Ck,)))
    P["wk"] = bf(wk * k_scale * att)
    P["bk"] = k_bias * att
    # f_value (plain 1x1 conv)
    P["wv"] = bf(nrm(nxt(), (C, Cv)))
    P["bv"] = nrm(nxt(), (1, Cv))
    # NOTE: original OCNet zero-inits W; nonzero deterministic init used here.
    ww = nrm(nxt(), (Cv, C))
    bw = nrm(nxt(), (1, C))
    wcat = nrm(nxt(), (2 * C, C))
    cat_scale, cat_bias = _folded_bn(nxt(), C, nrm(nxt(), (C,)))
    # Exact algebraic fold of (ctx @ ww + bw) -> concat 1x1 conv -> BN:
    #   y = relu(ctx @ W1 + feats @ W2 + B)
    P["att_w1"] = bf((ww @ wcat[:C]) * cat_scale)
    P["att_w2"] = bf(wcat[C:] * cat_scale)
    P["att_b"] = (bw @ wcat[:C]) * cat_scale + cat_bias
    # cls 1x1 conv, zero-padded to a lane-dense 128-wide output
    ncp = max(128, _round_up(num_classes, 128))
    cls_w = nrm(nxt(), (C, num_classes))
    cls_b = nrm(nxt(), (1, num_classes))
    P["cls_w"] = bf(jnp.pad(cls_w, ((0, 0), (0, ncp - num_classes))))
    P["cls_b"] = jnp.pad(cls_b, ((0, 0), (0, ncp - num_classes)))
    # bilinear upsample (align_corners=True) as a single kron(A_h, A_w) operator
    # TODO(synk): at large resolutions use the separable (A_h, A_w) form instead
    # of the dense kron operator.
    a_full = np.kron(_bilinear_matrix(hw_out[0], hw_in[0]),
                     _bilinear_matrix(hw_out[1], hw_in[1]))
    P["up"] = bf(jnp.asarray(a_full, jnp.float32))
    return P


@functools.partial(jax.jit, static_argnames=("num_classes",))
def resnet_base_oc_forward(x_nchw, P, *, num_classes):
    x = jnp.transpose(x_nchw, (0, 2, 3, 1)).astype(jnp.float32)       # NHWC
    N, H0, W0, _ = x.shape
    # --- backbone (stand-in) ---
    # TODO(synk): the real ResNet backbone is an external __init__ argument, not
    # defined by this module; stand-in = stride-2 conv3x3 + BN + ReLU.
    patches = _im2col_3x3_stride2(x).astype(jnp.bfloat16)             # (N,Hf,Wf,27)
    _, Hf, Wf, K9 = patches.shape
    f2d = matmul_bias_act(patches.reshape(N * Hf * Wf, K9),
                          P["bb_w"], P["bb_b"], relu=True)            # bf16
    f = f2d.reshape(N, Hf, Wf, -1)
    # --- context conv3x3 + BN fused with f_key/f_query and f_value projections
    f_pad = jnp.pad(f, ((0, 0), (1, 1), (1, 1), (0, 0)))
    f_tok, kq_tok, v_tok = ctx_conv_kv(f_pad, P["ctx_w"], P["ctx_b"],
                                       P["wk"], P["bk"], P["wv"], P["bv"])
    # --- BaseOC flash attention + W/concat/BN/ReLU + cls 1x1 (fused epilogue)
    logits_tok = baseoc_cls_flash(kq_tok, f_tok, v_tok, P["att_w1"],
                                  P["att_w2"], P["att_b"],
                                  P["cls_w"], P["cls_b"])             # (N,HW,128)
    # --- bilinear upsample (align_corners=True): one interp matmul per image
    up = upsample_tokens(P["up"], logits_tok)                         # (N,H0*W0,128)
    out = up.reshape(N, H0, W0, -1)[:, :, :, :num_classes]
    return jnp.transpose(out, (0, 3, 1, 2))                           # NCHW


if __name__ == "__main__":
    N, CIN, H0, W0 = 2, 3, 16, 16
    INPLANES, OUTPLANES, NUM_CLASSES = 32, 32, 5
    key = jax.random.PRNGKey(0)
    kx, kp = jax.random.split(key)
    x = jax.random.normal(kx, (N, CIN, H0, W0), jnp.float32)
    params = init_params(kp, CIN, INPLANES, OUTPLANES, NUM_CLASSES,
                         hw_in=(H0 // 2, W0 // 2), hw_out=(H0, W0))
    out = resnet_base_oc_forward(x, params, num_classes=NUM_CLASSES)
    out = jax.block_until_ready(out)
    assert out.shape == (N, NUM_CLASSES, H0, W0), out.shape
    assert bool(jnp.all(jnp.isfinite(out)))
    print("KERNEL_OK")
</pallas_src>

<mosaic_0001>
module attributes {stable_mosaic.version = 11 : i64} {
  func.func @_matmul_bias_act_kernel(%arg0: i32, %arg1: memref<128x27xbf16, #tpu.memory_space<vmem>>, %arg2: memref<27x32xbf16, #tpu.memory_space<vmem>>, %arg3: memref<1x32xf32, #tpu.memory_space<vmem>>, %arg4: memref<128x32xbf16, #tpu.memory_space<vmem>>) attributes {dimension_semantics = [#tpu.dimension_semantics<parallel>], iteration_bounds = array<i64: 1>, scalar_prefetch = 0 : i64, scratch_operands = 0 : i64, tpu.core_type = #tpu.core_type<tc>, window_params = [{transform_indices = @transform_0, window_bounds = array<i64: 128, 27>}, {pipeline_mode = #tpu.pipeline_mode<synchronous>, transform_indices = @transform_1, window_bounds = array<i64: 27, 32>}, {pipeline_mode = #tpu.pipeline_mode<synchronous>, transform_indices = @transform_2, window_bounds = array<i64: 1, 32>}, {transform_indices = @transform_3, window_bounds = array<i64: 128, 32>}]} {
    %c0 = arith.constant 0 : index
    %c0_0 = arith.constant 0 : index
    %0 = vector.load %arg1[%c0, %c0_0] : memref<128x27xbf16, #tpu.memory_space<vmem>>, vector<128x27xbf16>
    %c0_1 = arith.constant 0 : index
    %c0_2 = arith.constant 0 : index
    %1 = vector.load %arg2[%c0_1, %c0_2] : memref<27x32xbf16, #tpu.memory_space<vmem>>, vector<27x32xbf16>
    %cst = arith.constant dense<0.000000e+00> : vector<128x32xf32>
    %2 = tpu.matmul %0, %1, %cst {dimension_numbers = #tpu.dot_dimension_numbers<[1], [0], [0], [1], [0, 0, 1, 1], [], []>} : vector<128x27xbf16>, vector<27x32xbf16>, vector<128x32xf32> -> vector<128x32xf32>
    %c0_3 = arith.constant 0 : index
    %c0_4 = arith.constant 0 : index
    %3 = vector.load %arg3[%c0_3, %c0_4] : memref<1x32xf32, #tpu.memory_space<vmem>>, vector<1x32xf32>
    %4 = vector.broadcast %3 : vector<1x32xf32> to vector<128x32xf32>
    %5 = arith.addf %2, %4 : vector<128x32xf32>
    %cst_5 = arith.constant 0.000000e+00 : f32
    %6 = vector.broadcast %cst_5 : f32 to vector<128x32xf32>
    %7 = arith.maximumf %5, %6 : vector<128x32xf32>
    %8 = arith.truncf %7 : vector<128x32xf32> to vector<128x32xbf16>
    %c0_6 = arith.constant 0 : index
    %c0_7 = arith.constant 0 : index
    %9 = vector.load %arg4[%c0_6, %c0_7] : memref<128x32xbf16, #tpu.memory_space<vmem>>, vector<128x32xbf16>
    tpu.vector_store %arg4[%c0_6, %c0_7], %8 {strides = array<i32>} : memref<128x32xbf16, #tpu.memory_space<vmem>>, vector<128x32xbf16>,
    return
  }
  func.func @transform_0(%arg0: i32) -> (i32, i32) {
    %c0_i32 = arith.constant 0 : i32
    %c0_i32_0 = arith.constant 0 : i32
    return %arg0, %c0_i32 : i32, i32
  }
  func.func @transform_1(%arg0: i32) -> (i32, i32) {
    %c0_i32 = arith.constant 0 : i32
    %c0_i32_0 = arith.constant 0 : i32
    %c0_i32_1 = arith.constant 0 : i32
    return %c0_i32, %c0_i32_0 : i32, i32
  }
  func.func @transform_2(%arg0: i32) -> (i32, i32) {
    %c0_i32 = arith.constant 0 : i32
    %c0_i32_0 = arith.constant 0 : i32
    %c0_i32_1 = arith.constant 0 : i32
    return %c0_i32, %c0_i32_0 : i32, i32
  }
  func.func @transform_3(%arg0: i32) -> (i32, i32) {
    %c0_i32 = arith.constant 0 : i32
    %c0_i32_0 = arith.constant 0 : i32
    return %arg0, %c0_i32 : i32, i32
  }
}

module attributes {stable_mosaic.version = 11 : i64} {
  func.func @_baseoc_flash_kernel(%arg0: i32, %arg1: i32, %arg2: i32, %arg3: memref<1x64x16xbf16, #tpu.memory_space<vmem>>, %arg4: memref<1x64x32xbf16, #tpu.memory_space<vmem>>, %arg5: memref<1x64x16xbf16, #tpu.memory_space<vmem>>, %arg6: memref<1x64x16xbf16, #tpu.memory_space<vmem>>, %arg7: memref<16x32xbf16, #tpu.memory_space<vmem>>, %arg8: memref<32x32xbf16, #tpu.memory_space<vmem>>, %arg9: memref<1x32xf32, #tpu.memory_space<vmem>>, %arg10: memref<32x128xbf16, #tpu.memory_space<vmem>>, %arg11: memref<1x128xf32, #tpu.memory_space<vmem>>, %arg12: memref<1x64x128xbf16, #tpu.memory_space<vmem>>, %arg13: memref<64x1xf32, #tpu.memory_space<vmem>>, %arg14: memref<64x1xf32, #tpu.memory_space<vmem>>, %arg15: memref<64x16xf32, #tpu.memory_space<vmem>>) attributes {dimension_semantics = [#tpu.dimension_semantics<parallel>, #tpu.dimension_semantics<parallel>, #tpu.dimension_semantics<arbitrary>], iteration_bounds = array<i64: 2, 1, 1>, scalar_prefetch = 0 : i64, scratch_operands = 3 : i64, tpu.core_type = #tpu.core_type<tc>, window_params = [{transform_indices = @transform_0, window_bounds = array<i64: 1, 64, 16>}, {transform_indices = @transform_1, window_bounds = array<i64: 1, 64, 32>}, {transform_indices = @transform_2, window_bounds = array<i64: 1, 64, 16>}, {transform_indices = @transform_3, window_bounds = array<i64: 1, 64, 16>}, {pipeline_mode = #tpu.pipeline_mode<synchronous>, transform_indices = @transform_4, window_bounds = array<i64: 16, 32>}, {pipeline_mode = #tpu.pipeline_mode<synchronous>, transform_indices = @transform_5, window_bounds = array<i64: 32, 32>}, {pipeline_mode = #tpu.pipeline_mode<synchronous>, transform_indices = @transform_6, window_bounds = array<i64: 1, 32>}, {pipeline_mode = #tpu.pipeline_mode<synchronous>, transform_indices = @transform_7, window_bounds = array<i64: 32, 128>}, {pipeline_mode = #tpu.pipeline_mode<synchronous>, transform_indices = @transform_8, window_bounds = array<i64: 1, 128>}, {transform_indices = @transform_9, window_bounds = array<i64: 1, 64, 128>}]} {
    %c0_i32 = arith.constant 0 : i32
    %0 = arith.cmpi eq, %arg2, %c0_i32 : i32
    %1 = arith.extui %0 : i1 to i32
    %c0_i32_0 = arith.constant 0 : i32
    %2 = arith.cmpi ne, %1, %c0_i32_0 : i32
    scf.if %2 {
      %cst_26 = arith.constant 0xFF800000 : f32
      %36 = vector.broadcast %cst_26 : f32 to vector<64x1xf32>
      %c0_27 = arith.constant 0 : index
      %c0_28 = arith.constant 0 : index
      %37 = vector.load %arg13[%c0_27, %c0_28] : memref<64x1xf32, #tpu.memory_space<vmem>>, vector<64x1xf32>
      tpu.vector_store %arg13[%c0_27, %c0_28], %36 {strides = array<i32>} : memref<64x1xf32, #tpu.memory_space<vmem>>, vector<64x1xf32>,
      %cst_29 = arith.constant 0.000000e+00 : f32
      %38 = vector.broadcast %cst_29 : f32 to vector<64x1xf32>
      %c0_30 = arith.constant 0 : index
      %c0_31 = arith.constant 0 : index
      %39 = vector.load %arg14[%c0_30, %c0_31] : memref<64x1xf32, #tpu.memory_space<vmem>>, vector<64x1xf32>
      tpu.vector_store %arg14[%c0_30, %c0_31], %38 {strides = array<i32>} : memref<64x1xf32, #tpu.memory_space<vmem>>, vector<64x1xf32>,
      %cst_32 = arith.constant 0.000000e+00 : f32
      %40 = vector.broadcast %cst_32 : f32 to vector<64x16xf32>
      %c0_33 = arith.constant 0 : index
      %c0_34 = arith.constant 0 : index
      %41 = vector.load %arg15[%c0_33, %c0_34] : memref<64x16xf32, #tpu.memory_space<vmem>>, vector<64x16xf32>
      tpu.vector_store %arg15[%c0_33, %c0_34], %40 {strides = array<i32>} : memref<64x16xf32, #tpu.memory_space<vmem>>, vector<64x16xf32>,
    } else {
    }
    %c0 = arith.constant 0 : index
    %c0_1 = arith.constant 0 : index
    %c0_2 = arith.constant 0 : index
    %3 = vector.load %arg3[%c0, %c0_1, %c0_2] : memref<1x64x16xbf16, #tpu.memory_space<vmem>>, vector<1x64x16xbf16>
    %4 = vector.shape_cast %3 : vector<1x64x16xbf16> to vector<64x16xbf16>
    %c0_3 = arith.constant 0 : index
    %c0_4 = arith.constant 0 : index
    %c0_5 = arith.constant 0 : index
    %5 = vector.load %arg5[%c0_3, %c0_4, %c0_5] : memref<1x64x16xbf16, #tpu.memory_space<vmem>>, vector<1x64x16xbf16>
    %6 = vector.shape_cast %5 : vector<1x64x16xbf16> to vector<64x16xbf16>
    %c0_6 = arith.constant 0 : index
    %c0_7 = arith.constant 0 : index
    %c0_8 = arith.constant 0 : index
    %7 = vector.load %arg6[%c0_6, %c0_7, %c0_8] : memref<1x64x16xbf16, #tpu.memory_space<vmem>>, vector<1x64x16xbf16>
    %8 = vector.shape_cast %7 : vector<1x64x16xbf16> to vector<64x16xbf16>
    %cst = arith.constant dense<0.000000e+00> : vector<64x64xf32>
    %9 = tpu.matmul %4, %6, %cst {dimension_numbers = #tpu.dot_dimension_numbers<[1], [1], [0], [0], [0, 0, 1, 0], [], []>} : vector<64x16xbf16>, vector<64x16xbf16>, vector<64x64xf32> -> vector<64x64xf32>
    %c0_9 = arith.constant 0 : index
    %c0_10 = arith.constant 0 : index
    %10 = vector.load %arg13[%c0_9, %c0_10] : memref<64x1xf32, #tpu.memory_space<vmem>>, vector<64x1xf32>
    %cst_11 = arith.constant dense<0xFF800000> : vector<64xf32>
    %11 = vector.multi_reduction <maximumf>, %9, %cst_11 [1] : vector<64x64xf32> to vector<64xf32>
    %12 = vector.shape_cast %11 : vector<64xf32> to vector<64x1xf32>
    %13 = arith.maximumf %10, %12 : vector<64x1xf32>
    %14 = arith.subf %10, %13 : vector<64x1xf32>
    %15 = math.exp %14 : vector<64x1xf32>
    %16 = vector.broadcast %13 : vector<64x1xf32> to vector<64x64xf32>
    %17 = arith.subf %9, %16 : vector<64x64xf32>
    %18 = math.exp %17 : vector<64x64xf32>
    %c0_12 = arith.constant 0 : index
    %c0_13 = arith.constant 0 : index
    %19 = vector.load %arg14[%c0_12, %c0_13] : memref<64x1xf32, #tpu.memory_space<vmem>>, vector<64x1xf32>
    %20 = arith.mulf %15, %19 : vector<64x1xf32>
    %cst_14 = arith.constant dense<0.000000e+00> : vector<64xf32>
    %21 = vector.multi_reduction <add>, %18, %cst_14 [1] : vector<64x64xf32> to vector<64xf32>
    %22 = vector.shape_cast %21 : vector<64xf32> to vector<64x1xf32>
    %23 = arith.addf %20, %22 : vector<64x1xf32>
    %c0_15 = arith.constant 0 : index
    %c0_16 = arith.constant 0 : index
    %24 = vector.load %arg14[%c0_15, %c0_16] : memref<64x1xf32, #tpu.memory_space<vmem>>, vector<64x1xf32>
    tpu.vector_store %arg14[%c0_15, %c0_16], %23 {strides = array<i32>} : memref<64x1xf32, #tpu.memory_space<vmem>>, vector<64x1xf32>,
    %c0_17 = arith.constant 0 : index
    %c0_18 = arith.constant 0 : index
    %25 = vector.load %arg15[%c0_17, %c0_18] : memref<64x16xf32, #tpu.memory_space<vmem>>, vector<64x16xf32>
    %26 = vector.broadcast %15 : vector<64x1xf32> to vector<64x16xf32>
    %27 = arith.mulf %26, %25 : vector<64x16xf32>
    %28 = arith.truncf %18 : vector<64x64xf32> to vector<64x64xbf16>
    %cst_19 = arith.constant dense<0.000000e+00> : vector<64x16xf32>
    %29 = tpu.matmul %28, %8, %cst_19 {dimension_numbers = #tpu.dot_dimension_numbers<[1], [0], [0], [1], [0, 0, 1, 1], [], []>} : vector<64x64xbf16>, vector<64x16xbf16>, vector<64x16xf32> -> vector<64x16xf32>
    %30 = arith.addf %27, %29 : vector<64x16xf32>
    %c0_20 = arith.constant 0 : index
    %c0_21 = arith.constant 0 : index
    %31 = vector.load %arg15[%c0_20, %c0_21] : memref<64x16xf32, #tpu.memory_space<vmem>>, vector<64x16xf32>
    tpu.vector_store %arg15[%c0_20, %c0_21], %30 {strides = array<i32>} : memref<64x16xf32, #tpu.memory_space<vmem>>, vector<64x16xf32>,
    %c0_22 = arith.constant 0 : index
    %c0_23 = arith.constant 0 : index
    %32 = vector.load %arg13[%c0_22, %c0_23] : memref<64x1xf32, #tpu.memory_space<vmem>>, vector<64x1xf32>
    tpu.vector_store %arg13[%c0_22, %c0_23], %13 {strides = array<i32>} : memref<64x1xf32, #tpu.memory_space<vmem>>, vector<64x1xf32>,
    %c0_i32_24 = arith.constant 0 : i32
    %33 = arith.cmpi eq, %arg2, %c0_i32_24 : i32
    %34 = arith.extui %33 : i1 to i32
    %c0_i32_25 = arith.constant 0 : i32
    %35 = arith.cmpi ne, %34, %c0_i32_25 : i32
    scf.if %35 {
      %c0_26 = arith.constant 0 : index
      %c0_27 = arith.constant 0 : index
      %36 = vector.load %arg15[%c0_26, %c0_27] : memref<64x16xf32, #tpu.memory_space<vmem>>, vector<64x16xf32>
      %c0_28 = arith.constant 0 : index
      %c0_29 = arith.constant 0 : index
      %37 = vector.load %arg14[%c0_28, %c0_29] : memref<64x1xf32, #tpu.memory_space<vmem>>, vector<64x1xf32>
      %38 = tpu.reciprocal %37 {approx = true} : vector<64x1xf32> -> vector<64x1xf32>
      %39 = vector.broadcast %38 : vector<64x1xf32> to vector<64x16xf32>
      %40 = arith.mulf %36, %39 : vector<64x16xf32>
      %c0_30 = arith.constant 0 : index
      %c0_31 = arith.constant 0 : index
      %c0_32 = arith.constant 0 : index
      %41 = vector.load %arg4[%c0_30, %c0_31, %c0_32] : memref<1x64x32xbf16, #tpu.memory_space<vmem>>, vector<1x64x32xbf16>
      %42 = vector.shape_cast %41 : vector<1x64x32xbf16> to vector<64x32xbf16>
      %43 = arith.truncf %40 : vector<64x16xf32> to vector<64x16xbf16>
      %c0_33 = arith.constant 0 : index
      %c0_34 = arith.constant 0 : index
      %44 = vector.load %arg7[%c0_33, %c0_34] : memref<16x32xbf16, #tpu.memory_space<vmem>>, vector<16x32xbf16>
      %cst_35 = arith.constant dense<0.000000e+00> : vector<64x32xf32>
      %45 = tpu.matmul %43, %44, %cst_35 {dimension_numbers = #tpu.dot_dimension_numbers<[1], [0], [0], [1], [0, 0, 1, 1], [], []>} : vector<64x16xbf16>, vector<16x32xbf16>, vector<64x32xf32> -> vector<64x32xf32>
      %c0_36 = arith.constant 0 : index
      %c0_37 = arith.constant 0 : index
      %46 = vector.load %arg8[%c0_36, %c0_37] : memref<32x32xbf16, #tpu.memory_space<vmem>>, vector<32x32xbf16>
      %cst_38 = arith.constant dense<0.000000e+00> : vector<64x32xf32>
      %47 = tpu.matmul %42, %46, %cst_38 {dimension_numbers = #tpu.dot_dimension_numbers<[1], [0], [0], [1], [0, 0, 1, 1], [], []>} : vector<64x32xbf16>, vector<32x32xbf16>, vector<64x32xf32> -> vector<64x32xf32>
      %48 = arith.addf %45, %47 : vector<64x32xf32>
      %c0_39 = arith.constant 0 : index
      %c0_40 = arith.constant 0 : index
      %49 = vector.load %arg9[%c0_39, %c0_40] : memref<1x32xf32, #tpu.memory_space<vmem>>, vector<1x32xf32>
      %50 = vector.broadcast %49 : vector<1x32xf32> to vector<64x32xf32>
      %51 = arith.addf %48, %50 : vector<64x32xf32>
      %cst_41 = arith.constant 0.000000e+00 : f32
      %52 = vector.broadcast %cst_41 : f32 to vector<64x32xf32>
      %53 = arith.maximumf %51, %52 : vector<64x32xf32>
      %54 = arith.truncf %53 : vector<64x32xf32> to vector<64x32xbf16>
      %c0_42 = arith.constant 0 : index
      %c0_43 = arith.constant 0 : index
      %55 = vector.load %arg10[%c0_42, %c0_43] : memref<32x128xbf16, #tpu.memory_space<vmem>>, vector<32x128xbf16>
      %cst_44 = arith.constant dense<0.000000e+00> : vector<64x128xf32>
      %56 = tpu.matmul %54, %55, %cst_44 {dimension_numbers = #tpu.dot_dimension_numbers<[1], [0], [0], [1], [0, 0, 1, 1], [], []>} : vector<64x32xbf16>, vector<32x128xbf16>, vector<64x128xf32> -> vector<64x128xf32>
      %c0_45 = arith.constant 0 : index
      %c0_46 = arith.constant 0 : index
      %57 = vector.load %arg11[%c0_45, %c0_46] : memref<1x128xf32, #tpu.memory_space<vmem>>, vector<1x128xf32>
      %58 = vector.broadcast %57 : vector<1x128xf32> to vector<64x128xf32>
      %59 = arith.addf %56, %58 : vector<64x128xf32>
      %60 = arith.truncf %59 : vector<64x128xf32> to vector<64x128xbf16>
      %c0_47 = arith.constant 0 : index
      %c0_48 = arith.constant 0 : index
      %c0_49 = arith.constant 0 : index
      %61 = vector.load %arg12[%c0_47, %c0_48, %c0_49] : memref<1x64x128xbf16, #tpu.memory_space<vmem>>, vector<1x64x128xbf16>
      %62 = vector.shape_cast %61 : vector<1x64x128xbf16> to vector<64x128xbf16>
      %63 = vector.shape_cast %60 : vector<64x128xbf16> to vector<1x64x128xbf16>
      tpu.vector_store %arg12[%c0_47, %c0_48, %c0_49], %63 {strides = array<i32>} : memref<1x64x128xbf16, #tpu.memory_space<vmem>>, vector<1x64x128xbf16>,
    } else {
    }
    return
  }
  func.func @transform_0(%arg0: i32, %arg1: i32, %arg2: i32) -> (i32, i32, i32) {
    %c0_i32 = arith.constant 0 : i32
    %c0_i32_0 = arith.constant 0 : i32
    return %arg0, %arg1, %c0_i32 : i32, i32, i32
  }
  func.func @transform_1(%arg0: i32, %arg1: i32, %arg2: i32) -> (i32, i32, i32) {
    %c0_i32 = arith.constant 0 : i32
    %c0_i32_0 = arith.constant 0 : i32
    return %arg0, %arg1, %c0_i32 : i32, i32, i32
  }
  func.func @transform_2(%arg0: i32, %arg1: i32, %arg2: i32) -> (i32, i32, i32) {
    %c0_i32 = arith.constant 0 : i32
    %c0_i32_0 = arith.constant 0 : i32
    return %arg0, %arg2, %c0_i32 : i32, i32, i32
  }
  func.func @transform_3(%arg0: i32, %arg1: i32, %arg2: i32) -> (i32, i32, i32) {
    %c0_i32 = arith.constant 0 : i32
    %c0_i32_0 = arith.constant 0 : i32
    return %arg0, %arg2, %c0_i32 : i32, i32, i32
  }
  func.func @transform_4(%arg0: i32, %arg1: i32, %arg2: i32) -> (i32, i32) {
    %c0_i32 = arith.constant 0 : i32
    %c0_i32_0 = arith.constant 0 : i32
    %c0_i32_1 = arith.constant 0 : i32
    return %c0_i32, %c0_i32_0 : i32, i32
  }
  func.func @transform_5(%arg0: i32, %arg1: i32, %arg2: i32) -> (i32, i32) {
    %c0_i32 = arith.constant 0 : i32
    %c0_i32_0 = arith.constant 0 : i32
    %c0_i32_1 = arith.constant 0 : i32
    return %c0_i32, %c0_i32_0 : i32, i32
  }
  func.func @transform_6(%arg0: i32, %arg1: i32, %arg2: i32) -> (i32, i32) {
    %c0_i32 = arith.constant 0 : i32
    %c0_i32_0 = arith.constant 0 : i32
    %c0_i32_1 = arith.constant 0 : i32
    return %c0_i32, %c0_i32_0 : i32, i32
  }
  func.func @transform_7(%arg0: i32, %arg1: i32, %arg2: i32) -> (i32, i32) {
    %c0_i32 = arith.constant 0 : i32
    %c0_i32_0 = arith.constant 0 : i32
    %c0_i32_1 = arith.constant 0 : i32
    return %c0_i32, %c0_i32_0 : i32, i32
  }
  func.func @transform_8(%arg0: i32, %arg1: i32, %arg2: i32) -> (i32, i32) {
    %c0_i32 = arith.constant 0 : i32
    %c0_i32_0 = arith.constant 0 : i32
    %c0_i32_1 = arith.constant 0 : i32
    return %c0_i32, %c0_i32_0 : i32, i32
  }
  func.func @transform_9(%arg0: i32, %arg1: i32, %arg2: i32) -> (i32, i32, i32) {
    %c0_i32 = arith.constant 0 : i32
    %c0_i32_0 = arith.constant 0 : i32
    return %arg0, %arg1, %c0_i32 : i32, i32, i32
  }
}

module attributes {stable_mosaic.version = 11 : i64} {
  func.func @_ctx_conv_kv_kernel(%arg0: i32, %arg1: memref<1x10x10x32xbf16, #tpu.memory_space<vmem>>, %arg2: memref<288x32xbf16, #tpu.memory_space<vmem>>, %arg3: memref<1x32xf32, #tpu.memory_space<vmem>>, %arg4: memref<32x16xbf16, #tpu.memory_space<vmem>>, %arg5: memref<1x16xf32, #tpu.memory_space<vmem>>, %arg6: memref<32x16xbf16, #tpu.memory_space<vmem>>, %arg7: memref<1x16xf32, #tpu.memory_space<vmem>>, %arg8: memref<1x64x32xbf16, #tpu.memory_space<vmem>>, %arg9: memref<1x64x16xbf16, #tpu.memory_space<vmem>>, %arg10: memref<1x64x16xbf16, #tpu.memory_space<vmem>>, %arg11: memref<64x288xf32, #tpu.memory_space<vmem>>) attributes {dimension_semantics = [#tpu.dimension_semantics<parallel>], iteration_bounds = array<i64: 2>, scalar_prefetch = 0 : i64, scratch_operands = 1 : i64, tpu.core_type = #tpu.core_type<tc>, window_params = [{transform_indices = @transform_0, window_bounds = array<i64: 1, 10, 10, 32>}, {pipeline_mode = #tpu.pipeline_mode<synchronous>, transform_indices = @transform_1, window_bounds = array<i64: 288, 32>}, {pipeline_mode = #tpu.pipeline_mode<synchronous>, transform_indices = @transform_2, window_bounds = array<i64: 1, 32>}, {pipeline_mode = #tpu.pipeline_mode<synchronous>, transform_indices = @transform_3, window_bounds = array<i64: 32, 16>}, {pipeline_mode = #tpu.pipeline_mode<synchronous>, transform_indices = @transform_4, window_bounds = array<i64: 1, 16>}, {pipeline_mode = #tpu.pipeline_mode<synchronous>, transform_indices = @transform_5, window_bounds = array<i64: 32, 16>}, {pipeline_mode = #tpu.pipeline_mode<synchronous>, transform_indices = @transform_6, window_bounds = array<i64: 1, 16>}, {transform_indices = @transform_7, window_bounds = array<i64: 1, 64, 32>}, {transform_indices = @transform_8, window_bounds = array<i64: 1, 64, 16>}, {transform_indices = @transform_9, window_bounds = array<i64: 1, 64, 16>}]} {
    %c0 = arith.constant 0 : index
    %c0_0 = arith.constant 0 : index
    %c0_1 = arith.constant 0 : index
    %c0_2 = arith.constant 0 : index
    %0 = vector.load %arg1[%c0, %c0_0, %c0_1, %c0_2] : memref<1x10x10x32xbf16, #tpu.memory_space<vmem>>, vector<1x10x10x32xbf16>
    %1 = vector.shape_cast %0 : vector<1x10x10x32xbf16> to vector<10x10x32xbf16>
    %2 = arith.extf %1 : vector<10x10x32xbf16> to vector<10x10x32xf32>
    %3 = vector.extract_strided_slice %2 {offsets = [0, 0, 0], sizes = [8, 8, 32], strides = [1, 1, 1]} : vector<10x10x32xf32> to vector<8x8x32xf32>
    %4 = vector.shape_cast %3 : vector<8x8x32xf32> to vector<64x32xf32>
    %c0_3 = arith.constant 0 : index
    %c0_4 = arith.constant 0 : index
    %5 = vector.load %arg11[%c0_3, %c0_4] : memref<64x288xf32, #tpu.memory_space<vmem>>, vector<64x32xf32>
    tpu.vector_store %arg11[%c0_3, %c0_4], %4 {strides = array<i32>} : memref<64x288xf32, #tpu.memory_space<vmem>>, vector<64x32xf32>,
    %6 = vector.extract_strided_slice %2 {offsets = [0, 1, 0], sizes = [8, 8, 32], strides = [1, 1, 1]} : vector<10x10x32xf32> to vector<8x8x32xf32>
    %7 = vector.shape_cast %6 : vector<8x8x32xf32> to vector<64x32xf32>
    %c0_5 = arith.constant 0 : index
    %c32 = arith.constant 32 : index
    %8 = vector.load %arg11[%c0_5, %c32] : memref<64x288xf32, #tpu.memory_space<vmem>>, vector<64x32xf32>
    tpu.vector_store %arg11[%c0_5, %c32], %7 {strides = array<i32>} : memref<64x288xf32, #tpu.memory_space<vmem>>, vector<64x32xf32>,
    %9 = vector.extract_strided_slice %2 {offsets = [0, 2, 0], sizes = [8, 8, 32], strides = [1, 1, 1]} : vector<10x10x32xf32> to vector<8x8x32xf32>
    %10 = vector.shape_cast %9 : vector<8x8x32xf32> to vector<64x32xf32>
    %c0_6 = arith.constant 0 : index
    %c64 = arith.constant 64 : index
    %11 = vector.load %arg11[%c0_6, %c64] : memref<64x288xf32, #tpu.memory_space<vmem>>, vector<64x32xf32>
    tpu.vector_store %arg11[%c0_6, %c64], %10 {strides = array<i32>} : memref<64x288xf32, #tpu.memory_space<vmem>>, vector<64x32xf32>,
    %12 = vector.extract_strided_slice %2 {offsets = [1, 0, 0], sizes = [8, 8, 32], strides = [1, 1, 1]} : vector<10x10x32xf32> to vector<8x8x32xf32>
    %13 = vector.shape_cast %12 : vector<8x8x32xf32> to vector<64x32xf32>
    %c0_7 = arith.constant 0 : index
    %c96 = arith.constant 96 : index
    %14 = vector.load %arg11[%c0_7, %c96] : memref<64x288xf32, #tpu.memory_space<vmem>>, vector<64x32xf32>
    tpu.vector_store %arg11[%c0_7, %c96], %13 {strides = array<i32>} : memref<64x288xf32, #tpu.memory_space<vmem>>, vector<64x32xf32>,
    %15 = vector.extract_strided_slice %2 {offsets = [1, 1, 0], sizes = [8, 8, 32], strides = [1, 1, 1]} : vector<10x10x32xf32> to vector<8x8x32xf32>
    %16 = vector.shape_cast %15 : vector<8x8x32xf32> to vector<64x32xf32>
    %c0_8 = arith.constant 0 : index
    %c128 = arith.constant 128 : index
    %17 = vector.load %arg11[%c0_8, %c128] : memref<64x288xf32, #tpu.memory_space<vmem>>, vector<64x32xf32>
    tpu.vector_store %arg11[%c0_8, %c128], %16 {strides = array<i32>} : memref<64x288xf32, #tpu.memory_space<vmem>>, vector<64x32xf32>,
    %18 = vector.extract_strided_slice %2 {offsets = [1, 2, 0], sizes = [8, 8, 32], strides = [1, 1, 1]} : vector<10x10x32xf32> to vector<8x8x32xf32>
    %19 = vector.shape_cast %18 : vector<8x8x32xf32> to vector<64x32xf32>
    %c0_9 = arith.constant 0 : index
    %c160 = arith.constant 160 : index
    %20 = vector.load %arg11[%c0_9, %c160] : memref<64x288xf32, #tpu.memory_space<vmem>>, vector<64x32xf32>
    tpu.vector_store %arg11[%c0_9, %c160], %19 {strides = array<i32>} : memref<64x288xf32, #tpu.memory_space<vmem>>, vector<64x32xf32>,
    %21 = vector.extract_strided_slice %2 {offsets = [2, 0, 0], sizes = [8, 8, 32], strides = [1, 1, 1]} : vector<10x10x32xf32> to vector<8x8x32xf32>
    %22 = vector.shape_cast %21 : vector<8x8x32xf32> to vector<64x32xf32>
    %c0_10 = arith.constant 0 : index
    %c192 = arith.constant 192 : index
    %23 = vector.load %arg11[%c0_10, %c192] : memref<64x288xf32, #tpu.memory_space<vmem>>, vector<64x32xf32>
    tpu.vector_store %arg11[%c0_10, %c192], %22 {strides = array<i32>} : memref<64x288xf32, #tpu.memory_space<vmem>>, vector<64x32xf32>,
    %24 = vector.extract_strided_slice %2 {offsets = [2, 1, 0], sizes = [8, 8, 32], strides = [1, 1, 1]} : vector<10x10x32xf32> to vector<8x8x32xf32>
    %25 = vector.shape_cast %24 : vector<8x8x32xf32> to vector<64x32xf32>
    %c0_11 = arith.constant 0 : index
    %c224 = arith.constant 224 : index
    %26 = vector.load %arg11[%c0_11, %c224] : memref<64x288xf32, #tpu.memory_space<vmem>>, vector<64x32xf32>
    tpu.vector_store %arg11[%c0_11, %c224], %25 {strides = array<i32>} : memref<64x288xf32, #tpu.memory_space<vmem>>, vector<64x32xf32>,
    %27 = vector.extract_strided_slice %2 {offsets = [2, 2, 0], sizes = [8, 8, 32], strides = [1, 1, 1]} : vector<10x10x32xf32> to vector<8x8x32xf32>
    %28 = vector.shape_cast %27 : vector<8x8x32xf32> to vector<64x32xf32>
    %c0_12 = arith.constant 0 : index
    %c256 = arith.constant 256 : index
    %29 = vector.load %arg11[%c0_12, %c256] : memref<64x288xf32, #tpu.memory_space<vmem>>, vector<64x32xf32>
    tpu.vector_store %arg11[%c0_12, %c256], %28 {strides = array<i32>} : memref<64x288xf32, #tpu.memory_space<vmem>>, vector<64x32xf32>,
    %c0_13 = arith.constant 0 : index
    %c0_14 = arith.constant 0 : index
    %30 = vector.load %arg11[%c0_13, %c0_14] : memref<64x288xf32, #tpu.memory_space<vmem>>, vector<64x288xf32>
    %31 = arith.truncf %30 : vector<64x288xf32> to vector<64x288xbf16>
    %c0_15 = arith.constant 0 : index
    %c0_16 = arith.constant 0 : index
    %32 = vector.load %arg2[%c0_15, %c0_16] : memref<288x32xbf16, #tpu.memory_space<vmem>>, vector<288x32xbf16>
    %cst = arith.constant dense<0.000000e+00> : vector<64x32xf32>
    %33 = tpu.matmul %31, %32, %cst {dimension_numbers = #tpu.dot_dimension_numbers<[1], [0], [0], [1], [0, 0, 1, 1], [], []>} : vector<64x288xbf16>, vector<288x32xbf16>, vector<64x32xf32> -> vector<64x32xf32>
    %c0_17 = arith.constant 0 : index
    %c0_18 = arith.constant 0 : index
    %34 = vector.load %arg3[%c0_17, %c0_18] : memref<1x32xf32, #tpu.memory_space<vmem>>, vector<1x32xf32>
    %35 = vector.broadcast %34 : vector<1x32xf32> to vector<64x32xf32>
    %36 = arith.addf %33, %35 : vector<64x32xf32>
    %37 = arith.truncf %36 : vector<64x32xf32> to vector<64x32xbf16>
    %c0_19 = arith.constant 0 : index
    %c0_20 = arith.constant 0 : index
    %c0_21 = arith.constant 0 : index
    %38 = vector.load %arg8[%c0_19, %c0_20, %c0_21] : memref<1x64x32xbf16, #tpu.memory_space<vmem>>, vector<1x64x32xbf16>
    %39 = vector.shape_cast %38 : vector<1x64x32xbf16> to vector<64x32xbf16>
    %40 = vector.shape_cast %37 : vector<64x32xbf16> to vector<1x64x32xbf16>
    tpu.vector_store %arg8[%c0_19, %c0_20, %c0_21], %40 {strides = array<i32>} : memref<1x64x32xbf16, #tpu.memory_space<vmem>>, vector<1x64x32xbf16>,
    %c0_22 = arith.constant 0 : index
    %c0_23 = arith.constant 0 : index
    %41 = vector.load %arg4[%c0_22, %c0_23] : memref<32x16xbf16, #tpu.memory_space<vmem>>, vector<32x16xbf16>
    %cst_24 = arith.constant dense<0.000000e+00> : vector<64x16xf32>
    %42 = tpu.matmul %37, %41, %cst_24 {dimension_numbers = #tpu.dot_dimension_numbers<[1], [0], [0], [1], [0, 0, 1, 1], [], []>} : vector<64x32xbf16>, vector<32x16xbf16>, vector<64x16xf32> -> vector<64x16xf32>
    %c0_25 = arith.constant 0 : index
    %c0_26 = arith.constant 0 : index
    %43 = vector.load %arg5[%c0_25, %c0_26] : memref<1x16xf32, #tpu.memory_space<vmem>>, vector<1x16xf32>
    %44 = vector.broadcast %43 : vector<1x16xf32> to vector<64x16xf32>
    %45 = arith.addf %42, %44 : vector<64x16xf32>
    %cst_27 = arith.constant 0.000000e+00 : f32
    %46 = vector.broadcast %cst_27 : f32 to vector<64x16xf32>
    %47 = arith.maximumf %45, %46 : vector<64x16xf32>
    %48 = arith.truncf %47 : vector<64x16xf32> to vector<64x16xbf16>
    %c0_28 = arith.constant 0 : index
    %c0_29 = arith.constant 0 : index
    %c0_30 = arith.constant 0 : index
    %49 = vector.load %arg9[%c0_28, %c0_29, %c0_30] : memref<1x64x16xbf16, #tpu.memory_space<vmem>>, vector<1x64x16xbf16>
    %50 = vector.shape_cast %49 : vector<1x64x16xbf16> to vector<64x16xbf16>
    %51 = vector.shape_cast %48 : vector<64x16xbf16> to vector<1x64x16xbf16>
    tpu.vector_store %arg9[%c0_28, %c0_29, %c0_30], %51 {strides = array<i32>} : memref<1x64x16xbf16, #tpu.memory_space<vmem>>, vector<1x64x16xbf16>,
    %c0_31 = arith.constant 0 : index
    %c0_32 = arith.constant 0 : index
    %52 = vector.load %arg6[%c0_31, %c0_32] : memref<32x16xbf16, #tpu.memory_space<vmem>>, vector<32x16xbf16>
    %cst_33 = arith.constant dense<0.000000e+00> : vector<64x16xf32>
    %53 = tpu.matmul %37, %52, %cst_33 {dimension_numbers = #tpu.dot_dimension_numbers<[1], [0], [0], [1], [0, 0, 1, 1], [], []>} : vector<64x32xbf16>, vector<32x16xbf16>, vector<64x16xf32> -> vector<64x16xf32>
    %c0_34 = arith.constant 0 : index
    %c0_35 = arith.constant 0 : index
    %54 = vector.load %arg7[%c0_34, %c0_35] : memref<1x16xf32, #tpu.memory_space<vmem>>, vector<1x16xf32>
    %55 = vector.broadcast %54 : vector<1x16xf32> to vector<64x16xf32>
    %56 = arith.addf %53, %55 : vector<64x16xf32>
    %57 = arith.truncf %56 : vector<64x16xf32> to vector<64x16xbf16>
    %c0_36 = arith.constant 0 : index
    %c0_37 = arith.constant 0 : index
    %c0_38 = arith.constant 0 : index
    %58 = vector.load %arg10[%c0_36, %c0_37, %c0_38] : memref<1x64x16xbf16, #tpu.memory_space<vmem>>, vector<1x64x16xbf16>
    %59 = vector.shape_cast %58 : vector<1x64x16xbf16> to vector<64x16xbf16>
    %60 = vector.shape_cast %57 : vector<64x16xbf16> to vector<1x64x16xbf16>
    tpu.vector_store %arg10[%c0_36, %c0_37, %c0_38], %60 {strides = array<i32>} : memref<1x64x16xbf16, #tpu.memory_space<vmem>>, vector<1x64x16xbf16>,
    return
  }
  func.func @transform_0(%arg0: i32) -> (i32, i32, i32, i32) {
    %c0_i32 = arith.constant 0 : i32
    %c0_i32_0 = arith.constant 0 : i32
    %c0_i32_1 = arith.constant 0 : i32
    %c0_i32_2 = arith.constant 0 : i32
    return %arg0, %c0_i32, %c0_i32_0, %c0_i32_1 : i32, i32, i32, i32
  }
  func.func @transform_1(%arg0: i32) -> (i32, i32) {
    %c0_i32 = arith.constant 0 : i32
    %c0_i32_0 = arith.constant 0 : i32
    %c0_i32_1 = arith.constant 0 : i32
    return %c0_i32, %c0_i32_0 : i32, i32
  }
  func.func @transform_2(%arg0: i32) -> (i32, i32) {
    %c0_i32 = arith.constant 0 : i32
    %c0_i32_0 = arith.constant 0 : i32
    %c0_i32_1 = arith.constant 0 : i32
    return %c0_i32, %c0_i32_0 : i32, i32
  }
  func.func @transform_3(%arg0: i32) -> (i32, i32) {
    %c0_i32 = arith.constant 0 : i32
    %c0_i32_0 = arith.constant 0 : i32
    %c0_i32_1 = arith.constant 0 : i32
    return %c0_i32, %c0_i32_0 : i32, i32
  }
  func.func @transform_4(%arg0: i32) -> (i32, i32) {
    %c0_i32 = arith.constant 0 : i32
    %c0_i32_0 = arith.constant 0 : i32
    %c0_i32_1 = arith.constant 0 : i32
    return %c0_i32, %c0_i32_0 : i32, i32
  }
  func.func @transform_5(%arg0: i32) -> (i32, i32) {
    %c0_i32 = arith.constant 0 : i32
    %c0_i32_0 = arith.constant 0 : i32
    %c0_i32_1 = arith.constant 0 : i32
    return %c0_i32, %c0_i32_0 : i32, i32
  }
  func.func @transform_6(%arg0: i32) -> (i32, i32) {
    %c0_i32 = arith.constant 0 : i32
    %c0_i32_0 = arith.constant 0 : i32
    %c0_i32_1 = arith.constant 0 : i32
    return %c0_i32, %c0_i32_0 : i32, i32
  }
  func.func @transform_7(%arg0: i32) -> (i32, i32, i32) {
    %c0_i32 = arith.constant 0 : i32
    %c0_i32_0 = arith.constant 0 : i32
    %c0_i32_1 = arith.constant 0 : i32
    return %arg0, %c0_i32, %c0_i32_0 : i32, i32, i32
  }
  func.func @transform_8(%arg0: i32) -> (i32, i32, i32) {
    %c0_i32 = arith.constant 0 : i32
    %c0_i32_0 = arith.constant 0 : i32
    %c0_i32_1 = arith.constant 0 : i32
    return %arg0, %c0_i32, %c0_i32_0 : i32, i32, i32
  }
  func.func @transform_9(%arg0: i32) -> (i32, i32, i32) {
    %c0_i32 = arith.constant 0 : i32
    %c0_i32_0 = arith.constant 0 : i32
    %c0_i32_1 = arith.constant 0 : i32
    return %arg0, %c0_i32, %c0_i32_0 : i32, i32, i32
  }
}

module attributes {stable_mosaic.version = 11 : i64} {
  func.func @_upsample_kernel(%arg0: i32, %arg1: memref<256x64xbf16, #tpu.memory_space<vmem>>, %arg2: memref<1x64x128xbf16, #tpu.memory_space<vmem>>, %arg3: memref<1x256x128xf32, #tpu.memory_space<vmem>>) attributes {dimension_semantics = [#tpu.dimension_semantics<parallel>], iteration_bounds = array<i64: 2>, scalar_prefetch = 0 : i64, scratch_operands = 0 : i64, tpu.core_type = #tpu.core_type<tc>, window_params = [{pipeline_mode = #tpu.pipeline_mode<synchronous>, transform_indices = @transform_0, window_bounds = array<i64: 256, 64>}, {transform_indices = @transform_1, window_bounds = array<i64: 1, 64, 128>}, {transform_indices = @transform_2, window_bounds = array<i64: 1, 256, 128>}]} {
    %c0 = arith.constant 0 : index
    %c0_0 = arith.constant 0 : index
    %0 = vector.load %arg1[%c0, %c0_0] : memref<256x64xbf16, #tpu.memory_space<vmem>>, vector<256x64xbf16>
    %c0_1 = arith.constant 0 : index
    %c0_2 = arith.constant 0 : index
    %c0_3 = arith.constant 0 : index
    %1 = vector.load %arg2[%c0_1, %c0_2, %c0_3] : memref<1x64x128xbf16, #tpu.memory_space<vmem>>, vector<1x64x128xbf16>
    %2 = vector.shape_cast %1 : vector<1x64x128xbf16> to vector<64x128xbf16>
    %cst = arith.constant dense<0.000000e+00> : vector<256x128xf32>
    %3 = tpu.matmul %0, %2, %cst {dimension_numbers = #tpu.dot_dimension_numbers<[1], [0], [0], [1], [0, 0, 1, 1], [], []>} : vector<256x64xbf16>, vector<64x128xbf16>, vector<256x128xf32> -> vector<256x128xf32>
    %c0_4 = arith.constant 0 : index
    %c0_5 = arith.constant 0 : index
    %c0_6 = arith.constant 0 : index
    %4 = vector.load %arg3[%c0_4, %c0_5, %c0_6] : memref<1x256x128xf32, #tpu.memory_space<vmem>>, vector<1x256x128xf32>
    %5 = vector.shape_cast %4 : vector<1x256x128xf32> to vector<256x128xf32>
    %6 = vector.shape_cast %3 : vector<256x128xf32> to vector<1x256x128xf32>
    tpu.vector_store %arg3[%c0_4, %c0_5, %c0_6], %6 {strides = array<i32>} : memref<1x256x128xf32, #tpu.memory_space<vmem>>, vector<1x256x128xf32>,
    return
  }
  func.func @transform_0(%arg0: i32) -> (i32, i32) {
    %c0_i32 = arith.constant 0 : i32
    %c0_i32_0 = arith.constant 0 : i32
    %c0_i32_1 = arith.constant 0 : i32
    return %c0_i32, %c0_i32_0 : i32, i32
  }
  func.func @transform_1(%arg0: i32) -> (i32, i32, i32) {
    %c0_i32 = arith.constant 0 : i32
    %c0_i32_0 = arith.constant 0 : i32
    %c0_i32_1 = arith.constant 0 : i32
    return %arg0, %c0_i32, %c0_i32_0 : i32, i32, i32
  }
  func.func @transform_2(%arg0: i32) -> (i32, i32, i32) {
    %c0_i32 = arith.constant 0 : i32
    %c0_i32_0 = arith.constant 0 : i32
    %c0_i32_1 = arith.constant 0 : i32
    return %arg0, %c0_i32, %c0_i32_0 : i32, i32, i32
  }
}

</mosaic_0001>

<llo_original>
// kernel: resnet_base_oc_forward.4
$region0: #{resnet_base_oc_forward.4}
  #allocation0 [shape = 'u32[]', space=smem, size = 0x4, offset = 0x4, fixed_abs, tag = 'smem constant byte address 0x4 - core index']
  #allocation1 [shape = 'u32[144,128]{1,0:T(1,128)}', space=vmem, size = 0x12000, scoped, tag = 'internal scratch']
  %s0 = inlined_call_operand.vmem [shape: bf16[128,27], index: 0, kind: input, shape index: {}]
  %s1 = inlined_call_operand.vmem [shape: bf16[27,32], index: 1, kind: input, shape index: {}]
  %s2 = inlined_call_operand.vmem [shape: f32[1,32], index: 2, kind: input, shape index: {}]
  %s3 = inlined_call_operand.vmem [shape: bf16[128,32], index: 3, kind: output, shape index: {}]
  %s4 = sld [smem:[#allocation0]]
  $region22: #{resnet_base_oc_forward.4} parent=0
    _
  %s6 = ssub.s32 1, %s4
  %s7 = scalar_select 0, %s6, %s4
  // Predicated region
  $region2: #{resnet_base_oc_forward.4} parent=0 // pred_check
    _
  $region3: #{resnet_base_oc_forward.4} parent=0 // pred_check_branch
    %9 = sbr.rel (0) target = $region5
  $region4: #{resnet_base_oc_forward.4} parent=0 // pred_region
    _
  $region5: #{resnet_base_oc_forward.4} parent=0 // pred_fallthru
    _
  // Predicated region
  $region6: #{resnet_base_oc_forward.4} parent=0 // pred_check
    _
  $region7: #{resnet_base_oc_forward.4} parent=0 // pred_check_branch
    %11 = sbr.rel (0) target = $region9
  $region8: #{resnet_base_oc_forward.4} parent=0 // pred_region
    _
  $region9: #{resnet_base_oc_forward.4} parent=0 // pred_fallthru
    _
  // Predicated region
  $region10: #{resnet_base_oc_forward.4} parent=0 // pred_check
    _
  $region11: #{resnet_base_oc_forward.4} parent=0 // pred_check_branch
    %13 = sbr.rel (0) target = $region13
  $region12: #{resnet_base_oc_forward.4} parent=0 // pred_region
    _
  $region13: #{resnet_base_oc_forward.4} parent=0 // pred_fallthru
    _
  %v15 = vld [vmem:[%s0] sm:$0xf]
  %v16 = vld [vmem:[%s0 + $0x4] sm:$0xf]
  %v17 = vld [vmem:[%s0 + $0x8] sm:$0xf]
  %v18 = vld [vmem:[%s0 + $0xc] sm:$0xf]
  %v19 = vld [vmem:[%s0 + $0x10] sm:$0xf]
  %v20 = vld [vmem:[%s0 + $0x14] sm:$0xf]
  %v21 = vld [vmem:[%s0 + $0x18] sm:$0xf]
  %v22 = vld [vmem:[%s0 + $0x1c] sm:$0xf]
  %v23 = vld [vmem:[%s0 + $0x20] sm:$0xf]
  %v24 = vld [vmem:[%s0 + $0x24] sm:$0xf]
  %v25 = vld [vmem:[%s0 + $0x28] sm:$0xf]
  %v26 = vld [vmem:[%s0 + $0x2c] sm:$0xf]
  %v27 = vld [vmem:[%s0 + $0x30] sm:$0xf]
  %v28 = vld [vmem:[%s0 + $0x34] sm:$0xf]
  %v29 = vld [vmem:[%s0 + $0x38] sm:$0xf]
  %v30 = vld [vmem:[%s0 + $0x3c] sm:$0xf]
  %v31 = vld [vmem:[%s1] sm:$0xf]
  %v32 = vld [vmem:[%s1 + $0x4] sm:$0xf]
  %v33 = vld [vmem:[%s1 + $0x8] sm:$0xf]
  %v34 = vld [vmem:[%s1 + $0xc] sm:$0x3]
  %v35 = vld [vmem:[%s2] sm:$0x1]
  %v37 = vlaneseq
  %v38 = vshrl.u32 %v37, 7
  %v39 = vsub.s32 0, %v38
  %v40 = vrot.slane %v35, %v39
  %v58 = vunpack.c.l.b16 %v15
  %v59 = vunpack.c.l.b16 %v16
  %v60 = vunpack.c.l.b16 %v17
  %v61 = vunpack.c.l.b16 %v18
  %v62 = vunpack.c.l.b16 %v19
  %v63 = vunpack.c.l.b16 %v20
  %v64 = vunpack.c.l.b16 %v21
  %v65 = vunpack.c.l.b16 %v22
  %v66 = vunpack.c.l.b16 %v23
  %v67 = vunpack.c.l.b16 %v24
  %v68 = vunpack.c.l.b16 %v25
  %v69 = vunpack.c.l.b16 %v26
  %v70 = vunpack.c.l.b16 %v27
  %v71 = vunpack.c.l.b16 %v28
  %v72 = vunpack.c.l.b16 %v29
  %v73 = vunpack.c.l.b16 %v30
  %v74 = vpack.c.b16 %v59, %v58
  %v75 = vpack.c.b16 %v61, %v60
  %v76 = vpack.c.b16 %v63, %v62
  %v77 = vpack.c.b16 %v65, %v64
  %v78 = vpack.c.b16 %v67, %v66
  %v79 = vpack.c.b16 %v69, %v68
  %v80 = vpack.c.b16 %v71, %v70
  %v81 = vpack.c.b16 %v73, %v72
  %v86 = vunpack.c.l.b16 %v31
  %v87 = vunpack.c.l.b16 %v32
  %v88 = vunpack.c.l.b16 %v33
  %v89 = vunpack.c.l.b16 %v34
  %v90 = vpack.c.b16 %v87, %v86
  %v91 = vpack.c.b16 %v89, %v88
  %vm93 = vcmask 220160
  %v95 = vsel %vm93, %v74, 0
  %v98 = vsel %vm93, %v75, 0
  %v101 = vsel %vm93, %v76, 0
  %v104 = vsel %vm93, %v77, 0
  %v107 = vsel %vm93, %v78, 0
  %v110 = vsel %vm93, %v79, 0
  %v113 = vsel %vm93, %v80, 0
  %v116 = vsel %vm93, %v81, 0
  %vm118 = vcmask 1044480
  %vm119 = vcmask 1045504
  %v120 = vsel %vm118, 4294967295, 65535
  %v121 = vsel %vm119, %v120, 0
  %v123 = vand.u32 %v91, %v121
  %125 = vmatprep.subr.bf16.mxu0 0
  %126 = vmatpush1.bf16.msra.mxu0 %v90
  %127 = vmatprep.subr.bf16.mxu0 0
  %128 = vmatpush1.bf16.msra.mxu0 %v123
  %129 = vmatprep.subr.bf16.mxu0 0
  %130 = vmatpush1.bf16.msra.mxu0 0
  %131 = vmatprep.subr.bf16.mxu0 0
  %132 = vmatpush1.bf16.msra.mxu0 0
  %133 = vmatprep.subr.bf16.mxu0 0
  %134 = vmatpush1.bf16.msra.mxu0 0
  %135 = vmatprep.subr.bf16.mxu0 0
  %136 = vmatpush1.bf16.msra.mxu0 0
  %137 = vmatprep.subr.bf16.mxu0 0
  %138 = vmatpush1.bf16.msra.mxu0 0
  %139 = vmatprep.subr.bf16.mxu0 0
  %140 = vmatpush1.bf16.msra.mxu0 0
  %141 = vmatprep.subr.bf16.mxu0 0
  %142 = vmatpush1.bf16.msra.mxu0 0
  %143 = vmatprep.subr.bf16.mxu0 0
  %144 = vmatpush1.bf16.msra.mxu0 0
  %145 = vmatprep.subr.bf16.mxu0 0
  %146 = vmatpush1.bf16.msra.mxu0 0
  %147 = vmatprep.subr.bf16.mxu0 0
  %148 = vmatpush1.bf16.msra.mxu0 0
  %149 = vmatprep.subr.bf16.mxu0 0
  %150 = vmatpush1.bf16.msra.mxu0 0
  %151 = vmatprep.subr.bf16.mxu0 0
  %152 = vmatpush1.bf16.msra.mxu0 0
  %153 = vmatprep.subr.bf16.mxu0 0
  %154 = vmatpush1.bf16.msra.mxu0 0
  %155 = vmatprep.subr.bf16.mxu0 0
  %156 = vmatpush1.bf16.msra.mxu0 0
  %157 = vmatprep.mubr.bf16.mxu0 0
  %158 = vmatmul.mubr.bf16.gmra.mrb[0].mxu0 %v95
  %v159 = vpop.f32.mrb[0].mxu0
  %v160 = vadd.f32 %v40, %v159
  %v161 = vpop.f32.mrb[0].mxu0
  %v162 = vpop.f32.mrb[0].mxu0
  %v163 = vadd.f32 %v40, %v162
  %v164 = vpop.f32.mrb[0].mxu0
  %165 = vmatprep.mubr.bf16.mxu0 0
  %166 = vmatmul.mubr.bf16.gmra.mrb[0].mxu0 %v98
  %v167 = vpop.f32.mrb[0].mxu0
  %v168 = vadd.f32 %v40, %v167
  %v169 = vpop.f32.mrb[0].mxu0
  %v170 = vpop.f32.mrb[0].mxu0
  %v171 = vadd.f32 %v40, %v170
  %v172 = vpop.f32.mrb[0].mxu0
  %173 = vmatprep.mubr.bf16.mxu0 0
  %174 = vmatmul.mubr.bf16.gmra.mrb[0].mxu0 %v101
  %v175 = vpop.f32.mrb[0].mxu0
  %v176 = vadd.f32 %v40, %v175
  %v177 = vpop.f32.mrb[0].mxu0
  %v178 = vpop.f32.mrb[0].mxu0
  %v179 = vadd.f32 %v40, %v178
  %v180 = vpop.f32.mrb[0].mxu0
  %181 = vmatprep.mubr.bf16.mxu0 0
  %182 = vmatmul.mubr.bf16.gmra.mrb[0].mxu0 %v104
  %v183 = vpop.f32.mrb[0].mxu0
  %v184 = vadd.f32 %v40, %v183
  %v185 = vpop.f32.mrb[0].mxu0
  %v186 = vpop.f32.mrb[0].mxu0
  %v187 = vadd.f32 %v40, %v186
  %v188 = vpop.f32.mrb[0].mxu0
  %189 = vmatprep.mubr.bf16.mxu0 0
  %190 = vmatmul.mubr.bf16.gmra.mrb[0].mxu0 %v107
  %v191 = vpop.f32.mrb[0].mxu0
  %v192 = vadd.f32 %v40, %v191
  %v193 = vpop.f32.mrb[0].mxu0
  %v194 = vpop.f32.mrb[0].mxu0
  %v195 = vadd.f32 %v40, %v194
  %v196 = vpop.f32.mrb[0].mxu0
  %197 = vmatprep.mubr.bf16.mxu0 0
  %198 = vmatmul.mubr.bf16.gmra.mrb[0].mxu0 %v110
  %v199 = vpop.f32.mrb[0].mxu0
  %v200 = vadd.f32 %v40, %v199
  %v201 = vpop.f32.mrb[0].mxu0
  %v202 = vpop.f32.mrb[0].mxu0
  %v203 = vadd.f32 %v40, %v202
  %v204 = vpop.f32.mrb[0].mxu0
  %205 = vmatprep.mubr.bf16.mxu0 0
  %206 = vmatmul.mubr.bf16.gmra.mrb[0].mxu0 %v113
  %v207 = vpop.f32.mrb[0].mxu0
  %v208 = vadd.f32 %v40, %v207
  %v209 = vpop.f32.mrb[0].mxu0
  %v210 = vpop.f32.mrb[0].mxu0
  %v211 = vadd.f32 %v40, %v210
  %v212 = vpop.f32.mrb[0].mxu0
  %213 = vmatprep.mubr.bf16.mxu0 0
  %214 = vmatmul.mubr.bf16.gmra.mrb[0].mxu0 %v116
  %v215 = vpop.f32.mrb[0].mxu0
  %v216 = vadd.f32 %v40, %v215
  %v217 = vpop.f32.mrb[0].mxu0
  %v218 = vpop.f32.mrb[0].mxu0
  %v219 = vadd.f32 %v40, %v218
  %v220 = vpop.f32.mrb[0].mxu0
  %221 = vdwg.mxu0
  %v222 = vmax.f32 %v160, 0.0
  %v223 = vmax.f32 %v163, 0.0
  %v224 = vmax.f32 %v168, 0.0
  %v225 = vmax.f32 %v171, 0.0
  %v226 = vmax.f32 %v176, 0.0
  %v227 = vmax.f32 %v179, 0.0
  %v228 = vmax.f32 %v184, 0.0
  %v229 = vmax.f32 %v187, 0.0
  %v230 = vmax.f32 %v192, 0.0
  %v231 = vmax.f32 %v195, 0.0
  %v232 = vmax.f32 %v200, 0.0
  %v233 = vmax.f32 %v203, 0.0
  %v234 = vmax.f32 %v208, 0.0
  %v235 = vmax.f32 %v211, 0.0
  %v236 = vmax.f32 %v216, 0.0
  %v237 = vmax.f32 %v219, 0.0
  %v238 = vpack.c.bf16 %v223, %v222
  %v239 = vpack.c.bf16 %v225, %v224
  %v240 = vpack.c.bf16 %v227, %v226
  %v241 = vpack.c.bf16 %v229, %v228
  %v242 = vpack.c.bf16 %v231, %v230
  %v243 = vpack.c.bf16 %v233, %v232
  %v244 = vpack.c.bf16 %v235, %v234
  %v245 = vpack.c.bf16 %v237, %v236
  %v254 = vunpack.c.l.b16 %v238
  %v255 = vunpack.c.h.b16 %v238
  %v256 = vunpack.c.l.b16 %v239
  %v257 = vunpack.c.h.b16 %v239
  %v258 = vunpack.c.l.b16 %v240
  %v259 = vunpack.c.h.b16 %v240
  %v260 = vunpack.c.l.b16 %v241
  %v261 = vunpack.c.h.b16 %v241
  %v262 = vunpack.c.l.b16 %v242
  %v263 = vunpack.c.h.b16 %v242
  %v264 = vunpack.c.l.b16 %v243
  %v265 = vunpack.c.h.b16 %v243
  %v266 = vunpack.c.l.b16 %v244
  %v267 = vunpack.c.h.b16 %v244
  %v268 = vunpack.c.l.b16 %v245
  %v269 = vunpack.c.h.b16 %v245
  %v270 = vpack.c.b16 %v254, %v254
  %v271 = vpack.c.b16 %v255, %v255
  %v272 = vpack.c.b16 %v256, %v256
  %v273 = vpack.c.b16 %v257, %v257
  %v274 = vpack.c.b16 %v258, %v258
  %v275 = vpack.c.b16 %v259, %v259
  %v276 = vpack.c.b16 %v260, %v260
  %v277 = vpack.c.b16 %v261, %v261
  %v278 = vpack.c.b16 %v262, %v262
  %v279 = vpack.c.b16 %v263, %v263
  %v280 = vpack.c.b16 %v264, %v264
  %v281 = vpack.c.b16 %v265, %v265
  %v282 = vpack.c.b16 %v266, %v266
  %v283 = vpack.c.b16 %v267, %v267
  %v284 = vpack.c.b16 %v268, %v268
  %v285 = vpack.c.b16 %v269, %v269
  %vm302 = vcmask 257024
  %303 = vst.msk [vmem:[%s3] sm:$0xf] %vm302, %v270
  %304 = vst.msk [vmem:[%s3 + $0x4] sm:$0xf] %vm302, %v271
  %305 = vst.msk [vmem:[%s3 + $0x8] sm:$0xf] %vm302, %v272
  %306 = vst.msk [vmem:[%s3 + $0xc] sm:$0xf] %vm302, %v273
  %307 = vst.msk [vmem:[%s3 + $0x10] sm:$0xf] %vm302, %v274
  %308 = vst.msk [vmem:[%s3 + $0x14] sm:$0xf] %vm302, %v275
  %309 = vst.msk [vmem:[%s3 + $0x18] sm:$0xf] %vm302, %v276
  %310 = vst.msk [vmem:[%s3 + $0x1c] sm:$0xf] %vm302, %v277
  %311 = vst.msk [vmem:[%s3 + $0x20] sm:$0xf] %vm302, %v278
  %312 = vst.msk [vmem:[%s3 + $0x24] sm:$0xf] %vm302, %v279
  %313 = vst.msk [vmem:[%s3 + $0x28] sm:$0xf] %vm302, %v280
  %314 = vst.msk [vmem:[%s3 + $0x2c] sm:$0xf] %vm302, %v281
  %315 = vst.msk [vmem:[%s3 + $0x30] sm:$0xf] %vm302, %v282
  %316 = vst.msk [vmem:[%s3 + $0x34] sm:$0xf] %vm302, %v283
  %317 = vst.msk [vmem:[%s3 + $0x38] sm:$0xf] %vm302, %v284
  %318 = vst.msk [vmem:[%s3 + $0x3c] sm:$0xf] %vm302, %v285
  // Predicated region
  $region14: #{resnet_base_oc_forward.4} parent=0 // pred_check
    _
  $region15: #{resnet_base_oc_forward.4} parent=0 // pred_check_branch
    %320 = sbr.rel (0) target = $region17
  $region16: #{resnet_base_oc_forward.4} parent=0 // pred_region
    _
  $region17: #{resnet_base_oc_forward.4} parent=0 // pred_fallthru
    _
  // Predicated region
  $region18: #{resnet_base_oc_forward.4} parent=0 // pred_check
    _
  $region19: #{resnet_base_oc_forward.4} parent=0 // pred_check_branch
    %322 = sbr.rel (0) target = $region21
  $region20: #{resnet_base_oc_forward.4} parent=0 // pred_region
    _
  $region21: #{resnet_base_oc_forward.4} parent=0 // pred_fallthru
    _

// kernel: resnet_base_oc_forward.7
$region0: #{resnet_base_oc_forward.7}
  #allocation0 [shape = 'u32[]', space=smem, size = 0x4, offset = 0x4, fixed_abs, tag = 'smem constant byte address 0x4 - core index']
  #allocation1 [shape = 'u32[144,128]{1,0:T(1,128)}', space=vmem, size = 0x12000, scoped, tag = 'internal scratch']
  %s0 = inlined_call_operand.vmem [shape: bf16[256,64], index: 0, kind: input, shape index: {}]
  %s1 = inlined_call_operand.vmem [shape: bf16[2,64,128], index: 1, kind: input, shape index: {}]
  %s2 = inlined_call_operand.vmem [shape: f32[2,256,128], index: 2, kind: output, shape index: {}]
  %s3 = sld [smem:[#allocation0]]
  $region41: #{resnet_base_oc_forward.7} parent=0
    _
  %s5 = ssub.s32 1, %s3
  %s6 = scalar_select 0, %s5, %s3
  loop: start=0, step=1, limit=4
  $region2: #{resnet_base_oc_forward.7} parent=0 // loop_pre_header
    _
  $region3: #{resnet_base_oc_forward.7} parent=0 // loop_header
    %s8 = sphi 0, %s12
    %p9 = scmp.ge.s32.totalorder %s8, 4
    %s16 = sphi 0, %s16
    %s18 = sphi 0, %s16
    %s19 = sphi 0, %s18
    %s33 = sphi 0, %s19
    %s39 = sphi 0, %s41
    %s42 = sphi 0, %s39
    %s43 = sphi 0, %s42
    %s59 = sphi 0, %s43
    %s65 = sphi 0, %s67
    %s68 = sphi 0, %s65
    %s69 = sphi 0, %s68
    %s85 = sphi 0, %s69
  $region4: #{resnet_base_oc_forward.7} parent=0 // loop_header_branch
    %11 = sbr.rel (%p9) target = $region8
  $region5: #{resnet_base_oc_forward.7} parent=0 // loop_body
    %s13 = ssub.s32 %s8, 1
    %s14 = ssub.s32 %s8, 2
    %s15 = sadd.s32 %s8, 1
    %s17 = sadd.s32 %s16, 1
    %p20 = scmp.eq.s32.totalorder %s8, 1
    %p21 = scmp.ne.s32.totalorder %s16, %s18
    %p22 = scmp.eq.s32.totalorder %s8, 0
    %p23 = por %p21, %p22
    %p24 = scmp.ne.s32.totalorder %s16, %s18
    %p25 = scmp.eq.s32.totalorder %s13, 1
    %p26 = por %p24, %p25
    %p27 = scmp.ne.s32.totalorder %s18, %s19
    %p28 = scmp.eq.s32.totalorder %s13, 0
    %p29 = por %p27, %p28
    %p30 = scmp.ne.s32.totalorder %s18, %s19
    %p31 = scmp.eq.s32.totalorder %s14, 1
    %p32 = por %p30, %p31
    %p34 = scmp.ne.s32.totalorder %s19, %s33
    %p35 = scmp.eq.s32.totalorder %s14, 0
    %p36 = por %p34, %p35
    %s37 = ssub.s32 %s8, %s15
    %p38 = scmp.eq.s32.totalorder %s37, 0
    %s40 = sadd.s32 %s39, 1
    %s41 = scalar_select %p38, %s39, %s40
    %p44 = pneg %p38
    %p45 = scmp.eq.s32.totalorder %s8, 1
    %p46 = por %p44, %p45
    %p47 = scmp.ne.s32.totalorder %s39, %s42
    %p48 = scmp.eq.s32.totalorder %s8, 0
    %p49 = por %p47, %p48
    %p50 = scmp.ne.s32.totalorder %s39, %s42
    %p51 = scmp.eq.s32.totalorder %s13, 1
    %p52 = por %p50, %p51
    %p53 = scmp.ne.s32.totalorder %s42, %s43
    %p54 = scmp.eq.s32.totalorder %s13, 0
    %p55 = por %p53, %p54
    %p56 = scmp.ne.s32.totalorder %s42, %s43
    %p57 = scmp.eq.s32.totalorder %s14, 1
    %p58 = por %p56, %p57
    %p60 = scmp.ne.s32.totalorder %s43, %s59
    %p61 = scmp.eq.s32.totalorder %s14, 0
    %p62 = por %p60, %p61
    %s63 = ssub.s32 %s8, %s15
    %p64 = scmp.eq.s32.totalorder %s63, 0
    %s66 = sadd.s32 %s65, 1
    %s67 = scalar_select %p64, %s65, %s66
    %p70 = pneg %p64
    %p71 = scmp.eq.s32.totalorder %s8, 1
    %p72 = por %p70, %p71
    %p73 = scmp.ne.s32.totalorder %s65, %s68
    %p74 = scmp.eq.s32.totalorder %s8, 0
    %p75 = por %p73, %p74
    %p76 = scmp.ne.s32.totalorder %s65, %s68
    %p77 = scmp.eq.s32.totalorder %s13, 1
    %p78 = por %p76, %p77
    %p79 = scmp.ne.s32.totalorder %s68, %s69
    %p80 = scmp.eq.s32.totalorder %s13, 0
    %p81 = por %p79, %p80
    %p82 = scmp.ne.s32.totalorder %s68, %s69
    %p83 = scmp.eq.s32.totalorder %s14, 1
    %p84 = por %p82, %p83
    %p86 = scmp.ne.s32.totalorder %s69, %s85
    %p87 = scmp.eq.s32.totalorder %s14, 0
    %p88 = por %p86, %p87
    %p89 = scmp.le.s32.totalorder 1, %s8
    %p90 = scmp.lt.s32.totalorder %s8, 3
    %p91 = pnand %p89, %p90
    %p92 = pneg %p91
    // Predicated region
    $region9: #{resnet_base_oc_forward.7} parent=5 // pred_check
      _
    $region10: #{resnet_base_oc_forward.7} parent=5 // pred_check_branch
      %94 = sbr.rel (%p91) target = $region12
    $region11: #{resnet_base_oc_forward.7} parent=5 // pred_region
      %s95 = ssub.s32 %s8, 1
      // Predicated region
      $region13: #{resnet_base_oc_forward.7} parent=11 // pred_check
        %p96 = pneg %p29
      $region14: #{resnet_base_oc_forward.7} parent=11 // pred_check_branch
        %98 = sbr.rel (%p96) target = $region16
      $region15: #{resnet_base_oc_forward.7} parent=11 // pred_region
        _
      $region16: #{resnet_base_oc_forward.7} parent=11 // pred_fallthru
        _
    $region12: #{resnet_base_oc_forward.7} parent=5 // pred_fallthru
      _
    %p99 = scmp.lt.s32.totalorder %s8, 2
    // Predicated region
    $region17: #{resnet_base_oc_forward.7} parent=5 // pred_check
      %p100 = pneg %p99
    $region18: #{resnet_base_oc_forward.7} parent=5 // pred_check_branch
      %102 = sbr.rel (%p100) target = $region20
    $region19: #{resnet_base_oc_forward.7} parent=5 // pred_region
      // Predicated region
      $region21: #{resnet_base_oc_forward.7} parent=19 // pred_check
        %p103 = pneg %p49
      $region22: #{resnet_base_oc_forward.7} parent=19 // pred_check_branch
        %105 = sbr.rel (%p103) target = $region24
      $region23: #{resnet_base_oc_forward.7} parent=19 // pred_region
        %p106 = scmp.lt.s32.totalorder %s8, 1
        %s107 = scalar_select %p106, %s8, 1
        %s108 = smul.addr %s107, 8
        %s109 = smul.addr %s108, 4
        %s110 = scalar_lea.vmem %s1, %s109
      $region24: #{resnet_base_oc_forward.7} parent=19 // pred_fallthru
        _
    $region20: #{resnet_base_oc_forward.7} parent=5 // pred_fallthru
      _
    %p111 = scmp.le.s32.totalorder 1, %s8
    %p112 = scmp.lt.s32.totalorder %s8, 3
    %p113 = pnand %p111, %p112
    %p114 = pneg %p113
    // Predicated region
    $region25: #{resnet_base_oc_forward.7} parent=5 // pred_check
      _
    $region26: #{resnet_base_oc_forward.7} parent=5 // pred_check_branch
      %116 = sbr.rel (%p113) target = $region28
    $region27: #{resnet_base_oc_forward.7} parent=5 // pred_region
      %s117 = ssub.s32 %s8, 1
      %p118 = pneg %p29
      %p119 = pneg %p26
      %p120 = scmp.lt.s32.totalorder %s13, 1
      %s121 = scalar_select %p120, %s13, 1
      %s122 = smul.addr %s121, 8
      %s123 = smul.addr %s122, 4
      %s124 = scalar_lea.vmem %s1, %s123
      %p125 = pneg %p55
      %p126 = pneg %p52
      %p127 = pneg %p81
      %p128 = pneg %p78
      %p129 = scmp.lt.s32.totalorder %s13, 1
      %s130 = scalar_select %p129, %s13, 1
      %s131 = smul.addr %s130, 32
      %s132 = smul.addr %s131, 8
      %s133 = scalar_lea.vmem %s2, %s132
      %p134 = scmp.lt.s32.totalorder %s13, 1
      %s135 = scalar_select %p134, %s13, 1
      %s136 = smul.addr %s135, 8
      %s137 = smul.addr %s136, 4
      %s138 = scalar_lea.vmem %s1, %s137
      %p139 = scmp.lt.s32.totalorder %s13, 1
      %s140 = scalar_select %p139, %s13, 1
      %s141 = smul.addr %s140, 32
      %s142 = smul.addr %s141, 8
      %s143 = scalar_lea.vmem %s2, %s142
      %v145 = vld [vmem:[%s0] sm:$0xf]
      %v146 = vld [vmem:[%s0 + $0x4] sm:$0xf]
      %v147 = vld [vmem:[%s0 + $0x8] sm:$0xf]
      %v148 = vld [vmem:[%s0 + $0xc] sm:$0xf]
      %v149 = vld [vmem:[%s0 + $0x10] sm:$0xf]
      %v150 = vld [vmem:[%s0 + $0x14] sm:$0xf]
      %v151 = vld [vmem:[%s0 + $0x18] sm:$0xf]
      %v152 = vld [vmem:[%s0 + $0x1c] sm:$0xf]
      %v153 = vld [vmem:[%s0 + $0x20] sm:$0xf]
      %v154 = vld [vmem:[%s0 + $0x24] sm:$0xf]
      %v155 = vld [vmem:[%s0 + $0x28] sm:$0xf]
      %v156 = vld [vmem:[%s0 + $0x2c] sm:$0xf]
      %v157 = vld [vmem:[%s0 + $0x30] sm:$0xf]
      %v158 = vld [vmem:[%s0 + $0x34] sm:$0xf]
      %v159 = vld [vmem:[%s0 + $0x38] sm:$0xf]
      %v160 = vld [vmem:[%s0 + $0x3c] sm:$0xf]
      %v161 = vld [vmem:[%s0 + $0x40] sm:$0xf]
      %v162 = vld [vmem:[%s0 + $0x44] sm:$0xf]
      %v163 = vld [vmem:[%s0 + $0x48] sm:$0xf]
      %v164 = vld [vmem:[%s0 + $0x4c] sm:$0xf]
      %v165 = vld [vmem:[%s0 + $0x50] sm:$0xf]
      %v166 = vld [vmem:[%s0 + $0x54] sm:$0xf]
      %v167 = vld [vmem:[%s0 + $0x58] sm:$0xf]
      %v168 = vld [vmem:[%s0 + $0x5c] sm:$0xf]
      %v169 = vld [vmem:[%s0 + $0x60] sm:$0xf]
      %v170 = vld [vmem:[%s0 + $0x64] sm:$0xf]
      %v171 = vld [vmem:[%s0 + $0x68] sm:$0xf]
      %v172 = vld [vmem:[%s0 + $0x6c] sm:$0xf]
      %v173 = vld [vmem:[%s0 + $0x70] sm:$0xf]
      %v174 = vld [vmem:[%s0 + $0x74] sm:$0xf]
      %v175 = vld [vmem:[%s0 + $0x78] sm:$0xf]
      %v176 = vld [vmem:[%s0 + $0x7c] sm:$0xf]
      %v177 = vld [vmem:[%s138] sm:$0xf]
      %v178 = vld [vmem:[%s138 + $0x4] sm:$0xf]
      %v179 = vld [vmem:[%s138 + $0x8] sm:$0xf]
      %v180 = vld [vmem:[%s138 + $0xc] sm:$0xf]
      %v181 = vld [vmem:[%s138 + $0x10] sm:$0xf]
      %v182 = vld [vmem:[%s138 + $0x14] sm:$0xf]
      %v183 = vld [vmem:[%s138 + $0x18] sm:$0xf]
      %v184 = vld [vmem:[%s138 + $0x1c] sm:$0xf]
      %v217 = vunpack.c.l.b16 %v145
      %v218 = vunpack.c.l.b16 %v146
      %v219 = vunpack.c.l.b16 %v147
      %v220 = vunpack.c.l.b16 %v148
      %v221 = vunpack.c.l.b16 %v149
      %v222 = vunpack.c.l.b16 %v150
      %v223 = vunpack.c.l.b16 %v151
      %v224 = vunpack.c.l.b16 %v152
      %v225 = vunpack.c.l.b16 %v153
      %v226 = vunpack.c.l.b16 %v154
      %v227 = vunpack.c.l.b16 %v155
      %v228 = vunpack.c.l.b16 %v156
      %v229 = vunpack.c.l.b16 %v157
      %v230 = vunpack.c.l.b16 %v158
      %v231 = vunpack.c.l.b16 %v159
      %v232 = vunpack.c.l.b16 %v160
      %v233 = vunpack.c.l.b16 %v161
      %v234 = vunpack.c.l.b16 %v162
      %v235 = vunpack.c.l.b16 %v163
      %v236 = vunpack.c.l.b16 %v164
      %v237 = vunpack.c.l.b16 %v165
      %v238 = vunpack.c.l.b16 %v166
      %v239 = vunpack.c.l.b16 %v167
      %v240 = vunpack.c.l.b16 %v168
      %v241 = vunpack.c.l.b16 %v169
      %v242 = vunpack.c.l.b16 %v170
      %v243 = vunpack.c.l.b16 %v171
      %v244 = vunpack.c.l.b16 %v172
      %v245 = vunpack.c.l.b16 %v173
      %v246 = vunpack.c.l.b16 %v174
      %v247 = vunpack.c.l.b16 %v175
      %v248 = vunpack.c.l.b16 %v176
      %v249 = vpack.c.b16 %v218, %v217
      %v250 = vpack.c.b16 %v220, %v219
      %v251 = vpack.c.b16 %v222, %v221
      %v252 = vpack.c.b16 %v224, %v223
      %v253 = vpack.c.b16 %v226, %v225
      %v254 = vpack.c.b16 %v228, %v227
      %v255 = vpack.c.b16 %v230, %v229
      %v256 = vpack.c.b16 %v232, %v231
      %v257 = vpack.c.b16 %v234, %v233
      %v258 = vpack.c.b16 %v236, %v235
      %v259 = vpack.c.b16 %v238, %v237
      %v260 = vpack.c.b16 %v240, %v239
      %v261 = vpack.c.b16 %v242, %v241
      %v262 = vpack.c.b16 %v244, %v243
      %v263 = vpack.c.b16 %v246, %v245
      %v264 = vpack.c.b16 %v248, %v247
      %v273 = vunpack.c.l.b16 %v177
      %v274 = vunpack.c.l.b16 %v178
      %v275 = vunpack.c.l.b16 %v179
      %v276 = vunpack.c.l.b16 %v180
      %v277 = vunpack.c.l.b16 %v181
      %v278 = vunpack.c.l.b16 %v182
      %v279 = vunpack.c.l.b16 %v183
      %v280 = vunpack.c.l.b16 %v184
      %v281 = vpack.c.b16 %v274, %v273
      %v282 = vpack.c.b16 %v276, %v275
      %v283 = vpack.c.b16 %v278, %v277
      %v284 = vpack.c.b16 %v280, %v279
      %vm289 = vcmask 523264
      %v291 = vsel %vm289, %v249, 0
      %v294 = vsel %vm289, %v250, 0
      %v297 = vsel %vm289, %v251, 0
      %v300 = vsel %vm289, %v252, 0
      %v303 = vsel %vm289, %v253, 0
      %v306 = vsel %vm289, %v254, 0
      %v309 = vsel %vm289, %v255, 0
      %v312 = vsel %vm289, %v256, 0
      %v315 = vsel %vm289, %v257, 0
      %v318 = vsel %vm289, %v258, 0
      %v321 = vsel %vm289, %v259, 0
      %v324 = vsel %vm289, %v260, 0
      %v327 = vsel %vm289, %v261, 0
      %v330 = vsel %vm289, %v262, 0
      %v333 = vsel %vm289, %v263, 0
      %v336 = vsel %vm289, %v264, 0
      %338 = vmatprep.subr.bf16.mxu0 0
      %339 = vmatpush1.bf16.msra.mxu0 %v281
      %340 = vmatprep.subr.bf16.mxu0 0
      %341 = vmatpush1.bf16.msra.mxu0 %v282
      %342 = vmatprep.subr.bf16.mxu0 0
      %343 = vmatpush1.bf16.msra.mxu0 %v283
      %344 = vmatprep.subr.bf16.mxu0 0
      %345 = vmatpush1.bf16.msra.mxu0 %v284
      %346 = vmatprep.subr.bf16.mxu0 0
      %347 = vmatpush1.bf16.msra.mxu0 0
      %348 = vmatprep.subr.bf16.mxu0 0
      %349 = vmatpush1.bf16.msra.mxu0 0
      %350 = vmatprep.subr.bf16.mxu0 0
      %351 = vmatpush1.bf16.msra.mxu0 0
      %352 = vmatprep.subr.bf16.mxu0 0
      %353 = vmatpush1.bf16.msra.mxu0 0
      %354 = vmatprep.subr.bf16.mxu0 0
      %355 = vmatpush1.bf16.msra.mxu0 0
      %356 = vmatprep.subr.bf16.mxu0 0
      %357 = vmatpush1.bf16.msra.mxu0 0
      %358 = vmatprep.subr.bf16.mxu0 0
      %359 = vmatpush1.bf16.msra.mxu0 0
      %360 = vmatprep.subr.bf16.mxu0 0
      %361 = vmatpush1.bf16.msra.mxu0 0
      %362 = vmatprep.subr.bf16.mxu0 0
      %363 = vmatpush1.bf16.msra.mxu0 0
      %364 = vmatprep.subr.bf16.mxu0 0
      %365 = vmatpush1.bf16.msra.mxu0 0
      %366 = vmatprep.subr.bf16.mxu0 0
      %367 = vmatpush1.bf16.msra.mxu0 0
      %368 = vmatprep.subr.bf16.mxu0 0
      %369 = vmatpush1.bf16.msra.mxu0 0
      %370 = vmatprep.mubr.bf16.mxu0 0
      %371 = vmatmul.mubr.bf16.gmra.mrb[0].mxu0 %v291
      %v372 = vpop.f32.mrb[0].mxu0
      %v373 = vadd.f32 0.0, %v372
      %v374 = vpop.f32.mrb[0].mxu0
      %v375 = vpop.f32.mrb[0].mxu0
      %v376 = vadd.f32 0.0, %v375
      %v377 = vpop.f32.mrb[0].mxu0
      %378 = vmatprep.mubr.bf16.mxu0 0
      %379 = vmatmul.mubr.bf16.gmra.mrb[0].mxu0 %v294
      %v380 = vpop.f32.mrb[0].mxu0
      %v381 = vadd.f32 0.0, %v380
      %v382 = vpop.f32.mrb[0].mxu0
      %v383 = vpop.f32.mrb[0].mxu0
      %v384 = vadd.f32 0.0, %v383
      %v385 = vpop.f32.mrb[0].mxu0
      %386 = vmatprep.mubr.bf16.mxu0 0
      %387 = vmatmul.mubr.bf16.gmra.mrb[0].mxu0 %v297
      %v388 = vpop.f32.mrb[0].mxu0
      %v389 = vadd.f32 0.0, %v388
      %v390 = vpop.f32.mrb[0].mxu0
      %v391 = vpop.f32.mrb[0].mxu0
      %v392 = vadd.f32 0.0, %v391
      %v393 = vpop.f32.mrb[0].mxu0
      %394 = vmatprep.mubr.bf16.mxu0 0
      %395 = vmatmul.mubr.bf16.gmra.mrb[0].mxu0 %v300
      %v396 = vpop.f32.mrb[0].mxu0
      %v397 = vadd.f32 0.0, %v396
      %v398 = vpop.f32.mrb[0].mxu0
      %v399 = vpop.f32.mrb[0].mxu0
      %v400 = vadd.f32 0.0, %v399
      %v401 = vpop.f32.mrb[0].mxu0
      %402 = vmatprep.mubr.bf16.mxu0 0
      %403 = vmatmul.mubr.bf16.gmra.mrb[0].mxu0 %v303
      %v404 = vpop.f32.mrb[0].mxu0
      %v405 = vadd.f32 0.0, %v404
      %v406 = vpop.f32.mrb[0].mxu0
      %v407 = vpop.f32.mrb[0].mxu0
      %v408 = vadd.f32 0.0, %v407
      %v409 = vpop.f32.mrb[0].mxu0
      %410 = vmatprep.mubr.bf16.mxu0 0
      %411 = vmatmul.mubr.bf16.gmra.mrb[0].mxu0 %v306
      %v412 = vpop.f32.mrb[0].mxu0
      %v413 = vadd.f32 0.0, %v412
      %v414 = vpop.f32.mrb[0].mxu0
      %v415 = vpop.f32.mrb[0].mxu0
      %v416 = vadd.f32 0.0, %v415
      %v417 = vpop.f32.mrb[0].mxu0
      %418 = vmatprep.mubr.bf16.mxu0 0
      %419 = vmatmul.mubr.bf16.gmra.mrb[0].mxu0 %v309
      %v420 = vpop.f32.mrb[0].mxu0
      %v421 = vadd.f32 0.0, %v420
      %v422 = vpop.f32.mrb[0].mxu0
      %v423 = vpop.f32.mrb[0].mxu0
      %v424 = vadd.f32 0.0, %v423
      %v425 = vpop.f32.mrb[0].mxu0
      %426 = vmatprep.mubr.bf16.mxu0 0
      %427 = vmatmul.mubr.bf16.gmra.mrb[0].mxu0 %v312
      %v428 = vpop.f32.mrb[0].mxu0
      %v429 = vadd.f32 0.0, %v428
      %v430 = vpop.f32.mrb[0].mxu0
      %v431 = vpop.f32.mrb[0].mxu0
      %v432 = vadd.f32 0.0, %v431
      %v433 = vpop.f32.mrb[0].mxu0
      %434 = vmatprep.mubr.bf16.mxu0 0
      %435 = vmatmul.mubr.bf16.gmra.mrb[0].mxu0 %v315
      %v436 = vpop.f32.mrb[0].mxu0
      %v437 = vadd.f32 0.0, %v436
      %v438 = vpop.f32.mrb[0].mxu0
      %v439 = vpop.f32.mrb[0].mxu0
      %v440 = vadd.f32 0.0, %v439
      %v441 = vpop.f32.mrb[0].mxu0
      %442 = vmatprep.mubr.bf16.mxu0 0
      %443 = vmatmul.mubr.bf16.gmra.mrb[0].mxu0 %v318
      %v444 = vpop.f32.mrb[0].mxu0
      %v445 = vadd.f32 0.0, %v444
      %v446 = vpop.f32.mrb[0].mxu0
      %v447 = vpop.f32.mrb[0].mxu0
      %v448 = vadd.f32 0.0, %v447
      %v449 = vpop.f32.mrb[0].mxu0
      %450 = vmatprep.mubr.bf16.mxu0 0
      %451 = vmatmul.mubr.bf16.gmra.mrb[0].mxu0 %v321
      %v452 = vpop.f32.mrb[0].mxu0
      %v453 = vadd.f32 0.0, %v452
      %v454 = vpop.f32.mrb[0].mxu0
      %v455 = vpop.f32.mrb[0].mxu0
      %v456 = vadd.f32 0.0, %v455
      %v457 = vpop.f32.mrb[0].mxu0
      %458 = vmatprep.mubr.bf16.mxu0 0
      %459 = vmatmul.mubr.bf16.gmra.mrb[0].mxu0 %v324
      %v460 = vpop.f32.mrb[0].mxu0
      %v461 = vadd.f32 0.0, %v460
      %v462 = vpop.f32.mrb[0].mxu0
      %v463 = vpop.f32.mrb[0].mxu0
      %v464 = vadd.f32 0.0, %v463
      %v465 = vpop.f32.mrb[0].mxu0
      %466 = vmatprep.mubr.bf16.mxu0 0
      %467 = vmatmul.mubr.bf16.gmra.mrb[0].mxu0 %v327
      %v468 = vpop.f32.mrb[0].mxu0
      %v469 = vadd.f32 0.0, %v468
      %v470 = vpop.f32.mrb[0].mxu0
      %v471 = vpop.f32.mrb[0].mxu0
      %v472 = vadd.f32 0.0, %v471
      %v473 = vpop.f32.mrb[0].mxu0
      %474 = vmatprep.mubr.bf16.mxu0 0
      %475 = vmatmul.mubr.bf16.gmra.mrb[0].mxu0 %v330
      %v476 = vpop.f32.mrb[0].mxu0
      %v477 = vadd.f32 0.0, %v476
      %v478 = vpop.f32.mrb[0].mxu0
      %v479 = vpop.f32.mrb[0].mxu0
      %v480 = vadd.f32 0.0, %v479
      %v481 = vpop.f32.mrb[0].mxu0
      %482 = vmatprep.mubr.bf16.mxu0 0
      %483 = vmatmul.mubr.bf16.gmra.mrb[0].mxu0 %v333
      %v484 = vpop.f32.mrb[0].mxu0
      %v485 = vadd.f32 0.0, %v484
      %v486 = vpop.f32.mrb[0].mxu0
      %v487 = vpop.f32.mrb[0].mxu0
      %v488 = vadd.f32 0.0, %v487
      %v489 = vpop.f32.mrb[0].mxu0
      %490 = vmatprep.mubr.bf16.mxu0 0
      %491 = vmatmul.mubr.bf16.gmra.mrb[0].mxu0 %v336
      %v492 = vpop.f32.mrb[0].mxu0
      %v493 = vadd.f32 0.0, %v492
      %v494 = vpop.f32.mrb[0].mxu0
      %v495 = vpop.f32.mrb[0].mxu0
      %v496 = vadd.f32 0.0, %v495
      %v497 = vpop.f32.mrb[0].mxu0
      %498 = vdwg.mxu0
      %499 = vst [vmem:[%s143] sm:$0xff] %v373
      %500 = vst [vmem:[%s143 + $0x8] sm:$0xff] %v376
      %501 = vst [vmem:[%s143 + $0x10] sm:$0xff] %v381
      %502 = vst [vmem:[%s143 + $0x18] sm:$0xff] %v384
      %503 = vst [vmem:[%s143 + $0x20] sm:$0xff] %v389
      %504 = vst [vmem:[%s143 + $0x28] sm:$0xff] %v392
      %505 = vst [vmem:[%s143 + $0x30] sm:$0xff] %v397
      %506 = vst [vmem:[%s143 + $0x38] sm:$0xff] %v400
      %507 = vst [vmem:[%s143 + $0x40] sm:$0xff] %v405
      %508 = vst [vmem:[%s143 + $0x48] sm:$0xff] %v408
      %509 = vst [vmem:[%s143 + $0x50] sm:$0xff] %v413
      %510 = vst [vmem:[%s143 + $0x58] sm:$0xff] %v416
      %511 = vst [vmem:[%s143 + $0x60] sm:$0xff] %v421
      %512 = vst [vmem:[%s143 + $0x68] sm:$0xff] %v424
      %513 = vst [vmem:[%s143 + $0x70] sm:$0xff] %v429
      %514 = vst [vmem:[%s143 + $0x78] sm:$0xff] %v432
      %515 = vst [vmem:[%s143 + $0x80] sm:$0xff] %v437
      %516 = vst [vmem:[%s143 + $0x88] sm:$0xff] %v440
      %517 = vst [vmem:[%s143 + $0x90] sm:$0xff] %v445
      %518 = vst [vmem:[%s143 + $0x98] sm:$0xff] %v448
      %519 = vst [vmem:[%s143 + $0xa0] sm:$0xff] %v453
      %520 = vst [vmem:[%s143 + $0xa8] sm:$0xff] %v456
      %521 = vst [vmem:[%s143 + $0xb0] sm:$0xff] %v461
      %522 = vst [vmem:[%s143 + $0xb8] sm:$0xff] %v464
      %523 = vst [vmem:[%s143 + $0xc0] sm:$0xff] %v469
      %524 = vst [vmem:[%s143 + $0xc8] sm:$0xff] %v472
      %525 = vst [vmem:[%s143 + $0xd0] sm:$0xff] %v477
      %526 = vst [vmem:[%s143 + $0xd8] sm:$0xff] %v480
      %527 = vst [vmem:[%s143 + $0xe0] sm:$0xff] %v485
      %528 = vst [vmem:[%s143 + $0xe8] sm:$0xff] %v488
      %529 = vst [vmem:[%s143 + $0xf0] sm:$0xff] %v493
      %530 = vst [vmem:[%s143 + $0xf8] sm:$0xff] %v496
      %p531 = scmp.lt.s32.totalorder %s13, 1
      %s532 = scalar_select %p531, %s13, 1
      %s533 = smul.addr %s532, 32
      %s534 = smul.addr %s533, 8
      %s535 = scalar_lea.vmem %s2, %s534
      // Predicated region
      $region29: #{resnet_base_oc_forward.7} parent=27 // pred_check
        %p536 = pneg %p78
      $region30: #{resnet_base_oc_forward.7} parent=27 // pred_check_branch
        %538 = sbr.rel (%p536) target = $region32
      $region31: #{resnet_base_oc_forward.7} parent=27 // pred_region
        _
      $region32: #{resnet_base_oc_forward.7} parent=27 // pred_fallthru
        _
    $region28: #{resnet_base_oc_forward.7} parent=5 // pred_fallthru
      _
    %p539 = scmp.le.s32.totalorder 2, %s8
    // Predicated region
    $region33: #{resnet_base_oc_forward.7} parent=5 // pred_check
      %p540 = pneg %p539
    $region34: #{resnet_base_oc_forward.7} parent=5 // pred_check_branch
      %542 = sbr.rel (%p540) target = $region36
    $region35: #{resnet_base_oc_forward.7} parent=5 // pred_region
      %s543 = ssub.s32 %s8, 2
      // Predicated region
      $region37: #{resnet_base_oc_forward.7} parent=35 // pred_check
        %p544 = pneg %p84
      $region38: #{resnet_base_oc_forward.7} parent=35 // pred_check_branch
        %546 = sbr.rel (%p544) target = $region40
      $region39: #{resnet_base_oc_forward.7} parent=35 // pred_region
        %p547 = scmp.lt.s32.totalorder %s14, 1
        %s548 = scalar_select %p547, %s14, 1
        %s549 = smul.addr %s548, 32
        %s550 = smul.addr %s549, 8
        %s551 = scalar_lea.vmem %s2, %s550
      $region40: #{resnet_base_oc_forward.7} parent=35 // pred_fallthru
        _
    $region36: #{resnet_base_oc_forward.7} parent=5 // pred_fallthru
      _
  $region6: #{resnet_base_oc_forward.7} parent=0 // loop_footer
    %s12 = sadd.s32 1, %s8
  $region7: #{resnet_base_oc_forward.7} parent=0 // loop_footer_branch
    %7 = sbr.rel target = $region3
  $region8: #{resnet_base_oc_forward.7} parent=0 // loop_exit
    _

// kernel: resnet_base_oc_forward.6
$region0: #{resnet_base_oc_forward.6}
  #allocation0 [shape = 'u32[]', space=smem, size = 0x4, offset = 0x4, fixed_abs, tag = 'smem constant byte address 0x4 - core index']
  #allocation1 [shape = 'u32[144,128]{1,0:T(1,128)}', space=vmem, size = 0x12000, scoped, tag = 'internal scratch']
  #allocation2 [shape = 'f32[64,1]{1,0:T(8,128)}', space=vmem, size = 0x8000, scoped, tag = 'scratch operand']
  #allocation3 [shape = 'f32[64,1]{1,0:T(8,128)}', space=vmem, size = 0x8000, scoped, tag = 'scratch operand']
  #allocation4 [shape = 'f32[64,16]{1,0:T(8,128)}', space=vmem, size = 0x8000, scoped, tag = 'scratch operand']
  %s0 = inlined_call_operand.vmem [shape: bf16[2,64,16], index: 0, kind: input, shape index: {}, may-alias: {0,2}]
  %s1 = inlined_call_operand.vmem [shape: bf16[2,64,32], index: 1, kind: input, shape index: {}]
  %s2 = inlined_call_operand.vmem [shape: bf16[2,64,16], index: 2, kind: input, shape index: {}, may-alias: {0,2}]
  %s3 = inlined_call_operand.vmem [shape: bf16[2,64,16], index: 3, kind: input, shape index: {}]
  %s4 = inlined_call_operand.vmem [shape: bf16[16,32], index: 4, kind: input, shape index: {}]
  %s5 = inlined_call_operand.vmem [shape: bf16[32,32], index: 5, kind: input, shape index: {}]
  %s6 = inlined_call_operand.vmem [shape: f32[1,32], index: 6, kind: input, shape index: {}]
  %s7 = inlined_call_operand.vmem [shape: bf16[32,128], index: 7, kind: input, shape index: {}]
  %s8 = inlined_call_operand.vmem [shape: f32[1,128], index: 8, kind: input, shape index: {}]
  %s9 = inlined_call_operand.vmem [shape: bf16[2,64,128], index: 9, kind: output, shape index: {}]
  %s10 = sld [smem:[#allocation0]]
  $region77: #{resnet_base_oc_forward.6} parent=0
    _
  %s12 = ssub.s32 1, %s10
  %s13 = scalar_select 0, %s12, %s10
  loop: start=0, step=1, limit=4
  $region2: #{resnet_base_oc_forward.6} parent=0 // loop_pre_header
    _
  $region3: #{resnet_base_oc_forward.6} parent=0 // loop_header
    %s15 = sphi 0, %s19
    %p16 = scmp.ge.s32.totalorder %s15, 4
    %s22 = sphi 0, %s41
    %s23 = sphi 0, %s37
    %s24 = sphi 0, %s33
    %s25 = sphi 0, %s22
    %s26 = sphi 0, %s23
    %s27 = sphi 0, %s24
    %s28 = sphi 0, %s25
    %s29 = sphi 0, %s26
    %s30 = sphi 0, %s27
    %s46 = sphi 0, %s48
    %s49 = sphi 0, %s46
    %s50 = sphi 0, %s49
    %s66 = sphi 0, %s50
    %s74 = sphi 0, %s76
    %s77 = sphi 0, %s74
    %s78 = sphi 0, %s77
    %s94 = sphi 0, %s78
    %s102 = sphi 0, %s104
    %s105 = sphi 0, %s102
    %s106 = sphi 0, %s105
    %s122 = sphi 0, %s106
    %s130 = sphi 0, %s132
    %s133 = sphi 0, %s130
    %s134 = sphi 0, %s133
    %s150 = sphi 0, %s134
    %s154 = sphi 0, %s154
    %s156 = sphi 0, %s154
    %s157 = sphi 0, %s156
    %s171 = sphi 0, %s157
    %s175 = sphi 0, %s175
    %s177 = sphi 0, %s175
    %s178 = sphi 0, %s177
    %s192 = sphi 0, %s178
    %s196 = sphi 0, %s196
    %s198 = sphi 0, %s196
    %s199 = sphi 0, %s198
    %s213 = sphi 0, %s199
    %s217 = sphi 0, %s217
    %s219 = sphi 0, %s217
    %s220 = sphi 0, %s219
    %s234 = sphi 0, %s220
    %s238 = sphi 0, %s238
    %s240 = sphi 0, %s238
    %s241 = sphi 0, %s240
    %s255 = sphi 0, %s241
    %s263 = sphi 0, %s265
    %s266 = sphi 0, %s263
    %s267 = sphi 0, %s266
    %s283 = sphi 0, %s267
  $region4: #{resnet_base_oc_forward.6} parent=0 // loop_header_branch
    %18 = sbr.rel (%p16) target = $region8
  $region5: #{resnet_base_oc_forward.6} parent=0 // loop_body
    %s20 = ssub.s32 %s15, 1
    %s21 = ssub.s32 %s15, 2
    %s31 = sadd.s32 1, %s24
    %p32 = scmp.ge.s32.totalorder %s31, 1
    %s33 = scalar_select %p32, 0, %s31
    %s34 = sadd.s32 1, %s23
    %s35 = scalar_select %p32, %s34, %s23
    %p36 = scmp.ge.s32.totalorder %s35, 1
    %s37 = scalar_select %p36, 0, %s35
    %s38 = sadd.s32 1, %s22
    %s39 = scalar_select %p36, %s38, %s22
    %p40 = scmp.ge.s32.totalorder %s39, 2
    %s41 = scalar_select %p40, 0, %s39
    %s42 = ssub.s32 %s22, %s41
    %s43 = ssub.s32 %s23, %s37
    %s44 = sor.u32 %s42, %s43
    %p45 = scmp.eq.s32.totalorder %s44, 0
    %s47 = sadd.s32 %s46, 1
    %s48 = scalar_select %p45, %s46, %s47
    %p51 = pneg %p45
    %p52 = scmp.eq.s32.totalorder %s15, 1
    %p53 = por %p51, %p52
    %p54 = scmp.ne.s32.totalorder %s46, %s49
    %p55 = scmp.eq.s32.totalorder %s15, 0
    %p56 = por %p54, %p55
    %p57 = scmp.ne.s32.totalorder %s46, %s49
    %p58 = scmp.eq.s32.totalorder %s20, 1
    %p59 = por %p57, %p58
    %p60 = scmp.ne.s32.totalorder %s49, %s50
    %p61 = scmp.eq.s32.totalorder %s20, 0
    %p62 = por %p60, %p61
    %p63 = scmp.ne.s32.totalorder %s49, %s50
    %p64 = scmp.eq.s32.totalorder %s21, 1
    %p65 = por %p63, %p64
    %p67 = scmp.ne.s32.totalorder %s50, %s66
    %p68 = scmp.eq.s32.totalorder %s21, 0
    %p69 = por %p67, %p68
    %s70 = ssub.s32 %s22, %s41
    %s71 = ssub.s32 %s23, %s37
    %s72 = sor.u32 %s70, %s71
    %p73 = scmp.eq.s32.totalorder %s72, 0
    %s75 = sadd.s32 %s74, 1
    %s76 = scalar_select %p73, %s74, %s75
    %p79 = pneg %p73
    %p80 = scmp.eq.s32.totalorder %s15, 1
    %p81 = por %p79, %p80
    %p82 = scmp.ne.s32.totalorder %s74, %s77
    %p83 = scmp.eq.s32.totalorder %s15, 0
    %p84 = por %p82, %p83
    %p85 = scmp.ne.s32.totalorder %s74, %s77
    %p86 = scmp.eq.s32.totalorder %s20, 1
    %p87 = por %p85, %p86
    %p88 = scmp.ne.s32.totalorder %s77, %s78
    %p89 = scmp.eq.s32.totalorder %s20, 0
    %p90 = por %p88, %p89
    %p91 = scmp.ne.s32.totalorder %s77, %s78
    %p92 = scmp.eq.s32.totalorder %s21, 1
    %p93 = por %p91, %p92
    %p95 = scmp.ne.s32.totalorder %s78, %s94
    %p96 = scmp.eq.s32.totalorder %s21, 0
    %p97 = por %p95, %p96
    %s98 = ssub.s32 %s22, %s41
    %s99 = ssub.s32 %s24, %s33
    %s100 = sor.u32 %s98, %s99
    %p101 = scmp.eq.s32.totalorder %s100, 0
    %s103 = sadd.s32 %s102, 1
    %s104 = scalar_select %p101, %s102, %s103
    %p107 = pneg %p101
    %p108 = scmp.eq.s32.totalorder %s15, 1
    %p109 = por %p107, %p108
    %p110 = scmp.ne.s32.totalorder %s102, %s105
    %p111 = scmp.eq.s32.totalorder %s15, 0
    %p112 = por %p110, %p111
    %p113 = scmp.ne.s32.totalorder %s102, %s105
    %p114 = scmp.eq.s32.totalorder %s20, 1
    %p115 = por %p113, %p114
    %p116 = scmp.ne.s32.totalorder %s105, %s106
    %p117 = scmp.eq.s32.totalorder %s20, 0
    %p118 = por %p116, %p117
    %p119 = scmp.ne.s32.totalorder %s105, %s106
    %p120 = scmp.eq.s32.totalorder %s21, 1
    %p121 = por %p119, %p120
    %p123 = scmp.ne.s32.totalorder %s106, %s122
    %p124 = scmp.eq.s32.totalorder %s21, 0
    %p125 = por %p123, %p124
    %s126 = ssub.s32 %s22, %s41
    %s127 = ssub.s32 %s24, %s33
    %s128 = sor.u32 %s126, %s127
    %p129 = scmp.eq.s32.totalorder %s128, 0
    %s131 = sadd.s32 %s130, 1
    %s132 = scalar_select %p129, %s130, %s131
    %p135 = pneg %p129
    %p136 = scmp.eq.s32.totalorder %s15, 1
    %p137 = por %p135, %p136
    %p138 = scmp.ne.s32.totalorder %s130, %s133
    %p139 = scmp.eq.s32.totalorder %s15, 0
    %p140 = por %p138, %p139
    %p141 = scmp.ne.s32.totalorder %s130, %s133
    %p142 = scmp.eq.s32.totalorder %s20, 1
    %p143 = por %p141, %p142
    %p144 = scmp.ne.s32.totalorder %s133, %s134
    %p145 = scmp.eq.s32.totalorder %s20, 0
    %p146 = por %p144, %p145
    %p147 = scmp.ne.s32.totalorder %s133, %s134
    %p148 = scmp.eq.s32.totalorder %s21, 1
    %p149 = por %p147, %p148
    %p151 = scmp.ne.s32.totalorder %s134, %s150
    %p152 = scmp.eq.s32.totalorder %s21, 0
    %p153 = por %p151, %p152
    %s155 = sadd.s32 %s154, 1
    %p158 = scmp.eq.s32.totalorder %s15, 1
    %p159 = scmp.ne.s32.totalorder %s154, %s156
    %p160 = scmp.eq.s32.totalorder %s15, 0
    %p161 = por %p159, %p160
    %p162 = scmp.ne.s32.totalorder %s154, %s156
    %p163 = scmp.eq.s32.totalorder %s20, 1
    %p164 = por %p162, %p163
    %p165 = scmp.ne.s32.totalorder %s156, %s157
    %p166 = scmp.eq.s32.totalorder %s20, 0
    %p167 = por %p165, %p166
    %p168 = scmp.ne.s32.totalorder %s156, %s157
    %p169 = scmp.eq.s32.totalorder %s21, 1
    %p170 = por %p168, %p169
    %p172 = scmp.ne.s32.totalorder %s157, %s171
    %p173 = scmp.eq.s32.totalorder %s21, 0
    %p174 = por %p172, %p173
    %s176 = sadd.s32 %s175, 1
    %p179 = scmp.eq.s32.totalorder %s15, 1
    %p180 = scmp.ne.s32.totalorder %s175, %s177
    %p181 = scmp.eq.s32.totalorder %s15, 0
    %p182 = por %p180, %p181
    %p183 = scmp.ne.s32.totalorder %s175, %s177
    %p184 = scmp.eq.s32.totalorder %s20, 1
    %p185 = por %p183, %p184
    %p186 = scmp.ne.s32.totalorder %s177, %s178
    %p187 = scmp.eq.s32.totalorder %s20, 0
    %p188 = por %p186, %p187
    %p189 = scmp.ne.s32.totalorder %s177, %s178
    %p190 = scmp.eq.s32.totalorder %s21, 1
    %p191 = por %p189, %p190
    %p193 = scmp.ne.s32.totalorder %s178, %s192
    %p194 = scmp.eq.s32.totalorder %s21, 0
    %p195 = por %p193, %p194
    %s197 = sadd.s32 %s196, 1
    %p200 = scmp.eq.s32.totalorder %s15, 1
    %p201 = scmp.ne.s32.totalorder %s196, %s198
    %p202 = scmp.eq.s32.totalorder %s15, 0
    %p203 = por %p201, %p202
    %p204 = scmp.ne.s32.totalorder %s196, %s198
    %p205 = scmp.eq.s32.totalorder %s20, 1
    %p206 = por %p204, %p205
    %p207 = scmp.ne.s32.totalorder %s198, %s199
    %p208 = scmp.eq.s32.totalorder %s20, 0
    %p209 = por %p207, %p208
    %p210 = scmp.ne.s32.totalorder %s198, %s199
    %p211 = scmp.eq.s32.totalorder %s21, 1
    %p212 = por %p210, %p211
    %p214 = scmp.ne.s32.totalorder %s199, %s213
    %p215 = scmp.eq.s32.totalorder %s21, 0
    %p216 = por %p214, %p215
    %s218 = sadd.s32 %s217, 1
    %p221 = scmp.eq.s32.totalorder %s15, 1
    %p222 = scmp.ne.s32.totalorder %s217, %s219
    %p223 = scmp.eq.s32.totalorder %s15, 0
    %p224 = por %p222, %p223
    %p225 = scmp.ne.s32.totalorder %s217, %s219
    %p226 = scmp.eq.s32.totalorder %s20, 1
    %p227 = por %p225, %p226
    %p228 = scmp.ne.s32.totalorder %s219, %s220
    %p229 = scmp.eq.s32.totalorder %s20, 0
    %p230 = por %p228, %p229
    %p231 = scmp.ne.s32.totalorder %s219, %s220
    %p232 = scmp.eq.s32.totalorder %s21, 1
    %p233 = por %p231, %p232
    %p235 = scmp.ne.s32.totalorder %s220, %s234
    %p236 = scmp.eq.s32.totalorder %s21, 0
    %p237 = por %p235, %p236
    %s239 = sadd.s32 %s238, 1
    %p242 = scmp.eq.s32.totalorder %s15, 1
    %p243 = scmp.ne.s32.totalorder %s238, %s240
    %p244 = scmp.eq.s32.totalorder %s15, 0
    %p245 = por %p243, %p244
    %p246 = scmp.ne.s32.totalorder %s238, %s240
    %p247 = scmp.eq.s32.totalorder %s20, 1
    %p248 = por %p246, %p247
    %p249 = scmp.ne.s32.totalorder %s240, %s241
    %p250 = scmp.eq.s32.totalorder %s20, 0
    %p251 = por %p249, %p250
    %p252 = scmp.ne.s32.totalorder %s240, %s241
    %p253 = scmp.eq.s32.totalorder %s21, 1
    %p254 = por %p252, %p253
    %p256 = scmp.ne.s32.totalorder %s241, %s255
    %p257 = scmp.eq.s32.totalorder %s21, 0
    %p258 = por %p256, %p257
    %s259 = ssub.s32 %s22, %s41
    %s260 = ssub.s32 %s23, %s37
    %s261 = sor.u32 %s259, %s260
    %p262 = scmp.eq.s32.totalorder %s261, 0
    %s264 = sadd.s32 %s263, 1
    %s265 = scalar_select %p262, %s263, %s264
    %p268 = pneg %p262
    %p269 = scmp.eq.s32.totalorder %s15, 1
    %p270 = por %p268, %p269
    %p271 = scmp.ne.s32.totalorder %s263, %s266
    %p272 = scmp.eq.s32.totalorder %s15, 0
    %p273 = por %p271, %p272
    %p274 = scmp.ne.s32.totalorder %s263, %s266
    %p275 = scmp.eq.s32.totalorder %s20, 1
    %p276 = por %p274, %p275
    %p277 = scmp.ne.s32.totalorder %s266, %s267
    %p278 = scmp.eq.s32.totalorder %s20, 0
    %p279 = por %p277, %p278
    %p280 = scmp.ne.s32.totalorder %s266, %s267
    %p281 = scmp.eq.s32.totalorder %s21, 1
    %p282 = por %p280, %p281
    %p284 = scmp.ne.s32.totalorder %s267, %s283
    %p285 = scmp.eq.s32.totalorder %s21, 0
    %p286 = por %p284, %p285
    %p287 = scmp.le.s32.totalorder 1, %s15
    %p288 = scmp.lt.s32.totalorder %s15, 3
    %p289 = pnand %p287, %p288
    %p290 = pneg %p289
    // Predicated region
    $region9: #{resnet_base_oc_forward.6} parent=5 // pred_check
      _
    $region10: #{resnet_base_oc_forward.6} parent=5 // pred_check_branch
      %292 = sbr.rel (%p289) target = $region12
    $region11: #{resnet_base_oc_forward.6} parent=5 // pred_region
      %s293 = ssub.s32 %s15, 1
      // Predicated region
      $region13: #{resnet_base_oc_forward.6} parent=11 // pred_check
        %p294 = pneg %p167
      $region14: #{resnet_base_oc_forward.6} parent=11 // pred_check_branch
        %296 = sbr.rel (%p294) target = $region16
      $region15: #{resnet_base_oc_forward.6} parent=11 // pred_region
        _
      $region16: #{resnet_base_oc_forward.6} parent=11 // pred_fallthru
        _
      // Predicated region
      $region17: #{resnet_base_oc_forward.6} parent=11 // pred_check
        %p297 = pneg %p188
      $region18: #{resnet_base_oc_forward.6} parent=11 // pred_check_branch
        %299 = sbr.rel (%p297) target = $region20
      $region19: #{resnet_base_oc_forward.6} parent=11 // pred_region
        _
      $region20: #{resnet_base_oc_forward.6} parent=11 // pred_fallthru
        _
      // Predicated region
      $region21: #{resnet_base_oc_forward.6} parent=11 // pred_check
        %p300 = pneg %p209
      $region22: #{resnet_base_oc_forward.6} parent=11 // pred_check_branch
        %302 = sbr.rel (%p300) target = $region24
      $region23: #{resnet_base_oc_forward.6} parent=11 // pred_region
        _
      $region24: #{resnet_base_oc_forward.6} parent=11 // pred_fallthru
        _
      // Predicated region
      $region25: #{resnet_base_oc_forward.6} parent=11 // pred_check
        %p303 = pneg %p230
      $region26: #{resnet_base_oc_forward.6} parent=11 // pred_check_branch
        %305 = sbr.rel (%p303) target = $region28
      $region27: #{resnet_base_oc_forward.6} parent=11 // pred_region
        _
      $region28: #{resnet_base_oc_forward.6} parent=11 // pred_fallthru
        _
      // Predicated region
      $region29: #{resnet_base_oc_forward.6} parent=11 // pred_check
        %p306 = pneg %p251
      $region30: #{resnet_base_oc_forward.6} parent=11 // pred_check_branch
        %308 = sbr.rel (%p306) target = $region32
      $region31: #{resnet_base_oc_forward.6} parent=11 // pred_region
        _
      $region32: #{resnet_base_oc_forward.6} parent=11 // pred_fallthru
        _
    $region12: #{resnet_base_oc_forward.6} parent=5 // pred_fallthru
      _
    %p309 = scmp.lt.s32.totalorder %s15, 2
    // Predicated region
    $region33: #{resnet_base_oc_forward.6} parent=5 // pred_check
      %p310 = pneg %p309
    $region34: #{resnet_base_oc_forward.6} parent=5 // pred_check_branch
      %312 = sbr.rel (%p310) target = $region36
    $region35: #{resnet_base_oc_forward.6} parent=5 // pred_region
      // Predicated region
      $region37: #{resnet_base_oc_forward.6} parent=35 // pred_check
        %p313 = pneg %p56
      $region38: #{resnet_base_oc_forward.6} parent=35 // pred_check_branch
        %315 = sbr.rel (%p313) target = $region40
      $region39: #{resnet_base_oc_forward.6} parent=35 // pred_region
        %s316 = smul.u32 8, %s23
        %p317 = scmp.lt.s32.totalorder %s22, 1
        %s318 = scalar_select %p317, %s22, 1
        %p319 = scmp.lt.s32.totalorder %s316, 7
        %s320 = scalar_select %p319, %s316, 7
        %s321 = smul.addr %s318, 8
        %s322 = sadd.s32 %s320, %s321
        %s323 = smul.addr %s322, 4
        %s324 = scalar_lea.vmem %s0, %s323
        %s325 = smul.u32 8, %s23
      $region40: #{resnet_base_oc_forward.6} parent=35 // pred_fallthru
        _
      // Predicated region
      $region41: #{resnet_base_oc_forward.6} parent=35 // pred_check
        %p326 = pneg %p84
      $region42: #{resnet_base_oc_forward.6} parent=35 // pred_check_branch
        %328 = sbr.rel (%p326) target = $region44
      $region43: #{resnet_base_oc_forward.6} parent=35 // pred_region
        %s329 = smul.u32 8, %s23
        %p330 = scmp.lt.s32.totalorder %s22, 1
        %s331 = scalar_select %p330, %s22, 1
        %p332 = scmp.lt.s32.totalorder %s329, 7
        %s333 = scalar_select %p332, %s329, 7
        %s334 = smul.addr %s331, 8
        %s335 = sadd.s32 %s333, %s334
        %s336 = smul.addr %s335, 4
        %s337 = scalar_lea.vmem %s1, %s336
        %s338 = smul.u32 8, %s23
      $region44: #{resnet_base_oc_forward.6} parent=35 // pred_fallthru
        _
      // Predicated region
      $region45: #{resnet_base_oc_forward.6} parent=35 // pred_check
        %p339 = pneg %p112
      $region46: #{resnet_base_oc_forward.6} parent=35 // pred_check_branch
        %341 = sbr.rel (%p339) target = $region48
      $region47: #{resnet_base_oc_forward.6} parent=35 // pred_region
        %s342 = smul.u32 8, %s24
        %p343 = scmp.lt.s32.totalorder %s22, 1
        %s344 = scalar_select %p343, %s22, 1
        %p345 = scmp.lt.s32.totalorder %s342, 7
        %s346 = scalar_select %p345, %s342, 7
        %s347 = smul.addr %s344, 8
        %s348 = sadd.s32 %s346, %s347
        %s349 = smul.addr %s348, 4
        %s350 = scalar_lea.vmem %s2, %s349
        %s351 = smul.u32 8, %s24
      $region48: #{resnet_base_oc_forward.6} parent=35 // pred_fallthru
        _
      // Predicated region
      $region49: #{resnet_base_oc_forward.6} parent=35 // pred_check
        %p352 = pneg %p140
      $region50: #{resnet_base_oc_forward.6} parent=35 // pred_check_branch
        %354 = sbr.rel (%p352) target = $region52
      $region51: #{resnet_base_oc_forward.6} parent=35 // pred_region
        %s355 = smul.u32 8, %s24
        %p356 = scmp.lt.s32.totalorder %s22, 1
        %s357 = scalar_select %p356, %s22, 1
        %p358 = scmp.lt.s32.totalorder %s355, 7
        %s359 = scalar_select %p358, %s355, 7
        %s360 = smul.addr %s357, 8
        %s361 = sadd.s32 %s359, %s360
        %s362 = smul.addr %s361, 4
        %s363 = scalar_lea.vmem %s3, %s362
        %s364 = smul.u32 8, %s24
      $region52: #{resnet_base_oc_forward.6} parent=35 // pred_fallthru
        _
    $region36: #{resnet_base_oc_forward.6} parent=5 // pred_fallthru
      _
    %p365 = scmp.le.s32.totalorder 1, %s15
    %p366 = scmp.lt.s32.totalorder %s15, 3
    %p367 = pnand %p365, %p366
    %p368 = pneg %p367
    // Predicated region
    $region53: #{resnet_base_oc_forward.6} parent=5 // pred_check
      _
    $region54: #{resnet_base_oc_forward.6} parent=5 // pred_check_branch
      %370 = sbr.rel (%p367) target = $region56
    $region55: #{resnet_base_oc_forward.6} parent=5 // pred_region
      %s371 = ssub.s32 %s15, 1
      %s372 = smul.u32 8, %s26
      %p373 = scmp.lt.s32.totalorder %s25, 1
      %s374 = scalar_select %p373, %s25, 1
      %p375 = scmp.lt.s32.totalorder %s372, 7
      %s376 = scalar_select %p375, %s372, 7
      %s377 = smul.addr %s374, 8
      %s378 = sadd.s32 %s376, %s377
      %s379 = smul.addr %s378, 4
      %s380 = scalar_lea.vmem %s0, %s379
      %p381 = pneg %p62
      %p382 = pneg %p59
      %s383 = smul.u32 8, %s26
      %p384 = scmp.lt.s32.totalorder %s25, 1
      %s385 = scalar_select %p384, %s25, 1
      %p386 = scmp.lt.s32.totalorder %s383, 7
      %s387 = scalar_select %p386, %s383, 7
      %s388 = smul.addr %s385, 8
      %s389 = sadd.s32 %s387, %s388
      %s390 = smul.addr %s389, 4
      %s391 = scalar_lea.vmem %s1, %s390
      %p392 = pneg %p90
      %p393 = pneg %p87
      %s394 = smul.u32 8, %s27
      %p395 = scmp.lt.s32.totalorder %s25, 1
      %s396 = scalar_select %p395, %s25, 1
      %p397 = scmp.lt.s32.totalorder %s394, 7
      %s398 = scalar_select %p397, %s394, 7
      %s399 = smul.addr %s396, 8
      %s400 = sadd.s32 %s398, %s399
      %s401 = smul.addr %s400, 4
      %s402 = scalar_lea.vmem %s2, %s401
      %p403 = pneg %p118
      %p404 = pneg %p115
      %s405 = smul.u32 8, %s27
      %p406 = scmp.lt.s32.totalorder %s25, 1
      %s407 = scalar_select %p406, %s25, 1
      %p408 = scmp.lt.s32.totalorder %s405, 7
      %s409 = scalar_select %p408, %s405, 7
      %s410 = smul.addr %s407, 8
      %s411 = sadd.s32 %s409, %s410
      %s412 = smul.addr %s411, 4
      %s413 = scalar_lea.vmem %s3, %s412
      %p414 = pneg %p146
      %p415 = pneg %p143
      %p416 = pneg %p167
      %p417 = pneg %p164
      %p418 = pneg %p188
      %p419 = pneg %p185
      %p420 = pneg %p209
      %p421 = pneg %p206
      %p422 = pneg %p230
      %p423 = pneg %p227
      %p424 = pneg %p251
      %p425 = pneg %p248
      %p426 = pneg %p279
      %p427 = pneg %p276
      %s428 = smul.u32 8, %s26
      %p429 = scmp.lt.s32.totalorder %s25, 1
      %s430 = scalar_select %p429, %s25, 1
      %p431 = scmp.lt.s32.totalorder %s428, 7
      %s432 = scalar_select %p431, %s428, 7
      %s433 = smul.addr %s430, 8
      %s434 = sadd.s32 %s432, %s433
      %s435 = smul.addr %s434, 4
      %s436 = scalar_lea.vmem %s9, %s435
      %s437 = smul.u32 8, %s26
      %p438 = scmp.lt.s32.totalorder %s25, 1
      %s439 = scalar_select %p438, %s25, 1
      %p440 = scmp.lt.s32.totalorder %s437, 7
      %s441 = scalar_select %p440, %s437, 7
      %s442 = smul.addr %s439, 8
      %s443 = sadd.s32 %s441, %s442
      %s444 = smul.addr %s443, 4
      %s445 = scalar_lea.vmem %s0, %s444
      %s446 = smul.u32 8, %s26
      %s447 = smul.u32 8, %s26
      %p448 = scmp.lt.s32.totalorder %s25, 1
      %s449 = scalar_select %p448, %s25, 1
      %p450 = scmp.lt.s32.totalorder %s447, 7
      %s451 = scalar_select %p450, %s447, 7
      %s452 = smul.addr %s449, 8
      %s453 = sadd.s32 %s451, %s452
      %s454 = smul.addr %s453, 4
      %s455 = scalar_lea.vmem %s1, %s454
      %s456 = smul.u32 8, %s26
      %s457 = smul.u32 8, %s27
      %p458 = scmp.lt.s32.totalorder %s25, 1
      %s459 = scalar_select %p458, %s25, 1
      %p460 = scmp.lt.s32.totalorder %s457, 7
      %s461 = scalar_select %p460, %s457, 7
      %s462 = smul.addr %s459, 8
      %s463 = sadd.s32 %s461, %s462
      %s464 = smul.addr %s463, 4
      %s465 = scalar_lea.vmem %s2, %s464
      %s466 = smul.u32 8, %s27
      %s467 = smul.u32 8, %s27
      %p468 = scmp.lt.s32.totalorder %s25, 1
      %s469 = scalar_select %p468, %s25, 1
      %p470 = scmp.lt.s32.totalorder %s467, 7
      %s471 = scalar_select %p470, %s467, 7
      %s472 = smul.addr %s469, 8
      %s473 = sadd.s32 %s471, %s472
      %s474 = smul.addr %s473, 4
      %s475 = scalar_lea.vmem %s3, %s474
      %s476 = smul.u32 8, %s27
      %s477 = smul.u32 8, %s26
      %p478 = scmp.lt.s32.totalorder %s25, 1
      %s479 = scalar_select %p478, %s25, 1
      %p480 = scmp.lt.s32.totalorder %s477, 7
      %s481 = scalar_select %p480, %s477, 7
      %s482 = smul.addr %s479, 8
      %s483 = sadd.s32 %s481, %s482
      %s484 = smul.addr %s483, 4
      %s485 = scalar_lea.vmem %s9, %s484
      %s486 = smul.u32 8, %s26
      %p488 = scmp.eq.s32.totalorder %s27, 0
      // Predicated region
      $region57: #{resnet_base_oc_forward.6} parent=55 // pred_check
        %p489 = pneg %p488
      $region58: #{resnet_base_oc_forward.6} parent=55 // pred_check_branch
        %491 = sbr.rel (%p489) target = $region60
      $region59: #{resnet_base_oc_forward.6} parent=55 // pred_region
        %vm492 = vcmask 7168
        %493 = vst.msk [vmem:[#allocation2] sm:$0xff] %vm492, -inf
        %494 = vst.msk [vmem:[#allocation2 + $0x8] sm:$0xff] %vm492, -inf
        %495 = vst.msk [vmem:[#allocation2 + $0x10] sm:$0xff] %vm492, -inf
        %496 = vst.msk [vmem:[#allocation2 + $0x18] sm:$0xff] %vm492, -inf
        %497 = vst.msk [vmem:[#allocation2 + $0x20] sm:$0xff] %vm492, -inf
        %498 = vst.msk [vmem:[#allocation2 + $0x28] sm:$0xff] %vm492, -inf
        %499 = vst.msk [vmem:[#allocation2 + $0x30] sm:$0xff] %vm492, -inf
        %500 = vst.msk [vmem:[#allocation2 + $0x38] sm:$0xff] %vm492, -inf
        %501 = vst.msk [vmem:[#allocation3] sm:$0xff] %vm492, 0.0
        %502 = vst.msk [vmem:[#allocation3 + $0x8] sm:$0xff] %vm492, 0.0
        %503 = vst.msk [vmem:[#allocation3 + $0x10] sm:$0xff] %vm492, 0.0
        %504 = vst.msk [vmem:[#allocation3 + $0x18] sm:$0xff] %vm492, 0.0
        %505 = vst.msk [vmem:[#allocation3 + $0x20] sm:$0xff] %vm492, 0.0
        %506 = vst.msk [vmem:[#allocation3 + $0x28] sm:$0xff] %vm492, 0.0
        %507 = vst.msk [vmem:[#allocation3 + $0x30] sm:$0xff] %vm492, 0.0
        %508 = vst.msk [vmem:[#allocation3 + $0x38] sm:$0xff] %vm492, 0.0
        %vm509 = vcmask 130048
        %510 = vst.msk [vmem:[#allocation4] sm:$0xff] %vm509, 0.0
        %511 = vst.msk [vmem:[#allocation4 + $0x8] sm:$0xff] %vm509, 0.0
        %512 = vst.msk [vmem:[#allocation4 + $0x10] sm:$0xff] %vm509, 0.0
        %513 = vst.msk [vmem:[#allocation4 + $0x18] sm:$0xff] %vm509, 0.0
        %514 = vst.msk [vmem:[#allocation4 + $0x20] sm:$0xff] %vm509, 0.0
        %515 = vst.msk [vmem:[#allocation4 + $0x28] sm:$0xff] %vm509, 0.0
        %516 = vst.msk [vmem:[#allocation4 + $0x30] sm:$0xff] %vm509, 0.0
        %517 = vst.msk [vmem:[#allocation4 + $0x38] sm:$0xff] %vm509, 0.0
      $region60: #{resnet_base_oc_forward.6} parent=55 // pred_fallthru
        _
      %v518 = vld [vmem:[%s445] sm:$0xf]
      %v519 = vld [vmem:[%s445 + $0x4] sm:$0xf]
      %v520 = vld [vmem:[%s445 + $0x8] sm:$0xf]
      %v521 = vld [vmem:[%s445 + $0xc] sm:$0xf]
      %v522 = vld [vmem:[%s445 + $0x10] sm:$0xf]
      %v523 = vld [vmem:[%s445 + $0x14] sm:$0xf]
      %v524 = vld [vmem:[%s445 + $0x18] sm:$0xf]
      %v525 = vld [vmem:[%s445 + $0x1c] sm:$0xf]
      %v526 = vld [vmem:[%s465] sm:$0xf]
      %v527 = vld [vmem:[%s465 + $0x4] sm:$0xf]
      %v528 = vld [vmem:[%s465 + $0x8] sm:$0xf]
      %v529 = vld [vmem:[%s465 + $0xc] sm:$0xf]
      %v530 = vld [vmem:[%s465 + $0x10] sm:$0xf]
      %v531 = vld [vmem:[%s465 + $0x14] sm:$0xf]
      %v532 = vld [vmem:[%s465 + $0x18] sm:$0xf]
      %v533 = vld [vmem:[%s465 + $0x1c] sm:$0xf]
      %v534 = vld [vmem:[%s475] sm:$0xf]
      %v535 = vld [vmem:[%s475 + $0x4] sm:$0xf]
      %v536 = vld [vmem:[%s475 + $0x8] sm:$0xf]
      %v537 = vld [vmem:[%s475 + $0xc] sm:$0xf]
      %v538 = vld [vmem:[%s475 + $0x10] sm:$0xf]
      %v539 = vld [vmem:[%s475 + $0x14] sm:$0xf]
      %v540 = vld [vmem:[%s475 + $0x18] sm:$0xf]
      %v541 = vld [vmem:[%s475 + $0x1c] sm:$0xf]
      %v550 = vunpack.c.l.b16 %v518
      %v551 = vunpack.c.l.b16 %v519
      %v552 = vunpack.c.l.b16 %v520
      %v553 = vunpack.c.l.b16 %v521
      %v554 = vunpack.c.l.b16 %v522
      %v555 = vunpack.c.l.b16 %v523
      %v556 = vunpack.c.l.b16 %v524
      %v557 = vunpack.c.l.b16 %v525
      %v558 = vpack.c.b16 %v551, %v550
      %v559 = vpack.c.b16 %v553, %v552
      %v560 = vpack.c.b16 %v555, %v554
      %v561 = vpack.c.b16 %v557, %v556
      %v570 = vunpack.c.l.b16 %v526
      %v571 = vunpack.c.l.b16 %v527
      %v572 = vunpack.c.l.b16 %v528
      %v573 = vunpack.c.l.b16 %v529
      %v574 = vunpack.c.l.b16 %v530
      %v575 = vunpack.c.l.b16 %v531
      %v576 = vunpack.c.l.b16 %v532
      %v577 = vunpack.c.l.b16 %v533
      %v578 = vpack.c.b16 %v571, %v570
      %v579 = vpack.c.b16 %v573, %v572
      %v580 = vpack.c.b16 %v575, %v574
      %v581 = vpack.c.b16 %v577, %v576
      %vm582 = vcmask 130048
      %v584 = vsel %vm582, %v558, 0
      %v587 = vsel %vm582, %v559, 0
      %v590 = vsel %vm582, %v560, 0
      %v593 = vsel %vm582, %v561, 0
      %v596 = vsel %vm582, %v578, 0
      %v599 = vsel %vm582, %v579, 0
      %v602 = vsel %vm582, %v580, 0
      %v605 = vsel %vm582, %v581, 0
      %607 = vmatprep.subr.bf16.mxu0 0
      %608 = vmatpush1.bf16.xpose.msra.mxu0 %v596
      %609 = vmatprep.subr.bf16.mxu0 0
      %610 = vmatpush1.bf16.xpose.msra.mxu0 %v599
      %611 = vmatprep.subr.bf16.mxu0 0
      %612 = vmatpush1.bf16.xpose.msra.mxu0 %v602
      %613 = vmatprep.subr.bf16.mxu0 0
      %614 = vmatpush1.bf16.xpose.msra.mxu0 %v605
      %615 = vmatprep.subr.bf16.mxu0 0
      %616 = vmatpush1.bf16.xpose.msra.mxu0 0
      %617 = vmatprep.subr.bf16.mxu0 0
      %618 = vmatpush1.bf16.xpose.msra.mxu0 0
      %619 = vmatprep.subr.bf16.mxu0 0
      %620 = vmatpush1.bf16.xpose.msra.mxu0 0
      %621 = vmatprep.subr.bf16.mxu0 0
      %622 = vmatpush1.bf16.xpose.msra.mxu0 0
      %623 = vmatprep.subr.bf16.mxu0 0
      %624 = vmatpush1.bf16.xpose.msra.mxu0 0
      %625 = vmatprep.subr.bf16.mxu0 0
      %626 = vmatpush1.bf16.xpose.msra.mxu0 0
      %627 = vmatprep.subr.bf16.mxu0 0
      %628 = vmatpush1.bf16.xpose.msra.mxu0 0
      %629 = vmatprep.subr.bf16.mxu0 0
      %630 = vmatpush1.bf16.xpose.msra.mxu0 0
      %631 = vmatprep.subr.bf16.mxu0 0
      %632 = vmatpush1.bf16.xpose.msra.mxu0 0
      %633 = vmatprep.subr.bf16.mxu0 0
      %634 = vmatpush1.bf16.xpose.msra.mxu0 0
      %635 = vmatprep.subr.bf16.mxu0 0
      %636 = vmatpush1.bf16.xpose.msra.mxu0 0
      %637 = vmatprep.subr.bf16.mxu0 0
      %638 = vmatpush1.bf16.xpose.msra.mxu0 0
      %639 = vmatprep.mubr.bf16.mxu0 0
      %640 = vmatmul.mubr.bf16.gmra.mrb[0].mxu0 %v584
      %v641 = vpop.f32.mrb[0].mxu0
      %v642 = vadd.f32 0.0, %v641
      %v643 = vpop.f32.mrb[0].mxu0
      %v644 = vpop.f32.mrb[0].mxu0
      %v645 = vadd.f32 0.0, %v644
      %v646 = vpop.f32.mrb[0].mxu0
      %647 = vmatprep.mubr.bf16.mxu0 0
      %648 = vmatmul.mubr.bf16.gmra.mrb[0].mxu0 %v587
      %v649 = vpop.f32.mrb[0].mxu0
      %v650 = vadd.f32 0.0, %v649
      %v651 = vpop.f32.mrb[0].mxu0
      %v652 = vpop.f32.mrb[0].mxu0
      %v653 = vadd.f32 0.0, %v652
      %v654 = vpop.f32.mrb[0].mxu0
      %655 = vmatprep.mubr.bf16.mxu0 0
      %656 = vmatmul.mubr.bf16.gmra.mrb[0].mxu0 %v590
      %v657 = vpop.f32.mrb[0].mxu0
      %v658 = vadd.f32 0.0, %v657
      %v659 = vpop.f32.mrb[0].mxu0
      %v660 = vpop.f32.mrb[0].mxu0
      %v661 = vadd.f32 0.0, %v660
      %v662 = vpop.f32.mrb[0].mxu0
      %663 = vmatprep.mubr.bf16.mxu0 0
      %664 = vmatmul.mubr.bf16.gmra.mrb[0].mxu0 %v593
      %v665 = vpop.f32.mrb[0].mxu0
      %v666 = vadd.f32 0.0, %v665
      %v667 = vpop.f32.mrb[0].mxu0
      %v668 = vpop.f32.mrb[0].mxu0
      %v669 = vadd.f32 0.0, %v668
      %v670 = vpop.f32.mrb[0].mxu0
      %671 = vdwg.mxu0
      %v672 = vld [vmem:[#allocation2] sm:$0xff]
      %v673 = vld [vmem:[#allocation2 + $0x8] sm:$0xff]
      %v674 = vld [vmem:[#allocation2 + $0x10] sm:$0xff]
      %v675 = vld [vmem:[#allocation2 + $0x18] sm:$0xff]
      %v676 = vld [vmem:[#allocation2 + $0x20] sm:$0xff]
      %v677 = vld [vmem:[#allocation2 + $0x28] sm:$0xff]
      %v678 = vld [vmem:[#allocation2 + $0x30] sm:$0xff]
      %v679 = vld [vmem:[#allocation2 + $0x38] sm:$0xff]
      %vm680 = vcmask 523264
      %v681 = vsel %vm680, %v642, -inf
      %682 = vmax.xlane.f32.xlu0 %v681
      %v683 = vpop.xlane.xlu0 %682
      %v684 = vsel %vm680, %v645, -inf
      %685 = vmax.xlane.f32.xlu0 %v684
      %v686 = vpop.xlane.xlu0 %685
      %v687 = vsel %vm680, %v650, -inf
      %688 = vmax.xlane.f32.xlu0 %v687
      %v689 = vpop.xlane.xlu0 %688
      %v690 = vsel %vm680, %v653, -inf
      %691 = vmax.xlane.f32.xlu0 %v690
      %v692 = vpop.xlane.xlu0 %691
      %v693 = vsel %vm680, %v658, -inf
      %694 = vmax.xlane.f32.xlu0 %v693
      %v695 = vpop.xlane.xlu0 %694
      %v696 = vsel %vm680, %v661, -inf
      %697 = vmax.xlane.f32.xlu0 %v696
      %v698 = vpop.xlane.xlu0 %697
      %v699 = vsel %vm680, %v666, -inf
      %700 = vmax.xlane.f32.xlu0 %v699
      %v701 = vpop.xlane.xlu0 %700
      %v702 = vsel %vm680, %v669, -inf
      %703 = vmax.xlane.f32.xlu0 %v702
      %v704 = vpop.xlane.xlu0 %703
      %v705 = vmax.f32 %v672, %v683
      %v706 = vmax.f32 %v673, %v686
      %v707 = vmax.f32 %v674, %v689
      %v708 = vmax.f32 %v675, %v692
      %v709 = vmax.f32 %v676, %v695
      %v710 = vmax.f32 %v677, %v698
      %v711 = vmax.f32 %v678, %v701
      %v712 = vmax.f32 %v679, %v704
      %v713 = vsub.f32 %v672, %v705
      %v714 = vsub.f32 %v673, %v706
      %v715 = vsub.f32 %v674, %v707
      %v716 = vsub.f32 %v675, %v708
      %v717 = vsub.f32 %v676, %v709
      %v718 = vsub.f32 %v677, %v710
      %v719 = vsub.f32 %v678, %v711
      %v720 = vsub.f32 %v679, %v712
      %v721 = vmul.f32 %v713, 1.442695
      %v722 = vpow.pop %v721
      %v723 = vmul.f32 %v714, 1.442695
      %v724 = vpow.pop %v723
      %v725 = vmul.f32 %v715, 1.442695
      %v726 = vpow.pop %v725
      %v727 = vmul.f32 %v716, 1.442695
      %v728 = vpow.pop %v727
      %v729 = vmul.f32 %v717, 1.442695
      %v730 = vpow.pop %v729
      %v731 = vmul.f32 %v718, 1.442695
      %v732 = vpow.pop %v731
      %v733 = vmul.f32 %v719, 1.442695
      %v734 = vpow.pop %v733
      %v735 = vmul.f32 %v720, 1.442695
      %v736 = vpow.pop %v735
      %738 = vset.pattern.permute.xlu0 0
      %739 = vperm.xlu0 %738, %v705
      %v740 = vpop.permute.xlu0 %739
      %743 = vset.pattern.permute.xlu0 0
      %744 = vperm.xlu0 %743, %v706
      %v745 = vpop.permute.xlu0 %744
      %748 = vset.pattern.permute.xlu0 0
      %749 = vperm.xlu0 %748, %v707
      %v750 = vpop.permute.xlu0 %749
      %753 = vset.pattern.permute.xlu0 0
      %754 = vperm.xlu0 %753, %v708
      %v755 = vpop.permute.xlu0 %754
      %758 = vset.pattern.permute.xlu0 0
      %759 = vperm.xlu0 %758, %v709
      %v760 = vpop.permute.xlu0 %759
      %763 = vset.pattern.permute.xlu0 0
      %764 = vperm.xlu0 %763, %v710
      %v765 = vpop.permute.xlu0 %764
      %768 = vset.pattern.permute.xlu0 0
      %769 = vperm.xlu0 %768, %v711
      %v770 = vpop.permute.xlu0 %769
      %773 = vset.pattern.permute.xlu0 0
      %774 = vperm.xlu0 %773, %v712
      %v775 = vpop.permute.xlu0 %774
      %v777 = vsub.f32 %v642, %v740
      %v778 = vsub.f32 %v645, %v745
      %v779 = vsub.f32 %v650, %v750
      %v780 = vsub.f32 %v653, %v755
      %v781 = vsub.f32 %v658, %v760
      %v782 = vsub.f32 %v661, %v765
      %v783 = vsub.f32 %v666, %v770
      %v784 = vsub.f32 %v669, %v775
      %v785 = vmul.f32 %v777, 1.442695
      %v786 = vpow.pop %v785
      %v787 = vmul.f32 %v778, 1.442695
      %v788 = vpow.pop %v787
      %v789 = vmul.f32 %v779, 1.442695
      %v790 = vpow.pop %v789
      %v791 = vmul.f32 %v780, 1.442695
      %v792 = vpow.pop %v791
      %v793 = vmul.f32 %v781, 1.442695
      %v794 = vpow.pop %v793
      %v795 = vmul.f32 %v782, 1.442695
      %v796 = vpow.pop %v795
      %v797 = vmul.f32 %v783, 1.442695
      %v798 = vpow.pop %v797
      %v799 = vmul.f32 %v784, 1.442695
      %v800 = vpow.pop %v799
      %v801 = vld [vmem:[#allocation3] sm:$0xff]
      %v802 = vld [vmem:[#allocation3 + $0x8] sm:$0xff]
      %v803 = vld [vmem:[#allocation3 + $0x10] sm:$0xff]
      %v804 = vld [vmem:[#allocation3 + $0x18] sm:$0xff]
      %v805 = vld [vmem:[#allocation3 + $0x20] sm:$0xff]
      %v806 = vld [vmem:[#allocation3 + $0x28] sm:$0xff]
      %v807 = vld [vmem:[#allocation3 + $0x30] sm:$0xff]
      %v808 = vld [vmem:[#allocation3 + $0x38] sm:$0xff]
      %v809 = vmul.f32 %v722, %v801
      %v810 = vmul.f32 %v724, %v802
      %v811 = vmul.f32 %v726, %v803
      %v812 = vmul.f32 %v728, %v804
      %v813 = vmul.f32 %v730, %v805
      %v814 = vmul.f32 %v732, %v806
      %v815 = vmul.f32 %v734, %v807
      %v816 = vmul.f32 %v736, %v808
      %v817 = vsel %vm680, %v786, 0.0
      %818 = vadd.xlane.f32.xlu0 %v817
      %v819 = vpop.xlane.xlu0 %818
      %v820 = vsel %vm680, %v788, 0.0
      %821 = vadd.xlane.f32.xlu0 %v820
      %v822 = vpop.xlane.xlu0 %821
      %v823 = vsel %vm680, %v790, 0.0
      %824 = vadd.xlane.f32.xlu0 %v823
      %v825 = vpop.xlane.xlu0 %824
      %v826 = vsel %vm680, %v792, 0.0
      %827 = vadd.xlane.f32.xlu0 %v826
      %v828 = vpop.xlane.xlu0 %827
      %v829 = vsel %vm680, %v794, 0.0
      %830 = vadd.xlane.f32.xlu0 %v829
      %v831 = vpop.xlane.xlu0 %830
      %v832 = vsel %vm680, %v796, 0.0
      %833 = vadd.xlane.f32.xlu0 %v832
      %v834 = vpop.xlane.xlu0 %833
      %v835 = vsel %vm680, %v798, 0.0
      %836 = vadd.xlane.f32.xlu0 %v835
      %v837 = vpop.xlane.xlu0 %836
      %v838 = vsel %vm680, %v800, 0.0
      %839 = vadd.xlane.f32.xlu0 %v838
      %v840 = vpop.xlane.xlu0 %839
      %v841 = vadd.f32 %v809, %v819
      %v842 = vadd.f32 %v810, %v822
      %v843 = vadd.f32 %v811, %v825
      %v844 = vadd.f32 %v812, %v828
      %v845 = vadd.f32 %v813, %v831
      %v846 = vadd.f32 %v814, %v834
      %v847 = vadd.f32 %v815, %v837
      %v848 = vadd.f32 %v816, %v840
      %vm849 = vcmask 7168
      %850 = vst.msk [vmem:[#allocation3] sm:$0xff] %vm849, %v841
      %851 = vst.msk [vmem:[#allocation3 + $0x8] sm:$0xff] %vm849, %v842
      %852 = vst.msk [vmem:[#allocation3 + $0x10] sm:$0xff] %vm849, %v843
      %853 = vst.msk [vmem:[#allocation3 + $0x18] sm:$0xff] %vm849, %v844
      %854 = vst.msk [vmem:[#allocation3 + $0x20] sm:$0xff] %vm849, %v845
      %855 = vst.msk [vmem:[#allocation3 + $0x28] sm:$0xff] %vm849, %v846
      %856 = vst.msk [vmem:[#allocation3 + $0x30] sm:$0xff] %vm849, %v847
      %857 = vst.msk [vmem:[#allocation3 + $0x38] sm:$0xff] %vm849, %v848
      %v858 = vld [vmem:[#allocation4] sm:$0xff]
      %v859 = vld [vmem:[#allocation4 + $0x8] sm:$0xff]
      %v860 = vld [vmem:[#allocation4 + $0x10] sm:$0xff]
      %v861 = vld [vmem:[#allocation4 + $0x18] sm:$0xff]
      %v862 = vld [vmem:[#allocation4 + $0x20] sm:$0xff]
      %v863 = vld [vmem:[#allocation4 + $0x28] sm:$0xff]
      %v864 = vld [vmem:[#allocation4 + $0x30] sm:$0xff]
      %v865 = vld [vmem:[#allocation4 + $0x38] sm:$0xff]
      %867 = vset.pattern.permute.xlu0 0
      %868 = vperm.xlu0 %867, %v722
      %v869 = vpop.permute.xlu0 %868
      %872 = vset.pattern.permute.xlu0 0
      %873 = vperm.xlu0 %872, %v724
      %v874 = vpop.permute.xlu0 %873
      %877 = vset.pattern.permute.xlu0 0
      %878 = vperm.xlu0 %877, %v726
      %v879 = vpop.permute.xlu0 %878
      %882 = vset.pattern.permute.xlu0 0
      %883 = vperm.xlu0 %882, %v728
      %v884 = vpop.permute.xlu0 %883
      %887 = vset.pattern.permute.xlu0 0
      %888 = vperm.xlu0 %887, %v730
      %v889 = vpop.permute.xlu0 %888
      %892 = vset.pattern.permute.xlu0 0
      %893 = vperm.xlu0 %892, %v732
      %v894 = vpop.permute.xlu0 %893
      %897 = vset.pattern.permute.xlu0 0
      %898 = vperm.xlu0 %897, %v734
      %v899 = vpop.permute.xlu0 %898
      %902 = vset.pattern.permute.xlu0 0
      %903 = vperm.xlu0 %902, %v736
      %v904 = vpop.permute.xlu0 %903
      %v906 = vmul.f32 %v869, %v858
      %v907 = vmul.f32 %v874, %v859
      %v908 = vmul.f32 %v879, %v860
      %v909 = vmul.f32 %v884, %v861
      %v910 = vmul.f32 %v889, %v862
      %v911 = vmul.f32 %v894, %v863
      %v912 = vmul.f32 %v899, %v864
      %v913 = vmul.f32 %v904, %v865
      %v914 = vpack.c.bf16 %v788, %v786
      %v915 = vpack.c.bf16 %v792, %v790
      %v916 = vpack.c.bf16 %v796, %v794
      %v917 = vpack.c.bf16 %v800, %v798
      %v926 = vunpack.c.l.b16 %v534
      %v927 = vunpack.c.l.b16 %v535
      %v928 = vunpack.c.l.b16 %v536
      %v929 = vunpack.c.l.b16 %v537
      %v930 = vunpack.c.l.b16 %v538
      %v931 = vunpack.c.l.b16 %v539
      %v932 = vunpack.c.l.b16 %v540
      %v933 = vunpack.c.l.b16 %v541
      %v934 = vpack.c.b16 %v927, %v926
      %v935 = vpack.c.b16 %v929, %v928
      %v936 = vpack.c.b16 %v931, %v930
      %v937 = vpack.c.b16 %v933, %v932
      %v943 = vsel %vm680, %v914, 0
      %v946 = vsel %vm680, %v915, 0
      %v949 = vsel %vm680, %v916, 0
      %v952 = vsel %vm680, %v917, 0
      %954 = vmatprep.subr.bf16.mxu0 0
      %955 = vmatpush1.bf16.msra.mxu0 %v934
      %956 = vmatprep.subr.bf16.mxu0 0
      %957 = vmatpush1.bf16.msra.mxu0 %v935
      %958 = vmatprep.subr.bf16.mxu0 0
      %959 = vmatpush1.bf16.msra.mxu0 %v936
      %960 = vmatprep.subr.bf16.mxu0 0
      %961 = vmatpush1.bf16.msra.mxu0 %v937
      %962 = vmatprep.subr.bf16.mxu0 0
      %963 = vmatpush1.bf16.msra.mxu0 0
      %964 = vmatprep.subr.bf16.mxu0 0
      %965 = vmatpush1.bf16.msra.mxu0 0
      %966 = vmatprep.subr.bf16.mxu0 0
      %967 = vmatpush1.bf16.msra.mxu0 0
      %968 = vmatprep.subr.bf16.mxu0 0
      %969 = vmatpush1.bf16.msra.mxu0 0
      %970 = vmatprep.subr.bf16.mxu0 0
      %971 = vmatpush1.bf16.msra.mxu0 0
      %972 = vmatprep.subr.bf16.mxu0 0
      %973 = vmatpush1.bf16.msra.mxu0 0
      %974 = vmatprep.subr.bf16.mxu0 0
      %975 = vmatpush1.bf16.msra.mxu0 0
      %976 = vmatprep.subr.bf16.mxu0 0
      %977 = vmatpush1.bf16.msra.mxu0 0
      %978 = vmatprep.subr.bf16.mxu0 0
      %979 = vmatpush1.bf16.msra.mxu0 0
      %980 = vmatprep.subr.bf16.mxu0 0
      %981 = vmatpush1.bf16.msra.mxu0 0
      %982 = vmatprep.subr.bf16.mxu0 0
      %983 = vmatpush1.bf16.msra.mxu0 0
      %984 = vmatprep.subr.bf16.mxu0 0
      %985 = vmatpush1.bf16.msra.mxu0 0
      %986 = vmatprep.mubr.bf16.mxu0 0
      %987 = vmatmul.mubr.bf16.gmra.mrb[0].mxu0 %v943
      %v988 = vpop.f32.mrb[0].mxu0
      %v989 = vadd.f32 0.0, %v988
      %v990 = vpop.f32.mrb[0].mxu0
      %v991 = vpop.f32.mrb[0].mxu0
      %v992 = vadd.f32 0.0, %v991
      %v993 = vpop.f32.mrb[0].mxu0
      %994 = vmatprep.mubr.bf16.mxu0 0
      %995 = vmatmul.mubr.bf16.gmra.mrb[0].mxu0 %v946
      %v996 = vpop.f32.mrb[0].mxu0
      %v997 = vadd.f32 0.0, %v996
      %v998 = vpop.f32.mrb[0].mxu0
      %v999 = vpop.f32.mrb[0].mxu0
      %v1000 = vadd.f32 0.0, %v999
      %v1001 = vpop.f32.mrb[0].mxu0
      %1002 = vmatprep.mubr.bf16.mxu0 0
      %1003 = vmatmul.mubr.bf16.gmra.mrb[0].mxu0 %v949
      %v1004 = vpop.f32.mrb[0].mxu0
      %v1005 = vadd.f32 0.0, %v1004
      %v1006 = vpop.f32.mrb[0].mxu0
      %v1007 = vpop.f32.mrb[0].mxu0
      %v1008 = vadd.f32 0.0, %v1007
      %v1009 = vpop.f32.mrb[0].mxu0
      %1010 = vmatprep.mubr.bf16.mxu0 0
      %1011 = vmatmul.mubr.bf16.gmra.mrb[0].mxu0 %v952
      %v1012 = vpop.f32.mrb[0].mxu0
      %v1013 = vadd.f32 0.0, %v1012
      %v1014 = vpop.f32.mrb[0].mxu0
      %v1015 = vpop.f32.mrb[0].mxu0
      %v1016 = vadd.f32 0.0, %v1015
      %v1017 = vpop.f32.mrb[0].mxu0
      %1018 = vdwg.mxu0
      %v1019 = vadd.f32 %v906, %v989
      %v1020 = vadd.f32 %v907, %v992
      %v1021 = vadd.f32 %v908, %v997
      %v1022 = vadd.f32 %v909, %v1000
      %v1023 = vadd.f32 %v910, %v1005
      %v1024 = vadd.f32 %v911, %v1008
      %v1025 = vadd.f32 %v912, %v1013
      %v1026 = vadd.f32 %v913, %v1016
      %1027 = vst.msk [vmem:[#allocation4] sm:$0xff] %vm582, %v1019
      %1028 = vst.msk [vmem:[#allocation4 + $0x8] sm:$0xff] %vm582, %v1020
      %1029 = vst.msk [vmem:[#allocation4 + $0x10] sm:$0xff] %vm582, %v1021
      %1030 = vst.msk [vmem:[#allocation4 + $0x18] sm:$0xff] %vm582, %v1022
      %1031 = vst.msk [vmem:[#allocation4 + $0x20] sm:$0xff] %vm582, %v1023
      %1032 = vst.msk [vmem:[#allocation4 + $0x28] sm:$0xff] %vm582, %v1024
      %1033 = vst.msk [vmem:[#allocation4 + $0x30] sm:$0xff] %vm582, %v1025
      %1034 = vst.msk [vmem:[#allocation4 + $0x38] sm:$0xff] %vm582, %v1026
      %1035 = vst.msk [vmem:[#allocation2] sm:$0xff] %vm849, %v705
      %1036 = vst.msk [vmem:[#allocation2 + $0x8] sm:$0xff] %vm849, %v706
      %1037 = vst.msk [vmem:[#allocation2 + $0x10] sm:$0xff] %vm849, %v707
      %1038 = vst.msk [vmem:[#allocation2 + $0x18] sm:$0xff] %vm849, %v708
      %1039 = vst.msk [vmem:[#allocation2 + $0x20] sm:$0xff] %vm849, %v709
      %1040 = vst.msk [vmem:[#allocation2 + $0x28] sm:$0xff] %vm849, %v710
      %1041 = vst.msk [vmem:[#allocation2 + $0x30] sm:$0xff] %vm849, %v711
      %1042 = vst.msk [vmem:[#allocation2 + $0x38] sm:$0xff] %vm849, %v712
      // Predicated region
      $region61: #{resnet_base_oc_forward.6} parent=55 // pred_check
        %p1043 = pneg %p488
      $region62: #{resnet_base_oc_forward.6} parent=55 // pred_check_branch
        %1045 = sbr.rel (%p1043) target = $region64
      $region63: #{resnet_base_oc_forward.6} parent=55 // pred_region
        %v1046 = vld [vmem:[#allocation4] sm:$0xff]
        %v1047 = vld [vmem:[#allocation4 + $0x8] sm:$0xff]
        %v1048 = vld [vmem:[#allocation4 + $0x10] sm:$0xff]
        %v1049 = vld [vmem:[#allocation4 + $0x18] sm:$0xff]
        %v1050 = vld [vmem:[#allocation4 + $0x20] sm:$0xff]
        %v1051 = vld [vmem:[#allocation4 + $0x28] sm:$0xff]
        %v1052 = vld [vmem:[#allocation4 + $0x30] sm:$0xff]
        %v1053 = vld [vmem:[#allocation4 + $0x38] sm:$0xff]
        %v1054 = vld [vmem:[#allocation3] sm:$0xff]
        %v1055 = vld [vmem:[#allocation3 + $0x8] sm:$0xff]
        %v1056 = vld [vmem:[#allocation3 + $0x10] sm:$0xff]
        %v1057 = vld [vmem:[#allocation3 + $0x18] sm:$0xff]
        %v1058 = vld [vmem:[#allocation3 + $0x20] sm:$0xff]
        %v1059 = vld [vmem:[#allocation3 + $0x28] sm:$0xff]
        %v1060 = vld [vmem:[#allocation3 + $0x30] sm:$0xff]
        %v1061 = vld [vmem:[#allocation3 + $0x38] sm:$0xff]
        %v1062 = vrcp.pop %v1054
        %v1063 = vrcp.pop %v1055
        %v1064 = vrcp.pop %v1056
        %v1065 = vrcp.pop %v1057
        %v1066 = vrcp.pop %v1058
        %v1067 = vrcp.pop %v1059
        %v1068 = vrcp.pop %v1060
        %v1069 = vrcp.pop %v1061
        %1071 = vset.pattern.permute.xlu0 0
        %1072 = vperm.xlu0 %1071, %v1062
        %v1073 = vpop.permute.xlu0 %1072
        %1076 = vset.pattern.permute.xlu0 0
        %1077 = vperm.xlu0 %1076, %v1063
        %v1078 = vpop.permute.xlu0 %1077
        %1081 = vset.pattern.permute.xlu0 0
        %1082 = vperm.xlu0 %1081, %v1064
        %v1083 = vpop.permute.xlu0 %1082
        %1086 = vset.pattern.permute.xlu0 0
        %1087 = vperm.xlu0 %1086, %v1065
        %v1088 = vpop.permute.xlu0 %1087
        %1091 = vset.pattern.permute.xlu0 0
        %1092 = vperm.xlu0 %1091, %v1066
        %v1093 = vpop.permute.xlu0 %1092
        %1096 = vset.pattern.permute.xlu0 0
        %1097 = vperm.xlu0 %1096, %v1067
        %v1098 = vpop.permute.xlu0 %1097
        %1101 = vset.pattern.permute.xlu0 0
        %1102 = vperm.xlu0 %1101, %v1068
        %v1103 = vpop.permute.xlu0 %1102
        %1106 = vset.pattern.permute.xlu0 0
        %1107 = vperm.xlu0 %1106, %v1069
        %v1108 = vpop.permute.xlu0 %1107
        %v1110 = vmul.f32 %v1046, %v1073
        %v1111 = vmul.f32 %v1047, %v1078
        %v1112 = vmul.f32 %v1048, %v1083
        %v1113 = vmul.f32 %v1049, %v1088
        %v1114 = vmul.f32 %v1050, %v1093
        %v1115 = vmul.f32 %v1051, %v1098
        %v1116 = vmul.f32 %v1052, %v1103
        %v1117 = vmul.f32 %v1053, %v1108
        %v1118 = vld [vmem:[%s455] sm:$0xf]
        %v1119 = vld [vmem:[%s455 + $0x4] sm:$0xf]
        %v1120 = vld [vmem:[%s455 + $0x8] sm:$0xf]
        %v1121 = vld [vmem:[%s455 + $0xc] sm:$0xf]
        %v1122 = vld [vmem:[%s455 + $0x10] sm:$0xf]
        %v1123 = vld [vmem:[%s455 + $0x14] sm:$0xf]
        %v1124 = vld [vmem:[%s455 + $0x18] sm:$0xf]
        %v1125 = vld [vmem:[%s455 + $0x1c] sm:$0xf]
        %v1126 = vpack.c.bf16 %v1111, %v1110
        %v1127 = vpack.c.bf16 %v1113, %v1112
        %v1128 = vpack.c.bf16 %v1115, %v1114
        %v1129 = vpack.c.bf16 %v1117, %v1116
        %v1130 = vld [vmem:[%s4] sm:$0xf]
        %v1131 = vld [vmem:[%s4 + $0x4] sm:$0xf]
        %v1132 = vld [vmem:[%s5] sm:$0xf]
        %v1133 = vld [vmem:[%s5 + $0x4] sm:$0xf]
        %v1134 = vld [vmem:[%s5 + $0x8] sm:$0xf]
        %v1135 = vld [vmem:[%s5 + $0xc] sm:$0xf]
        %v1144 = vunpack.c.l.b16 %v1118
        %v1145 = vunpack.c.l.b16 %v1119
        %v1146 = vunpack.c.l.b16 %v1120
        %v1147 = vunpack.c.l.b16 %v1121
        %v1148 = vunpack.c.l.b16 %v1122
        %v1149 = vunpack.c.l.b16 %v1123
        %v1150 = vunpack.c.l.b16 %v1124
        %v1151 = vunpack.c.l.b16 %v1125
        %v1152 = vpack.c.b16 %v1145, %v1144
        %v1153 = vpack.c.b16 %v1147, %v1146
        %v1154 = vpack.c.b16 %v1149, %v1148
        %v1155 = vpack.c.b16 %v1151, %v1150
        %v1160 = vunpack.c.l.b16 %v1132
        %v1161 = vunpack.c.l.b16 %v1133
        %v1162 = vunpack.c.l.b16 %v1134
        %v1163 = vunpack.c.l.b16 %v1135
        %v1164 = vpack.c.b16 %v1161, %v1160
        %v1165 = vpack.c.b16 %v1163, %v1162
        %vm1168 = vcmask 261120
        %v1170 = vsel %vm1168, %v1152, 0
        %v1173 = vsel %vm1168, %v1153, 0
        %v1176 = vsel %vm1168, %v1154, 0
        %v1179 = vsel %vm1168, %v1155, 0
        %1181 = vmatprep.subr.bf16.mxu0 0
        %1182 = vmatpush1.bf16.msra.mxu0 %v1164
        %1183 = vmatprep.subr.bf16.mxu0 0
        %1184 = vmatpush1.bf16.msra.mxu0 %v1165
        %1185 = vmatprep.subr.bf16.mxu0 0
        %1186 = vmatpush1.bf16.msra.mxu0 0
        %1187 = vmatprep.subr.bf16.mxu0 0
        %1188 = vmatpush1.bf16.msra.mxu0 0
        %1189 = vmatprep.subr.bf16.mxu0 0
        %1190 = vmatpush1.bf16.msra.mxu0 0
        %1191 = vmatprep.subr.bf16.mxu0 0
        %1192 = vmatpush1.bf16.msra.mxu0 0
        %1193 = vmatprep.subr.bf16.mxu0 0
        %1194 = vmatpush1.bf16.msra.mxu0 0
        %1195 = vmatprep.subr.bf16.mxu0 0
        %1196 = vmatpush1.bf16.msra.mxu0 0
        %1197 = vmatprep.subr.bf16.mxu0 0
        %1198 = vmatpush1.bf16.msra.mxu0 0
        %1199 = vmatprep.subr.bf16.mxu0 0
        %1200 = vmatpush1.bf16.msra.mxu0 0
        %1201 = vmatprep.subr.bf16.mxu0 0
        %1202 = vmatpush1.bf16.msra.mxu0 0
        %1203 = vmatprep.subr.bf16.mxu0 0
        %1204 = vmatpush1.bf16.msra.mxu0 0
        %1205 = vmatprep.subr.bf16.mxu0 0
        %1206 = vmatpush1.bf16.msra.mxu0 0
        %1207 = vmatprep.subr.bf16.mxu0 0
        %1208 = vmatpush1.bf16.msra.mxu0 0
        %1209 = vmatprep.subr.bf16.mxu0 0
        %1210 = vmatpush1.bf16.msra.mxu0 0
        %1211 = vmatprep.subr.bf16.mxu0 0
        %1212 = vmatpush1.bf16.msra.mxu0 0
        %1213 = vmatprep.mubr.bf16.mxu0 0
        %1214 = vmatmul.mubr.bf16.gmra.mrb[0].mxu0 %v1170
        %v1215 = vpop.f32.mrb[0].mxu0
        %v1216 = vadd.f32 0.0, %v1215
        %v1217 = vpop.f32.mrb[0].mxu0
        %v1218 = vpop.f32.mrb[0].mxu0
        %v1219 = vadd.f32 0.0, %v1218
        %v1220 = vpop.f32.mrb[0].mxu0
        %1221 = vmatprep.mubr.bf16.mxu0 0
        %1222 = vmatmul.mubr.bf16.gmra.mrb[0].mxu0 %v1173
        %v1223 = vpop.f32.mrb[0].mxu0
        %v1224 = vadd.f32 0.0, %v1223
        %v1225 = vpop.f32.mrb[0].mxu0
        %v1226 = vpop.f32.mrb[0].mxu0
        %v1227 = vadd.f32 0.0, %v1226
        %v1228 = vpop.f32.mrb[0].mxu0
        %1229 = vmatprep.mubr.bf16.mxu0 0
        %1230 = vmatmul.mubr.bf16.gmra.mrb[0].mxu0 %v1176
        %v1231 = vpop.f32.mrb[0].mxu0
        %v1232 = vadd.f32 0.0, %v1231
        %v1233 = vpop.f32.mrb[0].mxu0
        %v1234 = vpop.f32.mrb[0].mxu0
        %v1235 = vadd.f32 0.0, %v1234
        %v1236 = vpop.f32.mrb[0].mxu0
        %1237 = vmatprep.mubr.bf16.mxu0 0
        %1238 = vmatmul.mubr.bf16.gmra.mrb[0].mxu0 %v1179
        %v1239 = vpop.f32.mrb[0].mxu0
        %v1240 = vadd.f32 0.0, %v1239
        %v1241 = vpop.f32.mrb[0].mxu0
        %v1242 = vpop.f32.mrb[0].mxu0
        %v1243 = vadd.f32 0.0, %v1242
        %v1244 = vpop.f32.mrb[0].mxu0
        %1245 = vdwg.mxu0
        %v1248 = vunpack.c.l.b16 %v1130
        %v1249 = vunpack.c.l.b16 %v1131
        %v1250 = vpack.c.b16 %v1249, %v1248
        %v1253 = vsel %vm582, %v1126, 0
        %v1256 = vsel %vm582, %v1127, 0
        %v1259 = vsel %vm582, %v1128, 0
        %v1262 = vsel %vm582, %v1129, 0
        %1264 = vmatprep.subr.bf16.mxu0 0
        %1265 = vmatpush1.bf16.msra.mxu0 %v1250
        %1266 = vmatprep.subr.bf16.mxu0 0
        %1267 = vmatpush1.bf16.msra.mxu0 0
        %1268 = vmatprep.subr.bf16.mxu0 0
        %1269 = vmatpush1.bf16.msra.mxu0 0
        %1270 = vmatprep.subr.bf16.mxu0 0
        %1271 = vmatpush1.bf16.msra.mxu0 0
        %1272 = vmatprep.subr.bf16.mxu0 0
        %1273 = vmatpush1.bf16.msra.mxu0 0
        %1274 = vmatprep.subr.bf16.mxu0 0
        %1275 = vmatpush1.bf16.msra.mxu0 0
        %1276 = vmatprep.subr.bf16.mxu0 0
        %1277 = vmatpush1.bf16.msra.mxu0 0
        %1278 = vmatprep.subr.bf16.mxu0 0
        %1279 = vmatpush1.bf16.msra.mxu0 0
        %1280 = vmatprep.subr.bf16.mxu0 0
        %1281 = vmatpush1.bf16.msra.mxu0 0
        %1282 = vmatprep.subr.bf16.mxu0 0
        %1283 = vmatpush1.bf16.msra.mxu0 0
        %1284 = vmatprep.subr.bf16.mxu0 0
        %1285 = vmatpush1.bf16.msra.mxu0 0
        %1286 = vmatprep.subr.bf16.mxu0 0
        %1287 = vmatpush1.bf16.msra.mxu0 0
        %1288 = vmatprep.subr.bf16.mxu0 0
        %1289 = vmatpush1.bf16.msra.mxu0 0
        %1290 = vmatprep.subr.bf16.mxu0 0
        %1291 = vmatpush1.bf16.msra.mxu0 0
        %1292 = vmatprep.subr.bf16.mxu0 0
        %1293 = vmatpush1.bf16.msra.mxu0 0
        %1294 = vmatprep.subr.bf16.mxu0 0
        %1295 = vmatpush1.bf16.msra.mxu0 0
        %1296 = vmatprep.mubr.bf16.mxu0 0
        %1297 = vmatmul.mubr.bf16.gmra.mrb[0].mxu0 %v1253
        %v1298 = vpop.f32.mrb[0].mxu0
        %v1299 = vadd.f32 %v1216, %v1298
        %v1300 = vpop.f32.mrb[0].mxu0
        %v1301 = vpop.f32.mrb[0].mxu0
        %v1302 = vadd.f32 %v1219, %v1301
        %v1303 = vpop.f32.mrb[0].mxu0
        %1304 = vmatprep.mubr.bf16.mxu0 0
        %1305 = vmatmul.mubr.bf16.gmra.mrb[0].mxu0 %v1256
        %v1306 = vpop.f32.mrb[0].mxu0
        %v1307 = vadd.f32 %v1224, %v1306
        %v1308 = vpop.f32.mrb[0].mxu0
        %v1309 = vpop.f32.mrb[0].mxu0
        %v1310 = vadd.f32 %v1227, %v1309
        %v1311 = vpop.f32.mrb[0].mxu0
        %1312 = vmatprep.mubr.bf16.mxu0 0
        %1313 = vmatmul.mubr.bf16.gmra.mrb[0].mxu0 %v1259
        %v1314 = vpop.f32.mrb[0].mxu0
        %v1315 = vadd.f32 %v1232, %v1314
        %v1316 = vpop.f32.mrb[0].mxu0
        %v1317 = vpop.f32.mrb[0].mxu0
        %v1318 = vadd.f32 %v1235, %v1317
        %v1319 = vpop.f32.mrb[0].mxu0
        %1320 = vmatprep.mubr.bf16.mxu0 0
        %1321 = vmatmul.mubr.bf16.gmra.mrb[0].mxu0 %v1262
        %v1322 = vpop.f32.mrb[0].mxu0
        %v1323 = vadd.f32 %v1240, %v1322
        %v1324 = vpop.f32.mrb[0].mxu0
        %v1325 = vpop.f32.mrb[0].mxu0
        %v1326 = vadd.f32 %v1243, %v1325
        %v1327 = vpop.f32.mrb[0].mxu0
        %1328 = vdwg.mxu0
        %v1329 = vld [vmem:[%s6] sm:$0x1]
        %v1331 = vlaneseq
        %v1332 = vshrl.u32 %v1331, 7
        %v1333 = vsub.s32 0, %v1332
        %v1334 = vrot.slane %v1329, %v1333
        %v1336 = vadd.f32 %v1299, %v1334
        %v1337 = vadd.f32 %v1302, %v1334
        %v1338 = vadd.f32 %v1307, %v1334
        %v1339 = vadd.f32 %v1310, %v1334
        %v1340 = vadd.f32 %v1315, %v1334
        %v1341 = vadd.f32 %v1318, %v1334
        %v1342 = vadd.f32 %v1323, %v1334
        %v1343 = vadd.f32 %v1326, %v1334
        %v1344 = vmax.f32 %v1336, 0.0
        %v1345 = vmax.f32 %v1337, 0.0
        %v1346 = vmax.f32 %v1338, 0.0
        %v1347 = vmax.f32 %v1339, 0.0
        %v1348 = vmax.f32 %v1340, 0.0
        %v1349 = vmax.f32 %v1341, 0.0
        %v1350 = vmax.f32 %v1342, 0.0
        %v1351 = vmax.f32 %v1343, 0.0
        %v1352 = vpack.c.bf16 %v1345, %v1344
        %v1353 = vpack.c.bf16 %v1347, %v1346
        %v1354 = vpack.c.bf16 %v1349, %v1348
        %v1355 = vpack.c.bf16 %v1351, %v1350
        %v1356 = vld [vmem:[%s7] sm:$0xf]
        %v1357 = vld [vmem:[%s7 + $0x4] sm:$0xf]
        %v1358 = vld [vmem:[%s7 + $0x8] sm:$0xf]
        %v1359 = vld [vmem:[%s7 + $0xc] sm:$0xf]
        %v1360 = vld [vmem:[%s8] sm:$0x1]
        %v1362 = vlaneseq
        %v1363 = vshrl.u32 %v1362, 7
        %v1364 = vsub.s32 0, %v1363
        %v1365 = vrot.slane %v1360, %v1364
        %v1371 = vunpack.c.l.b16 %v1356
        %v1372 = vunpack.c.l.b16 %v1357
        %v1373 = vunpack.c.l.b16 %v1358
        %v1374 = vunpack.c.l.b16 %v1359
        %v1375 = vpack.c.b16 %v1372, %v1371
        %v1376 = vpack.c.b16 %v1374, %v1373
        %v1380 = vsel %vm1168, %v1352, 0
        %v1383 = vsel %vm1168, %v1353, 0
        %v1386 = vsel %vm1168, %v1354, 0
        %v1389 = vsel %vm1168, %v1355, 0
        %1391 = vmatprep.subr.bf16.mxu0 0
        %1392 = vmatpush1.bf16.msra.mxu0 %v1375
        %1393 = vmatprep.subr.bf16.mxu0 0
        %1394 = vmatpush1.bf16.msra.mxu0 %v1376
        %1395 = vmatprep.subr.bf16.mxu0 0
        %1396 = vmatpush1.bf16.msra.mxu0 0
        %1397 = vmatprep.subr.bf16.mxu0 0
        %1398 = vmatpush1.bf16.msra.mxu0 0
        %1399 = vmatprep.subr.bf16.mxu0 0
        %1400 = vmatpush1.bf16.msra.mxu0 0
        %1401 = vmatprep.subr.bf16.mxu0 0
        %1402 = vmatpush1.bf16.msra.mxu0 0
        %1403 = vmatprep.subr.bf16.mxu0 0
        %1404 = vmatpush1.bf16.msra.mxu0 0
        %1405 = vmatprep.subr.bf16.mxu0 0
        %1406 = vmatpush1.bf16.msra.mxu0 0
        %1407 = vmatprep.subr.bf16.mxu0 0
        %1408 = vmatpush1.bf16.msra.mxu0 0
        %1409 = vmatprep.subr.bf16.mxu0 0
        %1410 = vmatpush1.bf16.msra.mxu0 0
        %1411 = vmatprep.subr.bf16.mxu0 0
        %1412 = vmatpush1.bf16.msra.mxu0 0
        %1413 = vmatprep.subr.bf16.mxu0 0
        %1414 = vmatpush1.bf16.msra.mxu0 0
        %1415 = vmatprep.subr.bf16.mxu0 0
        %1416 = vmatpush1.bf16.msra.mxu0 0
        %1417 = vmatprep.subr.bf16.mxu0 0
        %1418 = vmatpush1.bf16.msra.mxu0 0
        %1419 = vmatprep.subr.bf16.mxu0 0
        %1420 = vmatpush1.bf16.msra.mxu0 0
        %1421 = vmatprep.subr.bf16.mxu0 0
        %1422 = vmatpush1.bf16.msra.mxu0 0
        %1423 = vmatprep.mubr.bf16.mxu0 0
        %1424 = vmatmul.mubr.bf16.gmra.mrb[0].mxu0 %v1380
        %v1425 = vpop.f32.mrb[0].mxu0
        %v1426 = vadd.f32 %v1365, %v1425
        %v1427 = vpop.f32.mrb[0].mxu0
        %v1428 = vpop.f32.mrb[0].mxu0
        %v1429 = vadd.f32 %v1365, %v1428
        %v1430 = vpop.f32.mrb[0].mxu0
        %1431 = vmatprep.mubr.bf16.mxu0 0
        %1432 = vmatmul.mubr.bf16.gmra.mrb[0].mxu0 %v1383
        %v1433 = vpop.f32.mrb[0].mxu0
        %v1434 = vadd.f32 %v1365, %v1433
        %v1435 = vpop.f32.mrb[0].mxu0
        %v1436 = vpop.f32.mrb[0].mxu0
        %v1437 = vadd.f32 %v1365, %v1436
        %v1438 = vpop.f32.mrb[0].mxu0
        %1439 = vmatprep.mubr.bf16.mxu0 0
        %1440 = vmatmul.mubr.bf16.gmra.mrb[0].mxu0 %v1386
        %v1441 = vpop.f32.mrb[0].mxu0
        %v1442 = vadd.f32 %v1365, %v1441
        %v1443 = vpop.f32.mrb[0].mxu0
        %v1444 = vpop.f32.mrb[0].mxu0
        %v1445 = vadd.f32 %v1365, %v1444
        %v1446 = vpop.f32.mrb[0].mxu0
        %1447 = vmatprep.mubr.bf16.mxu0 0
        %1448 = vmatmul.mubr.bf16.gmra.mrb[0].mxu0 %v1389
        %v1449 = vpop.f32.mrb[0].mxu0
        %v1450 = vadd.f32 %v1365, %v1449
        %v1451 = vpop.f32.mrb[0].mxu0
        %v1452 = vpop.f32.mrb[0].mxu0
        %v1453 = vadd.f32 %v1365, %v1452
        %v1454 = vpop.f32.mrb[0].mxu0
        %1455 = vdwg.mxu0
        %v1456 = vpack.c.bf16 %v1429, %v1426
        %v1457 = vpack.c.bf16 %v1437, %v1434
        %v1458 = vpack.c.bf16 %v1445, %v1442
        %v1459 = vpack.c.bf16 %v1453, %v1450
        %v1464 = vunpack.c.l.b16 %v1456
        %v1465 = vunpack.c.h.b16 %v1456
        %v1466 = vunpack.c.l.b16 %v1457
        %v1467 = vunpack.c.h.b16 %v1457
        %v1468 = vunpack.c.l.b16 %v1458
        %v1469 = vunpack.c.h.b16 %v1458
        %v1470 = vunpack.c.l.b16 %v1459
        %v1471 = vunpack.c.h.b16 %v1459
        %v1472 = vpack.c.b16 %v1464, %v1464
        %v1473 = vpack.c.b16 %v1465, %v1465
        %v1474 = vpack.c.b16 %v1466, %v1466
        %v1475 = vpack.c.b16 %v1467, %v1467
        %v1476 = vpack.c.b16 %v1468, %v1468
        %v1477 = vpack.c.b16 %v1469, %v1469
        %v1478 = vpack.c.b16 %v1470, %v1470
        %v1479 = vpack.c.b16 %v1471, %v1471
        %1488 = vst [vmem:[%s485] sm:$0xf] %v1472
        %1489 = vst [vmem:[%s485 + $0x4] sm:$0xf] %v1473
        %1490 = vst [vmem:[%s485 + $0x8] sm:$0xf] %v1474
        %1491 = vst [vmem:[%s485 + $0xc] sm:$0xf] %v1475
        %1492 = vst [vmem:[%s485 + $0x10] sm:$0xf] %v1476
        %1493 = vst [vmem:[%s485 + $0x14] sm:$0xf] %v1477
        %1494 = vst [vmem:[%s485 + $0x18] sm:$0xf] %v1478
        %1495 = vst [vmem:[%s485 + $0x1c] sm:$0xf] %v1479
      $region64: #{resnet_base_oc_forward.6} parent=55 // pred_fallthru
        _
      %s1496 = smul.u32 8, %s26
      %p1497 = scmp.lt.s32.totalorder %s25, 1
      %s1498 = scalar_select %p1497, %s25, 1
      %p1499 = scmp.lt.s32.totalorder %s1496, 7
      %s1500 = scalar_select %p1499, %s1496, 7
      %s1501 = smul.addr %s1498, 8
      %s1502 = sadd.s32 %s1500, %s1501
      %s1503 = smul.addr %s1502, 4
      %s1504 = scalar_lea.vmem %s9, %s1503
      // Predicated region
      $region65: #{resnet_base_oc_forward.6} parent=55 // pred_check
        %p1505 = pneg %p276
      $region66: #{resnet_base_oc_forward.6} parent=55 // pred_check_branch
        %1507 = sbr.rel (%p1505) target = $region68
      $region67: #{resnet_base_oc_forward.6} parent=55 // pred_region
        %s1508 = smul.u32 8, %s26
      $region68: #{resnet_base_oc_forward.6} parent=55 // pred_fallthru
        _
    $region56: #{resnet_base_oc_forward.6} parent=5 // pred_fallthru
      _
    %p1509 = scmp.le.s32.totalorder 2, %s15
    // Predicated region
    $region69: #{resnet_base_oc_forward.6} parent=5 // pred_check
      %p1510 = pneg %p1509
    $region70: #{resnet_base_oc_forward.6} parent=5 // pred_check_branch
      %1512 = sbr.rel (%p1510) target = $region72
    $region71: #{resnet_base_oc_forward.6} parent=5 // pred_region
      %s1513 = ssub.s32 %s15, 2
      // Predicated region
      $region73: #{resnet_base_oc_forward.6} parent=71 // pred_check
        %p1514 = pneg %p282
      $region74: #{resnet_base_oc_forward.6} parent=71 // pred_check_branch
        %1516 = sbr.rel (%p1514) target = $region76
      $region75: #{resnet_base_oc_forward.6} parent=71 // pred_region
        %s1517 = smul.u32 8, %s29
        %p1518 = scmp.lt.s32.totalorder %s28, 1
        %s1519 = scalar_select %p1518, %s28, 1
        %p1520 = scmp.lt.s32.totalorder %s1517, 7
        %s1521 = scalar_select %p1520, %s1517, 7
        %s1522 = smul.addr %s1519, 8
        %s1523 = sadd.s32 %s1521, %s1522
        %s1524 = smul.addr %s1523, 4
        %s1525 = scalar_lea.vmem %s9, %s1524
      $region76: #{resnet_base_oc_forward.6} parent=71 // pred_fallthru
        _
    $region72: #{resnet_base_oc_forward.6} parent=5 // pred_fallthru
      _
  $region6: #{resnet_base_oc_forward.6} parent=0 // loop_footer
    %s19 = sadd.s32 1, %s15
  $region7: #{resnet_base_oc_forward.6} parent=0 // loop_footer_branch
    %14 = sbr.rel target = $region3
  $region8: #{resnet_base_oc_forward.6} parent=0 // loop_exit
    _

// kernel: resnet_base_oc_forward.5
$region0: #{resnet_base_oc_forward.5}
  #allocation0 [shape = 'u32[]', space=smem, size = 0x4, offset = 0x4, fixed_abs, tag = 'smem constant byte address 0x4 - core index']
  #allocation1 [shape = 'u32[144,128]{1,0:T(1,128)}', space=vmem, size = 0x12000, scoped, tag = 'internal scratch']
  #allocation2 [shape = 'f32[64,288]{1,0:T(8,128)}', space=vmem, size = 0x18000, scoped, tag = 'scratch operand']
  %s0 = inlined_call_operand.vmem [shape: bf16[2,10,10,32], index: 0, kind: input, shape index: {}]
  %s1 = inlined_call_operand.vmem [shape: bf16[288,32], index: 1, kind: input, shape index: {}]
  %s2 = inlined_call_operand.vmem [shape: f32[1,32], index: 2, kind: input, shape index: {}]
  %s3 = inlined_call_operand.vmem [shape: bf16[32,16], index: 3, kind: input, shape index: {}]
  %s4 = inlined_call_operand.vmem [shape: f32[1,16], index: 4, kind: input, shape index: {}]
  %s5 = inlined_call_operand.vmem [shape: bf16[32,16], index: 5, kind: input, shape index: {}]
  %s6 = inlined_call_operand.vmem [shape: f32[1,16], index: 6, kind: input, shape index: {}]
  %s7 = inlined_call_operand.vmem [shape: bf16[2,64,32], index: 7, kind: output, shape index: {0}]
  %s8 = inlined_call_operand.vmem [shape: bf16[2,64,16], index: 8, kind: output, shape index: {1}]
  %s9 = inlined_call_operand.vmem [shape: bf16[2,64,16], index: 9, kind: output, shape index: {2}]
  %10 = xla_tuple %s7, %s8, %s9
  %s11 = sld [smem:[#allocation0]]
  $region77: #{resnet_base_oc_forward.5} parent=0
    _
  %s13 = ssub.s32 1, %s11
  %s14 = scalar_select 0, %s13, %s11
  loop: start=0, step=1, limit=4
  $region2: #{resnet_base_oc_forward.5} parent=0 // loop_pre_header
    _
  $region3: #{resnet_base_oc_forward.5} parent=0 // loop_header
    %s16 = sphi 0, %s20
    %p17 = scmp.ge.s32.totalorder %s16, 4
    %s26 = sphi 0, %s28
    %s29 = sphi 0, %s26
    %s30 = sphi 0, %s29
    %s46 = sphi 0, %s30
    %s50 = sphi 0, %s50
    %s52 = sphi 0, %s50
    %s53 = sphi 0, %s52
    %s67 = sphi 0, %s53
    %s71 = sphi 0, %s71
    %s73 = sphi 0, %s71
    %s74 = sphi 0, %s73
    %s88 = sphi 0, %s74
    %s92 = sphi 0, %s92
    %s94 = sphi 0, %s92
    %s95 = sphi 0, %s94
    %s109 = sphi 0, %s95
    %s113 = sphi 0, %s113
    %s115 = sphi 0, %s113
    %s116 = sphi 0, %s115
    %s130 = sphi 0, %s116
    %s134 = sphi 0, %s134
    %s136 = sphi 0, %s134
    %s137 = sphi 0, %s136
    %s151 = sphi 0, %s137
    %s155 = sphi 0, %s155
    %s157 = sphi 0, %s155
    %s158 = sphi 0, %s157
    %s172 = sphi 0, %s158
    %s178 = sphi 0, %s180
    %s181 = sphi 0, %s178
    %s182 = sphi 0, %s181
    %s198 = sphi 0, %s182
    %s204 = sphi 0, %s206
    %s207 = sphi 0, %s204
    %s208 = sphi 0, %s207
    %s224 = sphi 0, %s208
    %s230 = sphi 0, %s232
    %s233 = sphi 0, %s230
    %s234 = sphi 0, %s233
    %s250 = sphi 0, %s234
  $region4: #{resnet_base_oc_forward.5} parent=0 // loop_header_branch
    %19 = sbr.rel (%p17) target = $region8
  $region5: #{resnet_base_oc_forward.5} parent=0 // loop_body
    %s21 = ssub.s32 %s16, 1
    %s22 = ssub.s32 %s16, 2
    %s23 = sadd.s32 %s16, 1
    %s24 = ssub.s32 %s16, %s23
    %p25 = scmp.eq.s32.totalorder %s24, 0
    %s27 = sadd.s32 %s26, 1
    %s28 = scalar_select %p25, %s26, %s27
    %p31 = pneg %p25
    %p32 = scmp.eq.s32.totalorder %s16, 1
    %p33 = por %p31, %p32
    %p34 = scmp.ne.s32.totalorder %s26, %s29
    %p35 = scmp.eq.s32.totalorder %s16, 0
    %p36 = por %p34, %p35
    %p37 = scmp.ne.s32.totalorder %s26, %s29
    %p38 = scmp.eq.s32.totalorder %s21, 1
    %p39 = por %p37, %p38
    %p40 = scmp.ne.s32.totalorder %s29, %s30
    %p41 = scmp.eq.s32.totalorder %s21, 0
    %p42 = por %p40, %p41
    %p43 = scmp.ne.s32.totalorder %s29, %s30
    %p44 = scmp.eq.s32.totalorder %s22, 1
    %p45 = por %p43, %p44
    %p47 = scmp.ne.s32.totalorder %s30, %s46
    %p48 = scmp.eq.s32.totalorder %s22, 0
    %p49 = por %p47, %p48
    %s51 = sadd.s32 %s50, 1
    %p54 = scmp.eq.s32.totalorder %s16, 1
    %p55 = scmp.ne.s32.totalorder %s50, %s52
    %p56 = scmp.eq.s32.totalorder %s16, 0
    %p57 = por %p55, %p56
    %p58 = scmp.ne.s32.totalorder %s50, %s52
    %p59 = scmp.eq.s32.totalorder %s21, 1
    %p60 = por %p58, %p59
    %p61 = scmp.ne.s32.totalorder %s52, %s53
    %p62 = scmp.eq.s32.totalorder %s21, 0
    %p63 = por %p61, %p62
    %p64 = scmp.ne.s32.totalorder %s52, %s53
    %p65 = scmp.eq.s32.totalorder %s22, 1
    %p66 = por %p64, %p65
    %p68 = scmp.ne.s32.totalorder %s53, %s67
    %p69 = scmp.eq.s32.totalorder %s22, 0
    %p70 = por %p68, %p69
    %s72 = sadd.s32 %s71, 1
    %p75 = scmp.eq.s32.totalorder %s16, 1
    %p76 = scmp.ne.s32.totalorder %s71, %s73
    %p77 = scmp.eq.s32.totalorder %s16, 0
    %p78 = por %p76, %p77
    %p79 = scmp.ne.s32.totalorder %s71, %s73
    %p80 = scmp.eq.s32.totalorder %s21, 1
    %p81 = por %p79, %p80
    %p82 = scmp.ne.s32.totalorder %s73, %s74
    %p83 = scmp.eq.s32.totalorder %s21, 0
    %p84 = por %p82, %p83
    %p85 = scmp.ne.s32.totalorder %s73, %s74
    %p86 = scmp.eq.s32.totalorder %s22, 1
    %p87 = por %p85, %p86
    %p89 = scmp.ne.s32.totalorder %s74, %s88
    %p90 = scmp.eq.s32.totalorder %s22, 0
    %p91 = por %p89, %p90
    %s93 = sadd.s32 %s92, 1
    %p96 = scmp.eq.s32.totalorder %s16, 1
    %p97 = scmp.ne.s32.totalorder %s92, %s94
    %p98 = scmp.eq.s32.totalorder %s16, 0
    %p99 = por %p97, %p98
    %p100 = scmp.ne.s32.totalorder %s92, %s94
    %p101 = scmp.eq.s32.totalorder %s21, 1
    %p102 = por %p100, %p101
    %p103 = scmp.ne.s32.totalorder %s94, %s95
    %p104 = scmp.eq.s32.totalorder %s21, 0
    %p105 = por %p103, %p104
    %p106 = scmp.ne.s32.totalorder %s94, %s95
    %p107 = scmp.eq.s32.totalorder %s22, 1
    %p108 = por %p106, %p107
    %p110 = scmp.ne.s32.totalorder %s95, %s109
    %p111 = scmp.eq.s32.totalorder %s22, 0
    %p112 = por %p110, %p111
    %s114 = sadd.s32 %s113, 1
    %p117 = scmp.eq.s32.totalorder %s16, 1
    %p118 = scmp.ne.s32.totalorder %s113, %s115
    %p119 = scmp.eq.s32.totalorder %s16, 0
    %p120 = por %p118, %p119
    %p121 = scmp.ne.s32.totalorder %s113, %s115
    %p122 = scmp.eq.s32.totalorder %s21, 1
    %p123 = por %p121, %p122
    %p124 = scmp.ne.s32.totalorder %s115, %s116
    %p125 = scmp.eq.s32.totalorder %s21, 0
    %p126 = por %p124, %p125
    %p127 = scmp.ne.s32.totalorder %s115, %s116
    %p128 = scmp.eq.s32.totalorder %s22, 1
    %p129 = por %p127, %p128
    %p131 = scmp.ne.s32.totalorder %s116, %s130
    %p132 = scmp.eq.s32.totalorder %s22, 0
    %p133 = por %p131, %p132
    %s135 = sadd.s32 %s134, 1
    %p138 = scmp.eq.s32.totalorder %s16, 1
    %p139 = scmp.ne.s32.totalorder %s134, %s136
    %p140 = scmp.eq.s32.totalorder %s16, 0
    %p141 = por %p139, %p140
    %p142 = scmp.ne.s32.totalorder %s134, %s136
    %p143 = scmp.eq.s32.totalorder %s21, 1
    %p144 = por %p142, %p143
    %p145 = scmp.ne.s32.totalorder %s136, %s137
    %p146 = scmp.eq.s32.totalorder %s21, 0
    %p147 = por %p145, %p146
    %p148 = scmp.ne.s32.totalorder %s136, %s137
    %p149 = scmp.eq.s32.totalorder %s22, 1
    %p150 = por %p148, %p149
    %p152 = scmp.ne.s32.totalorder %s137, %s151
    %p153 = scmp.eq.s32.totalorder %s22, 0
    %p154 = por %p152, %p153
    %s156 = sadd.s32 %s155, 1
    %p159 = scmp.eq.s32.totalorder %s16, 1
    %p160 = scmp.ne.s32.totalorder %s155, %s157
    %p161 = scmp.eq.s32.totalorder %s16, 0
    %p162 = por %p160, %p161
    %p163 = scmp.ne.s32.totalorder %s155, %s157
    %p164 = scmp.eq.s32.totalorder %s21, 1
    %p165 = por %p163, %p164
    %p166 = scmp.ne.s32.totalorder %s157, %s158
    %p167 = scmp.eq.s32.totalorder %s21, 0
    %p168 = por %p166, %p167
    %p169 = scmp.ne.s32.totalorder %s157, %s158
    %p170 = scmp.eq.s32.totalorder %s22, 1
    %p171 = por %p169, %p170
    %p173 = scmp.ne.s32.totalorder %s158, %s172
    %p174 = scmp.eq.s32.totalorder %s22, 0
    %p175 = por %p173, %p174
    %s176 = ssub.s32 %s16, %s23
    %p177 = scmp.eq.s32.totalorder %s176, 0
    %s179 = sadd.s32 %s178, 1
    %s180 = scalar_select %p177, %s178, %s179
    %p183 = pneg %p177
    %p184 = scmp.eq.s32.totalorder %s16, 1
    %p185 = por %p183, %p184
    %p186 = scmp.ne.s32.totalorder %s178, %s181
    %p187 = scmp.eq.s32.totalorder %s16, 0
    %p188 = por %p186, %p187
    %p189 = scmp.ne.s32.totalorder %s178, %s181
    %p190 = scmp.eq.s32.totalorder %s21, 1
    %p191 = por %p189, %p190
    %p192 = scmp.ne.s32.totalorder %s181, %s182
    %p193 = scmp.eq.s32.totalorder %s21, 0
    %p194 = por %p192, %p193
    %p195 = scmp.ne.s32.totalorder %s181, %s182
    %p196 = scmp.eq.s32.totalorder %s22, 1
    %p197 = por %p195, %p196
    %p199 = scmp.ne.s32.totalorder %s182, %s198
    %p200 = scmp.eq.s32.totalorder %s22, 0
    %p201 = por %p199, %p200
    %s202 = ssub.s32 %s16, %s23
    %p203 = scmp.eq.s32.totalorder %s202, 0
    %s205 = sadd.s32 %s204, 1
    %s206 = scalar_select %p203, %s204, %s205
    %p209 = pneg %p203
    %p210 = scmp.eq.s32.totalorder %s16, 1
    %p211 = por %p209, %p210
    %p212 = scmp.ne.s32.totalorder %s204, %s207
    %p213 = scmp.eq.s32.totalorder %s16, 0
    %p214 = por %p212, %p213
    %p215 = scmp.ne.s32.totalorder %s204, %s207
    %p216 = scmp.eq.s32.totalorder %s21, 1
    %p217 = por %p215, %p216
    %p218 = scmp.ne.s32.totalorder %s207, %s208
    %p219 = scmp.eq.s32.totalorder %s21, 0
    %p220 = por %p218, %p219
    %p221 = scmp.ne.s32.totalorder %s207, %s208
    %p222 = scmp.eq.s32.totalorder %s22, 1
    %p223 = por %p221, %p222
    %p225 = scmp.ne.s32.totalorder %s208, %s224
    %p226 = scmp.eq.s32.totalorder %s22, 0
    %p227 = por %p225, %p226
    %s228 = ssub.s32 %s16, %s23
    %p229 = scmp.eq.s32.totalorder %s228, 0
    %s231 = sadd.s32 %s230, 1
    %s232 = scalar_select %p229, %s230, %s231
    %p235 = pneg %p229
    %p236 = scmp.eq.s32.totalorder %s16, 1
    %p237 = por %p235, %p236
    %p238 = scmp.ne.s32.totalorder %s230, %s233
    %p239 = scmp.eq.s32.totalorder %s16, 0
    %p240 = por %p238, %p239
    %p241 = scmp.ne.s32.totalorder %s230, %s233
    %p242 = scmp.eq.s32.totalorder %s21, 1
    %p243 = por %p241, %p242
    %p244 = scmp.ne.s32.totalorder %s233, %s234
    %p245 = scmp.eq.s32.totalorder %s21, 0
    %p246 = por %p244, %p245
    %p247 = scmp.ne.s32.totalorder %s233, %s234
    %p248 = scmp.eq.s32.totalorder %s22, 1
    %p249 = por %p247, %p248
    %p251 = scmp.ne.s32.totalorder %s234, %s250
    %p252 = scmp.eq.s32.totalorder %s22, 0
    %p253 = por %p251, %p252
    %p254 = scmp.le.s32.totalorder 1, %s16
    %p255 = scmp.lt.s32.totalorder %s16, 3
    %p256 = pnand %p254, %p255
    %p257 = pneg %p256
    // Predicated region
    $region9: #{resnet_base_oc_forward.5} parent=5 // pred_check
      _
    $region10: #{resnet_base_oc_forward.5} parent=5 // pred_check_branch
      %259 = sbr.rel (%p256) target = $region12
    $region11: #{resnet_base_oc_forward.5} parent=5 // pred_region
      %s260 = ssub.s32 %s16, 1
      // Predicated region
      $region13: #{resnet_base_oc_forward.5} parent=11 // pred_check
        %p261 = pneg %p63
      $region14: #{resnet_base_oc_forward.5} parent=11 // pred_check_branch
        %263 = sbr.rel (%p261) target = $region16
      $region15: #{resnet_base_oc_forward.5} parent=11 // pred_region
        _
      $region16: #{resnet_base_oc_forward.5} parent=11 // pred_fallthru
        _
      // Predicated region
      $region17: #{resnet_base_oc_forward.5} parent=11 // pred_check
        %p264 = pneg %p84
      $region18: #{resnet_base_oc_forward.5} parent=11 // pred_check_branch
        %266 = sbr.rel (%p264) target = $region20
      $region19: #{resnet_base_oc_forward.5} parent=11 // pred_region
        _
      $region20: #{resnet_base_oc_forward.5} parent=11 // pred_fallthru
        _
      // Predicated region
      $region21: #{resnet_base_oc_forward.5} parent=11 // pred_check
        %p267 = pneg %p105
      $region22: #{resnet_base_oc_forward.5} parent=11 // pred_check_branch
        %269 = sbr.rel (%p267) target = $region24
      $region23: #{resnet_base_oc_forward.5} parent=11 // pred_region
        _
      $region24: #{resnet_base_oc_forward.5} parent=11 // pred_fallthru
        _
      // Predicated region
      $region25: #{resnet_base_oc_forward.5} parent=11 // pred_check
        %p270 = pneg %p126
      $region26: #{resnet_base_oc_forward.5} parent=11 // pred_check_branch
        %272 = sbr.rel (%p270) target = $region28
      $region27: #{resnet_base_oc_forward.5} parent=11 // pred_region
        _
      $region28: #{resnet_base_oc_forward.5} parent=11 // pred_fallthru
        _
      // Predicated region
      $region29: #{resnet_base_oc_forward.5} parent=11 // pred_check
        %p273 = pneg %p147
      $region30: #{resnet_base_oc_forward.5} parent=11 // pred_check_branch
        %275 = sbr.rel (%p273) target = $region32
      $region31: #{resnet_base_oc_forward.5} parent=11 // pred_region
        _
      $region32: #{resnet_base_oc_forward.5} parent=11 // pred_fallthru
        _
      // Predicated region
      $region33: #{resnet_base_oc_forward.5} parent=11 // pred_check
        %p276 = pneg %p168
      $region34: #{resnet_base_oc_forward.5} parent=11 // pred_check_branch
        %278 = sbr.rel (%p276) target = $region36
      $region35: #{resnet_base_oc_forward.5} parent=11 // pred_region
        _
      $region36: #{resnet_base_oc_forward.5} parent=11 // pred_fallthru
        _
    $region12: #{resnet_base_oc_forward.5} parent=5 // pred_fallthru
      _
    %p279 = scmp.lt.s32.totalorder %s16, 2
    // Predicated region
    $region37: #{resnet_base_oc_forward.5} parent=5 // pred_check
      %p280 = pneg %p279
    $region38: #{resnet_base_oc_forward.5} parent=5 // pred_check_branch
      %282 = sbr.rel (%p280) target = $region40
    $region39: #{resnet_base_oc_forward.5} parent=5 // pred_region
      // Predicated region
      $region41: #{resnet_base_oc_forward.5} parent=39 // pred_check
        %p283 = pneg %p36
      $region42: #{resnet_base_oc_forward.5} parent=39 // pred_check_branch
        %285 = sbr.rel (%p283) target = $region44
      $region43: #{resnet_base_oc_forward.5} parent=39 // pred_region
        %p286 = scmp.lt.s32.totalorder %s16, 1
        %s287 = scalar_select %p286, %s16, 1
        %s288 = smul.addr %s287, 20
        %s289 = smul.addr %s288, 4
        %s290 = scalar_lea.vmem %s0, %s289
      $region44: #{resnet_base_oc_forward.5} parent=39 // pred_fallthru
        _
    $region40: #{resnet_base_oc_forward.5} parent=5 // pred_fallthru
      _
    %p291 = scmp.le.s32.totalorder 1, %s16
    %p292 = scmp.lt.s32.totalorder %s16, 3
    %p293 = pnand %p291, %p292
    %p294 = pneg %p293
    // Predicated region
    $region45: #{resnet_base_oc_forward.5} parent=5 // pred_check
      _
    $region46: #{resnet_base_oc_forward.5} parent=5 // pred_check_branch
      %296 = sbr.rel (%p293) target = $region48
    $region47: #{resnet_base_oc_forward.5} parent=5 // pred_region
      %s297 = ssub.s32 %s16, 1
      %p298 = scmp.lt.s32.totalorder %s21, 1
      %s299 = scalar_select %p298, %s21, 1
      %s300 = smul.addr %s299, 20
      %s301 = smul.addr %s300, 4
      %s302 = scalar_lea.vmem %s0, %s301
      %p303 = pneg %p42
      %p304 = pneg %p39
      %p305 = pneg %p63
      %p306 = pneg %p60
      %p307 = pneg %p84
      %p308 = pneg %p81
      %p309 = pneg %p105
      %p310 = pneg %p102
      %p311 = pneg %p126
      %p312 = pneg %p123
      %p313 = pneg %p147
      %p314 = pneg %p144
      %p315 = pneg %p168
      %p316 = pneg %p165
      %p317 = pneg %p194
      %p318 = pneg %p191
      %p319 = scmp.lt.s32.totalorder %s21, 1
      %s320 = scalar_select %p319, %s21, 1
      %s321 = smul.addr %s320, 8
      %s322 = smul.addr %s321, 4
      %s323 = scalar_lea.vmem %s7, %s322
      %p324 = pneg %p220
      %p325 = pneg %p217
      %p326 = scmp.lt.s32.totalorder %s21, 1
      %s327 = scalar_select %p326, %s21, 1
      %s328 = smul.addr %s327, 8
      %s329 = smul.addr %s328, 4
      %s330 = scalar_lea.vmem %s8, %s329
      %p331 = pneg %p246
      %p332 = pneg %p243
      %p333 = scmp.lt.s32.totalorder %s21, 1
      %s334 = scalar_select %p333, %s21, 1
      %s335 = smul.addr %s334, 8
      %s336 = smul.addr %s335, 4
      %s337 = scalar_lea.vmem %s9, %s336
      %p338 = scmp.lt.s32.totalorder %s21, 1
      %s339 = scalar_select %p338, %s21, 1
      %s340 = smul.addr %s339, 20
      %s341 = smul.addr %s340, 4
      %s342 = scalar_lea.vmem %s0, %s341
      %p343 = scmp.lt.s32.totalorder %s21, 1
      %s344 = scalar_select %p343, %s21, 1
      %s345 = smul.addr %s344, 8
      %s346 = smul.addr %s345, 4
      %s347 = scalar_lea.vmem %s7, %s346
      %p348 = scmp.lt.s32.totalorder %s21, 1
      %s349 = scalar_select %p348, %s21, 1
      %s350 = smul.addr %s349, 8
      %s351 = smul.addr %s350, 4
      %s352 = scalar_lea.vmem %s8, %s351
      %p353 = scmp.lt.s32.totalorder %s21, 1
      %s354 = scalar_select %p353, %s21, 1
      %s355 = smul.addr %s354, 8
      %s356 = smul.addr %s355, 4
      %s357 = scalar_lea.vmem %s9, %s356
      %v359 = vld [vmem:[%s342] sm:$0xf]
      %v360 = vld [vmem:[%s342 + $0x4] sm:$0x1]
      %v361 = vld [vmem:[%s342 + $0x8] sm:$0xf]
      %v362 = vld [vmem:[%s342 + $0xc] sm:$0x1]
      %v363 = vld [vmem:[%s342 + $0x10] sm:$0xf]
      %v364 = vld [vmem:[%s342 + $0x14] sm:$0x1]
      %v365 = vld [vmem:[%s342 + $0x18] sm:$0xf]
      %v366 = vld [vmem:[%s342 + $0x1c] sm:$0x1]
      %v367 = vld [vmem:[%s342 + $0x20] sm:$0xf]
      %v368 = vld [vmem:[%s342 + $0x24] sm:$0x1]
      %v369 = vld [vmem:[%s342 + $0x28] sm:$0xf]
      %v370 = vld [vmem:[%s342 + $0x2c] sm:$0x1]
      %v371 = vld [vmem:[%s342 + $0x30] sm:$0xf]
      %v372 = vld [vmem:[%s342 + $0x34] sm:$0x1]
      %v373 = vld [vmem:[%s342 + $0x38] sm:$0xf]
      %v374 = vld [vmem:[%s342 + $0x3c] sm:$0x1]
      %v375 = vld [vmem:[%s342 + $0x40] sm:$0xf]
      %v376 = vld [vmem:[%s342 + $0x44] sm:$0x1]
      %v377 = vld [vmem:[%s342 + $0x48] sm:$0xf]
      %v378 = vld [vmem:[%s342 + $0x4c] sm:$0x1]
      %v379 = vunpack.c.l.bf16 %v359
      %v380 = vunpack.c.l.bf16 %v360
      %v381 = vunpack.c.l.bf16 %v361
      %v382 = vunpack.c.l.bf16 %v362
      %v383 = vunpack.c.l.bf16 %v363
      %v384 = vunpack.c.l.bf16 %v364
      %v385 = vunpack.c.l.bf16 %v365
      %v386 = vunpack.c.l.bf16 %v366
      %v387 = vunpack.c.l.bf16 %v367
      %v388 = vunpack.c.l.bf16 %v368
      %v389 = vunpack.c.l.bf16 %v369
      %v390 = vunpack.c.l.bf16 %v370
      %v391 = vunpack.c.l.bf16 %v371
      %v392 = vunpack.c.l.bf16 %v372
      %v393 = vunpack.c.l.bf16 %v373
      %v394 = vunpack.c.l.bf16 %v374
      %v395 = vunpack.c.l.bf16 %v375
      %v396 = vunpack.c.l.bf16 %v376
      %v397 = vunpack.c.l.bf16 %v377
      %v398 = vunpack.c.l.bf16 %v378
      %vm399 = vcmask 261120
      %400 = vst.msk [vmem:[#allocation2] sm:$0xff] %vm399, %v379
      %401 = vst.msk [vmem:[#allocation2 + $0x18] sm:$0xff] %vm399, %v381
      %402 = vst.msk [vmem:[#allocation2 + $0x30] sm:$0xff] %vm399, %v383
      %403 = vst.msk [vmem:[#allocation2 + $0x48] sm:$0xff] %vm399, %v385
      %404 = vst.msk [vmem:[#allocation2 + $0x60] sm:$0xff] %vm399, %v387
      %405 = vst.msk [vmem:[#allocation2 + $0x78] sm:$0xff] %vm399, %v389
      %406 = vst.msk [vmem:[#allocation2 + $0x90] sm:$0xff] %vm399, %v391
      %407 = vst.msk [vmem:[#allocation2 + $0xa8] sm:$0xff] %vm399, %v393
      %vm424 = vcmask 1046528
      %v425 = vrot.slane %v379, 1
      %v426 = vrot.slane %v380, 1
      %v427 = vsel %vm424, %v425, %v426
      %v428 = vrot.slane %v381, 1
      %v429 = vrot.slane %v382, 1
      %v430 = vsel %vm424, %v428, %v429
      %v431 = vrot.slane %v383, 1
      %v432 = vrot.slane %v384, 1
      %v433 = vsel %vm424, %v431, %v432
      %v434 = vrot.slane %v385, 1
      %v435 = vrot.slane %v386, 1
      %v436 = vsel %vm424, %v434, %v435
      %v437 = vrot.slane %v387, 1
      %v438 = vrot.slane %v388, 1
      %v439 = vsel %vm424, %v437, %v438
      %v440 = vrot.slane %v389, 1
      %v441 = vrot.slane %v390, 1
      %v442 = vsel %vm424, %v440, %v441
      %v443 = vrot.slane %v391, 1
      %v444 = vrot.slane %v392, 1
      %v445 = vsel %vm424, %v443, %v444
      %v446 = vrot.slane %v393, 1
      %v447 = vrot.slane %v394, 1
      %v448 = vsel %vm424, %v446, %v447
      %449 = vrot.lane.b32.xlu0 %v427, 32
      %v450 = vpop.permute.xlu0 %449
      %451 = vrot.lane.b32.xlu0 %v430, 32
      %v452 = vpop.permute.xlu0 %451
      %453 = vrot.lane.b32.xlu0 %v433, 32
      %v454 = vpop.permute.xlu0 %453
      %455 = vrot.lane.b32.xlu0 %v436, 32
      %v456 = vpop.permute.xlu0 %455
      %457 = vrot.lane.b32.xlu0 %v439, 32
      %v458 = vpop.permute.xlu0 %457
      %459 = vrot.lane.b32.xlu0 %v442, 32
      %v460 = vpop.permute.xlu0 %459
      %461 = vrot.lane.b32.xlu0 %v445, 32
      %v462 = vpop.permute.xlu0 %461
      %463 = vrot.lane.b32.xlu0 %v448, 32
      %v464 = vpop.permute.xlu0 %463
      %vm473 = vcmask 523520
      %474 = vst.msk [vmem:[#allocation2] sm:$0xff] %vm473, %v450
      %475 = vst.msk [vmem:[#allocation2 + $0x18] sm:$0xff] %vm473, %v452
      %476 = vst.msk [vmem:[#allocation2 + $0x30] sm:$0xff] %vm473, %v454
      %477 = vst.msk [vmem:[#allocation2 + $0x48] sm:$0xff] %vm473, %v456
      %478 = vst.msk [vmem:[#allocation2 + $0x60] sm:$0xff] %vm473, %v458
      %479 = vst.msk [vmem:[#allocation2 + $0x78] sm:$0xff] %vm473, %v460
      %480 = vst.msk [vmem:[#allocation2 + $0x90] sm:$0xff] %vm473, %v462
      %481 = vst.msk [vmem:[#allocation2 + $0xa8] sm:$0xff] %vm473, %v464
      %vm482 = vcmask 1045504
      %v483 = vrot.slane %v379, 2
      %v484 = vrot.slane %v380, 2
      %v485 = vsel %vm482, %v483, %v484
      %v486 = vrot.slane %v381, 2
      %v487 = vrot.slane %v382, 2
      %v488 = vsel %vm482, %v486, %v487
      %v489 = vrot.slane %v383, 2
      %v490 = vrot.slane %v384, 2
      %v491 = vsel %vm482, %v489, %v490
      %v492 = vrot.slane %v385, 2
      %v493 = vrot.slane %v386, 2
      %v494 = vsel %vm482, %v492, %v493
      %v495 = vrot.slane %v387, 2
      %v496 = vrot.slane %v388, 2
      %v497 = vsel %vm482, %v495, %v496
      %v498 = vrot.slane %v389, 2
      %v499 = vrot.slane %v390, 2
      %v500 = vsel %vm482, %v498, %v499
      %v501 = vrot.slane %v391, 2
      %v502 = vrot.slane %v392, 2
      %v503 = vsel %vm482, %v501, %v502
      %v504 = vrot.slane %v393, 2
      %v505 = vrot.slane %v394, 2
      %v506 = vsel %vm482, %v504, %v505
      %507 = vrot.lane.b32.xlu0 %v485, 64
      %v508 = vpop.permute.xlu0 %507
      %509 = vrot.lane.b32.xlu0 %v488, 64
      %v510 = vpop.permute.xlu0 %509
      %511 = vrot.lane.b32.xlu0 %v491, 64
      %v512 = vpop.permute.xlu0 %511
      %513 = vrot.lane.b32.xlu0 %v494, 64
      %v514 = vpop.permute.xlu0 %513
      %515 = vrot.lane.b32.xlu0 %v497, 64
      %v516 = vpop.permute.xlu0 %515
      %517 = vrot.lane.b32.xlu0 %v500, 64
      %v518 = vpop.permute.xlu0 %517
      %519 = vrot.lane.b32.xlu0 %v503, 64
      %v520 = vpop.permute.xlu0 %519
      %521 = vrot.lane.b32.xlu0 %v506, 64
      %v522 = vpop.permute.xlu0 %521
      %vm531 = vcmask 785920
      %532 = vst.msk [vmem:[#allocation2] sm:$0xff] %vm531, %v508
      %533 = vst.msk [vmem:[#allocation2 + $0x18] sm:$0xff] %vm531, %v510
      %534 = vst.msk [vmem:[#allocation2 + $0x30] sm:$0xff] %vm531, %v512
      %535 = vst.msk [vmem:[#allocation2 + $0x48] sm:$0xff] %vm531, %v514
      %536 = vst.msk [vmem:[#allocation2 + $0x60] sm:$0xff] %vm531, %v516
      %537 = vst.msk [vmem:[#allocation2 + $0x78] sm:$0xff] %vm531, %v518
      %538 = vst.msk [vmem:[#allocation2 + $0x90] sm:$0xff] %vm531, %v520
      %539 = vst.msk [vmem:[#allocation2 + $0xa8] sm:$0xff] %vm531, %v522
      %541 = vrot.lane.b32.xlu0 %v381, 96
      %v542 = vpop.permute.xlu0 %541
      %543 = vrot.lane.b32.xlu0 %v383, 96
      %v544 = vpop.permute.xlu0 %543
      %545 = vrot.lane.b32.xlu0 %v385, 96
      %v546 = vpop.permute.xlu0 %545
      %547 = vrot.lane.b32.xlu0 %v387, 96
      %v548 = vpop.permute.xlu0 %547
      %549 = vrot.lane.b32.xlu0 %v389, 96
      %v550 = vpop.permute.xlu0 %549
      %551 = vrot.lane.b32.xlu0 %v391, 96
      %v552 = vpop.permute.xlu0 %551
      %553 = vrot.lane.b32.xlu0 %v393, 96
      %v554 = vpop.permute.xlu0 %553
      %555 = vrot.lane.b32.xlu0 %v395, 96
      %v556 = vpop.permute.xlu0 %555
      %vm565 = vcmask 1048320
      %566 = vst.msk [vmem:[#allocation2] sm:$0xff] %vm565, %v542
      %567 = vst.msk [vmem:[#allocation2 + $0x18] sm:$0xff] %vm565, %v544
      %568 = vst.msk [vmem:[#allocation2 + $0x30] sm:$0xff] %vm565, %v546
      %569 = vst.msk [vmem:[#allocation2 + $0x48] sm:$0xff] %vm565, %v548
      %570 = vst.msk [vmem:[#allocation2 + $0x60] sm:$0xff] %vm565, %v550
      %571 = vst.msk [vmem:[#allocation2 + $0x78] sm:$0xff] %vm565, %v552
      %572 = vst.msk [vmem:[#allocation2 + $0x90] sm:$0xff] %vm565, %v554
      %573 = vst.msk [vmem:[#allocation2 + $0xa8] sm:$0xff] %vm565, %v556
      %v575 = vrot.slane %v395, 1
      %v576 = vrot.slane %v396, 1
      %v577 = vsel %vm424, %v575, %v576
      %586 = vst.msk [vmem:[#allocation2 + $0x8] sm:$0xff] %vm399, %v430
      %587 = vst.msk [vmem:[#allocation2 + $0x20] sm:$0xff] %vm399, %v433
      %588 = vst.msk [vmem:[#allocation2 + $0x38] sm:$0xff] %vm399, %v436
      %589 = vst.msk [vmem:[#allocation2 + $0x50] sm:$0xff] %vm399, %v439
      %590 = vst.msk [vmem:[#allocation2 + $0x68] sm:$0xff] %vm399, %v442
      %591 = vst.msk [vmem:[#allocation2 + $0x80] sm:$0xff] %vm399, %v445
      %592 = vst.msk [vmem:[#allocation2 + $0x98] sm:$0xff] %vm399, %v448
      %593 = vst.msk [vmem:[#allocation2 + $0xb0] sm:$0xff] %vm399, %v577
      %v594 = vrot.slane %v395, 2
      %v595 = vrot.slane %v396, 2
      %v596 = vsel %vm482, %v594, %v595
      %597 = vrot.lane.b32.xlu0 %v488, 32
      %v598 = vpop.permute.xlu0 %597
      %599 = vrot.lane.b32.xlu0 %v491, 32
      %v600 = vpop.permute.xlu0 %599
      %601 = vrot.lane.b32.xlu0 %v494, 32
      %v602 = vpop.permute.xlu0 %601
      %603 = vrot.lane.b32.xlu0 %v497, 32
      %v604 = vpop.permute.xlu0 %603
      %605 = vrot.lane.b32.xlu0 %v500, 32
      %v606 = vpop.permute.xlu0 %605
      %607 = vrot.lane.b32.xlu0 %v503, 32
      %v608 = vpop.permute.xlu0 %607
      %609 = vrot.lane.b32.xlu0 %v506, 32
      %v610 = vpop.permute.xlu0 %609
      %611 = vrot.lane.b32.xlu0 %v596, 32
      %v612 = vpop.permute.xlu0 %611
      %621 = vst.msk [vmem:[#allocation2 + $0x8] sm:$0xff] %vm473, %v598
      %622 = vst.msk [vmem:[#allocation2 + $0x20] sm:$0xff] %vm473, %v600
      %623 = vst.msk [vmem:[#allocation2 + $0x38] sm:$0xff] %vm473, %v602
      %624 = vst.msk [vmem:[#allocation2 + $0x50] sm:$0xff] %vm473, %v604
      %625 = vst.msk [vmem:[#allocation2 + $0x68] sm:$0xff] %vm473, %v606
      %626 = vst.msk [vmem:[#allocation2 + $0x80] sm:$0xff] %vm473, %v608
      %627 = vst.msk [vmem:[#allocation2 + $0x98] sm:$0xff] %vm473, %v610
      %628 = vst.msk [vmem:[#allocation2 + $0xb0] sm:$0xff] %vm473, %v612
      %630 = vrot.lane.b32.xlu0 %v383, 64
      %v631 = vpop.permute.xlu0 %630
      %632 = vrot.lane.b32.xlu0 %v385, 64
      %v633 = vpop.permute.xlu0 %632
      %634 = vrot.lane.b32.xlu0 %v387, 64
      %v635 = vpop.permute.xlu0 %634
      %636 = vrot.lane.b32.xlu0 %v389, 64
      %v637 = vpop.permute.xlu0 %636
      %638 = vrot.lane.b32.xlu0 %v391, 64
      %v639 = vpop.permute.xlu0 %638
      %640 = vrot.lane.b32.xlu0 %v393, 64
      %v641 = vpop.permute.xlu0 %640
      %642 = vrot.lane.b32.xlu0 %v395, 64
      %v643 = vpop.permute.xlu0 %642
      %644 = vrot.lane.b32.xlu0 %v397, 64
      %v645 = vpop.permute.xlu0 %644
      %654 = vst.msk [vmem:[#allocation2 + $0x8] sm:$0xff] %vm531, %v631
      %655 = vst.msk [vmem:[#allocation2 + $0x20] sm:$0xff] %vm531, %v633
      %656 = vst.msk [vmem:[#allocation2 + $0x38] sm:$0xff] %vm531, %v635
      %657 = vst.msk [vmem:[#allocation2 + $0x50] sm:$0xff] %vm531, %v637
      %658 = vst.msk [vmem:[#allocation2 + $0x68] sm:$0xff] %vm531, %v639
      %659 = vst.msk [vmem:[#allocation2 + $0x80] sm:$0xff] %vm531, %v641
      %660 = vst.msk [vmem:[#allocation2 + $0x98] sm:$0xff] %vm531, %v643
      %661 = vst.msk [vmem:[#allocation2 + $0xb0] sm:$0xff] %vm531, %v645
      %v663 = vrot.slane %v397, 1
      %v664 = vrot.slane %v398, 1
      %v665 = vsel %vm424, %v663, %v664
      %666 = vrot.lane.b32.xlu0 %v433, 96
      %v667 = vpop.permute.xlu0 %666
      %668 = vrot.lane.b32.xlu0 %v436, 96
      %v669 = vpop.permute.xlu0 %668
      %670 = vrot.lane.b32.xlu0 %v439, 96
      %v671 = vpop.permute.xlu0 %670
      %672 = vrot.lane.b32.xlu0 %v442, 96
      %v673 = vpop.permute.xlu0 %672
      %674 = vrot.lane.b32.xlu0 %v445, 96
      %v675 = vpop.permute.xlu0 %674
      %676 = vrot.lane.b32.xlu0 %v448, 96
      %v677 = vpop.permute.xlu0 %676
      %678 = vrot.lane.b32.xlu0 %v577, 96
      %v679 = vpop.permute.xlu0 %678
      %680 = vrot.lane.b32.xlu0 %v665, 96
      %v681 = vpop.permute.xlu0 %680
      %690 = vst.msk [vmem:[#allocation2 + $0x8] sm:$0xff] %vm565, %v667
      %691 = vst.msk [vmem:[#allocation2 + $0x20] sm:$0xff] %vm565, %v669
      %692 = vst.msk [vmem:[#allocation2 + $0x38] sm:$0xff] %vm565, %v671
      %693 = vst.msk [vmem:[#allocation2 + $0x50] sm:$0xff] %vm565, %v673
      %694 = vst.msk [vmem:[#allocation2 + $0x68] sm:$0xff] %vm565, %v675
      %695 = vst.msk [vmem:[#allocation2 + $0x80] sm:$0xff] %vm565, %v677
      %696 = vst.msk [vmem:[#allocation2 + $0x98] sm:$0xff] %vm565, %v679
      %697 = vst.msk [vmem:[#allocation2 + $0xb0] sm:$0xff] %vm565, %v681
      %v698 = vrot.slane %v397, 2
      %v699 = vrot.slane %v398, 2
      %v700 = vsel %vm482, %v698, %v699
      %709 = vst.msk [vmem:[#allocation2 + $0x10] sm:$0xff] %vm399, %v491
      %710 = vst.msk [vmem:[#allocation2 + $0x28] sm:$0xff] %vm399, %v494
      %711 = vst.msk [vmem:[#allocation2 + $0x40] sm:$0xff] %vm399, %v497
      %712 = vst.msk [vmem:[#allocation2 + $0x58] sm:$0xff] %vm399, %v500
      %713 = vst.msk [vmem:[#allocation2 + $0x70] sm:$0xff] %vm399, %v503
      %714 = vst.msk [vmem:[#allocation2 + $0x88] sm:$0xff] %vm399, %v506
      %715 = vst.msk [vmem:[#allocation2 + $0xa0] sm:$0xff] %vm399, %v596
      %716 = vst.msk [vmem:[#allocation2 + $0xb8] sm:$0xff] %vm399, %v700
      %v717 = vld [vmem:[#allocation2] sm:$0xff]
      %v718 = vld [vmem:[#allocation2 + $0x8] sm:$0xff]
      %v719 = vld [vmem:[#allocation2 + $0x10] sm:$0xff]
      %v720 = vld [vmem:[#allocation2 + $0x18] sm:$0xff]
      %v721 = vld [vmem:[#allocation2 + $0x20] sm:$0xff]
      %v722 = vld [vmem:[#allocation2 + $0x28] sm:$0xff]
      %v723 = vld [vmem:[#allocation2 + $0x30] sm:$0xff]
      %v724 = vld [vmem:[#allocation2 + $0x38] sm:$0xff]
      %v725 = vld [vmem:[#allocation2 + $0x40] sm:$0xff]
      %v726 = vld [vmem:[#allocation2 + $0x48] sm:$0xff]
      %v727 = vld [vmem:[#allocation2 + $0x50] sm:$0xff]
      %v728 = vld [vmem:[#allocation2 + $0x58] sm:$0xff]
      %v729 = vld [vmem:[#allocation2 + $0x60] sm:$0xff]
      %v730 = vld [vmem:[#allocation2 + $0x68] sm:$0xff]
      %v731 = vld [vmem:[#allocation2 + $0x70] sm:$0xff]
      %v732 = vld [vmem:[#allocation2 + $0x78] sm:$0xff]
      %v733 = vld [vmem:[#allocation2 + $0x80] sm:$0xff]
      %v734 = vld [vmem:[#allocation2 + $0x88] sm:$0xff]
      %v735 = vld [vmem:[#allocation2 + $0x90] sm:$0xff]
      %v736 = vld [vmem:[#allocation2 + $0x98] sm:$0xff]
      %v737 = vld [vmem:[#allocation2 + $0xa0] sm:$0xff]
      %v738 = vld [vmem:[#allocation2 + $0xa8] sm:$0xff]
      %v739 = vld [vmem:[#allocation2 + $0xb0] sm:$0xff]
      %v740 = vld [vmem:[#allocation2 + $0xb8] sm:$0xff]
      %v741 = vpack.c.bf16 %v720, %v717
      %v742 = vpack.c.bf16 %v721, %v718
      %v743 = vpack.c.bf16 %v722, %v719
      %v744 = vpack.c.bf16 %v726, %v723
      %v745 = vpack.c.bf16 %v727, %v724
      %v746 = vpack.c.bf16 %v728, %v725
      %v747 = vpack.c.bf16 %v732, %v729
      %v748 = vpack.c.bf16 %v733, %v730
      %v749 = vpack.c.bf16 %v734, %v731
      %v750 = vpack.c.bf16 %v738, %v735
      %v751 = vpack.c.bf16 %v739, %v736
      %v752 = vpack.c.bf16 %v740, %v737
      %v753 = vld [vmem:[%s1] sm:$0xf]
      %v754 = vld [vmem:[%s1 + $0x4] sm:$0xf]
      %v755 = vld [vmem:[%s1 + $0x8] sm:$0xf]
      %v756 = vld [vmem:[%s1 + $0xc] sm:$0xf]
      %v757 = vld [vmem:[%s1 + $0x10] sm:$0xf]
      %v758 = vld [vmem:[%s1 + $0x14] sm:$0xf]
      %v759 = vld [vmem:[%s1 + $0x18] sm:$0xf]
      %v760 = vld [vmem:[%s1 + $0x1c] sm:$0xf]
      %v761 = vld [vmem:[%s1 + $0x20] sm:$0xf]
      %v762 = vld [vmem:[%s1 + $0x24] sm:$0xf]
      %v763 = vld [vmem:[%s1 + $0x28] sm:$0xf]
      %v764 = vld [vmem:[%s1 + $0x2c] sm:$0xf]
      %v765 = vld [vmem:[%s1 + $0x30] sm:$0xf]
      %v766 = vld [vmem:[%s1 + $0x34] sm:$0xf]
      %v767 = vld [vmem:[%s1 + $0x38] sm:$0xf]
      %v768 = vld [vmem:[%s1 + $0x3c] sm:$0xf]
      %v769 = vld [vmem:[%s1 + $0x40] sm:$0xf]
      %v770 = vld [vmem:[%s1 + $0x44] sm:$0xf]
      %v771 = vld [vmem:[%s1 + $0x48] sm:$0xf]
      %v772 = vld [vmem:[%s1 + $0x4c] sm:$0xf]
      %v773 = vld [vmem:[%s1 + $0x50] sm:$0xf]
      %v774 = vld [vmem:[%s1 + $0x54] sm:$0xf]
      %v775 = vld [vmem:[%s1 + $0x58] sm:$0xf]
      %v776 = vld [vmem:[%s1 + $0x5c] sm:$0xf]
      %v777 = vld [vmem:[%s1 + $0x60] sm:$0xf]
      %v778 = vld [vmem:[%s1 + $0x64] sm:$0xf]
      %v779 = vld [vmem:[%s1 + $0x68] sm:$0xf]
      %v780 = vld [vmem:[%s1 + $0x6c] sm:$0xf]
      %v781 = vld [vmem:[%s1 + $0x70] sm:$0xf]
      %v782 = vld [vmem:[%s1 + $0x74] sm:$0xf]
      %v783 = vld [vmem:[%s1 + $0x78] sm:$0xf]
      %v784 = vld [vmem:[%s1 + $0x7c] sm:$0xf]
      %v785 = vld [vmem:[%s1 + $0x80] sm:$0xf]
      %v786 = vld [vmem:[%s1 + $0x84] sm:$0xf]
      %v787 = vld [vmem:[%s1 + $0x88] sm:$0xf]
      %v788 = vld [vmem:[%s1 + $0x8c] sm:$0xf]
      %v789 = vld [vmem:[%s2] sm:$0x1]
      %v791 = vlaneseq
      %v792 = vshrl.u32 %v791, 7
      %v793 = vsub.s32 0, %v792
      %v794 = vrot.slane %v789, %v793
      %v832 = vunpack.c.l.b16 %v753
      %v833 = vunpack.c.l.b16 %v754
      %v834 = vunpack.c.l.b16 %v755
      %v835 = vunpack.c.l.b16 %v756
      %v836 = vunpack.c.l.b16 %v757
      %v837 = vunpack.c.l.b16 %v758
      %v838 = vunpack.c.l.b16 %v759
      %v839 = vunpack.c.l.b16 %v760
      %v840 = vunpack.c.l.b16 %v761
      %v841 = vunpack.c.l.b16 %v762
      %v842 = vunpack.c.l.b16 %v763
      %v843 = vunpack.c.l.b16 %v764
      %v844 = vunpack.c.l.b16 %v765
      %v845 = vunpack.c.l.b16 %v766
      %v846 = vunpack.c.l.b16 %v767
      %v847 = vunpack.c.l.b16 %v768
      %v848 = vunpack.c.l.b16 %v769
      %v849 = vunpack.c.l.b16 %v770
      %v850 = vunpack.c.l.b16 %v771
      %v851 = vunpack.c.l.b16 %v772
      %v852 = vunpack.c.l.b16 %v773
      %v853 = vunpack.c.l.b16 %v774
      %v854 = vunpack.c.l.b16 %v775
      %v855 = vunpack.c.l.b16 %v776
      %v856 = vunpack.c.l.b16 %v777
      %v857 = vunpack.c.l.b16 %v778
      %v858 = vunpack.c.l.b16 %v779
      %v859 = vunpack.c.l.b16 %v780
      %v860 = vunpack.c.l.b16 %v781
      %v861 = vunpack.c.l.b16 %v782
      %v862 = vunpack.c.l.b16 %v783
      %v863 = vunpack.c.l.b16 %v784
      %v864 = vunpack.c.l.b16 %v785
      %v865 = vunpack.c.l.b16 %v786
      %v866 = vunpack.c.l.b16 %v787
      %v867 = vunpack.c.l.b16 %v788
      %v868 = vpack.c.b16 %v833, %v832
      %v869 = vpack.c.b16 %v835, %v834
      %v870 = vpack.c.b16 %v837, %v836
      %v871 = vpack.c.b16 %v839, %v838
      %v872 = vpack.c.b16 %v841, %v840
      %v873 = vpack.c.b16 %v843, %v842
      %v874 = vpack.c.b16 %v845, %v844
      %v875 = vpack.c.b16 %v847, %v846
      %v876 = vpack.c.b16 %v849, %v848
      %v877 = vpack.c.b16 %v851, %v850
      %v878 = vpack.c.b16 %v853, %v852
      %v879 = vpack.c.b16 %v855, %v854
      %v880 = vpack.c.b16 %v857, %v856
      %v881 = vpack.c.b16 %v859, %v858
      %v882 = vpack.c.b16 %v861, %v860
      %v883 = vpack.c.b16 %v863, %v862
      %v884 = vpack.c.b16 %v865, %v864
      %v885 = vpack.c.b16 %v867, %v866
      %v905 = vsel %vm399, %v743, 0
      %v908 = vsel %vm399, %v746, 0
      %v911 = vsel %vm399, %v749, 0
      %v914 = vsel %vm399, %v752, 0
      %916 = vmatprep.subr.bf16.mxu0 0
      %917 = vmatpush1.bf16.msra.mxu0 %v868
      %918 = vmatprep.subr.bf16.mxu0 0
      %919 = vmatpush1.bf16.msra.mxu0 %v869
      %920 = vmatprep.subr.bf16.mxu0 0
      %921 = vmatpush1.bf16.msra.mxu0 %v870
      %922 = vmatprep.subr.bf16.mxu0 0
      %923 = vmatpush1.bf16.msra.mxu0 %v871
      %924 = vmatprep.subr.bf16.mxu0 0
      %925 = vmatpush1.bf16.msra.mxu0 %v872
      %926 = vmatprep.subr.bf16.mxu0 0
      %927 = vmatpush1.bf16.msra.mxu0 %v873
      %928 = vmatprep.subr.bf16.mxu0 0
      %929 = vmatpush1.bf16.msra.mxu0 %v874
      %930 = vmatprep.subr.bf16.mxu0 0
      %931 = vmatpush1.bf16.msra.mxu0 %v875
      %932 = vmatprep.subr.bf16.mxu0 0
      %933 = vmatpush1.bf16.msra.mxu0 %v876
      %934 = vmatprep.subr.bf16.mxu0 0
      %935 = vmatpush1.bf16.msra.mxu0 %v877
      %936 = vmatprep.subr.bf16.mxu0 0
      %937 = vmatpush1.bf16.msra.mxu0 %v878
      %938 = vmatprep.subr.bf16.mxu0 0
      %939 = vmatpush1.bf16.msra.mxu0 %v879
      %940 = vmatprep.subr.bf16.mxu0 0
      %941 = vmatpush1.bf16.msra.mxu0 %v880
      %942 = vmatprep.subr.bf16.mxu0 0
      %943 = vmatpush1.bf16.msra.mxu0 %v881
      %944 = vmatprep.subr.bf16.mxu0 0
      %945 = vmatpush1.bf16.msra.mxu0 %v882
      %946 = vmatprep.subr.bf16.mxu0 0
      %947 = vmatpush1.bf16.msra.mxu0 %v883
      %948 = vmatprep.mubr.bf16.mxu0 %v742
      %949 = vmatmul.mubr.bf16.gmra.mrb[0].mxu0 %v741
      %v950 = vpop.f32.mrb[0].mxu0
      %v951 = vadd.f32 %v794, %v950
      %v952 = vpop.f32.mrb[0].mxu0
      %v953 = vpop.f32.mrb[0].mxu0
      %v954 = vadd.f32 %v794, %v953
      %v955 = vpop.f32.mrb[0].mxu0
      %956 = vmatprep.mubr.bf16.mxu0 %v745
      %957 = vmatmul.mubr.bf16.gmra.mrb[0].mxu0 %v744
      %v958 = vpop.f32.mrb[0].mxu0
      %v959 = vadd.f32 %v794, %v958
      %v960 = vpop.f32.mrb[0].mxu0
      %v961 = vpop.f32.mrb[0].mxu0
      %v962 = vadd.f32 %v794, %v961
      %v963 = vpop.f32.mrb[0].mxu0
      %964 = vmatprep.mubr.bf16.mxu0 %v748
      %965 = vmatmul.mubr.bf16.gmra.mrb[0].mxu0 %v747
      %v966 = vpop.f32.mrb[0].mxu0
      %v967 = vadd.f32 %v794, %v966
      %v968 = vpop.f32.mrb[0].mxu0
      %v969 = vpop.f32.mrb[0].mxu0
      %v970 = vadd.f32 %v794, %v969
      %v971 = vpop.f32.mrb[0].mxu0
      %972 = vmatprep.mubr.bf16.mxu0 %v751
      %973 = vmatmul.mubr.bf16.gmra.mrb[0].mxu0 %v750
      %v974 = vpop.f32.mrb[0].mxu0
      %v975 = vadd.f32 %v794, %v974
      %v976 = vpop.f32.mrb[0].mxu0
      %v977 = vpop.f32.mrb[0].mxu0
      %v978 = vadd.f32 %v794, %v977
      %v979 = vpop.f32.mrb[0].mxu0
      %980 = vdwg.mxu0
      %981 = vmatprep.subr.bf16.mxu0 0
      %982 = vmatpush1.bf16.msra.mxu0 %v884
      %983 = vmatprep.subr.bf16.mxu0 0
      %984 = vmatpush1.bf16.msra.mxu0 %v885
      %985 = vmatprep.subr.bf16.mxu0 0
      %986 = vmatpush1.bf16.msra.mxu0 0
      %987 = vmatprep.subr.bf16.mxu0 0
      %988 = vmatpush1.bf16.msra.mxu0 0
      %989 = vmatprep.subr.bf16.mxu0 0
      %990 = vmatpush1.bf16.msra.mxu0 0
      %991 = vmatprep.subr.bf16.mxu0 0
      %992 = vmatpush1.bf16.msra.mxu0 0
      %993 = vmatprep.subr.bf16.mxu0 0
      %994 = vmatpush1.bf16.msra.mxu0 0
      %995 = vmatprep.subr.bf16.mxu0 0
      %996 = vmatpush1.bf16.msra.mxu0 0
      %997 = vmatprep.subr.bf16.mxu0 0
      %998 = vmatpush1.bf16.msra.mxu0 0
      %999 = vmatprep.subr.bf16.mxu0 0
      %1000 = vmatpush1.bf16.msra.mxu0 0
      %1001 = vmatprep.subr.bf16.mxu0 0
      %1002 = vmatpush1.bf16.msra.mxu0 0
      %1003 = vmatprep.subr.bf16.mxu0 0
      %1004 = vmatpush1.bf16.msra.mxu0 0
      %1005 = vmatprep.subr.bf16.mxu0 0
      %1006 = vmatpush1.bf16.msra.mxu0 0
      %1007 = vmatprep.subr.bf16.mxu0 0
      %1008 = vmatpush1.bf16.msra.mxu0 0
      %1009 = vmatprep.subr.bf16.mxu0 0
      %1010 = vmatpush1.bf16.msra.mxu0 0
      %1011 = vmatprep.subr.bf16.mxu0 0
      %1012 = vmatpush1.bf16.msra.mxu0 0
      %1013 = vmatprep.mubr.bf16.mxu0 0
      %1014 = vmatmul.mubr.bf16.gmra.mrb[0].mxu0 %v905
      %v1015 = vpop.f32.mrb[0].mxu0
      %v1016 = vadd.f32 %v951, %v1015
      %v1017 = vpop.f32.mrb[0].mxu0
      %v1018 = vpop.f32.mrb[0].mxu0
      %v1019 = vadd.f32 %v954, %v1018
      %v1020 = vpop.f32.mrb[0].mxu0
      %1021 = vmatprep.mubr.bf16.mxu0 0
      %1022 = vmatmul.mubr.bf16.gmra.mrb[0].mxu0 %v908
      %v1023 = vpop.f32.mrb[0].mxu0
      %v1024 = vadd.f32 %v959, %v1023
      %v1025 = vpop.f32.mrb[0].mxu0
      %v1026 = vpop.f32.mrb[0].mxu0
      %v1027 = vadd.f32 %v962, %v1026
      %v1028 = vpop.f32.mrb[0].mxu0
      %1029 = vmatprep.mubr.bf16.mxu0 0
      %1030 = vmatmul.mubr.bf16.gmra.mrb[0].mxu0 %v911
      %v1031 = vpop.f32.mrb[0].mxu0
      %v1032 = vadd.f32 %v967, %v1031
      %v1033 = vpop.f32.mrb[0].mxu0
      %v1034 = vpop.f32.mrb[0].mxu0
      %v1035 = vadd.f32 %v970, %v1034
      %v1036 = vpop.f32.mrb[0].mxu0
      %1037 = vmatprep.mubr.bf16.mxu0 0
      %1038 = vmatmul.mubr.bf16.gmra.mrb[0].mxu0 %v914
      %v1039 = vpop.f32.mrb[0].mxu0
      %v1040 = vadd.f32 %v975, %v1039
      %v1041 = vpop.f32.mrb[0].mxu0
      %v1042 = vpop.f32.mrb[0].mxu0
      %v1043 = vadd.f32 %v978, %v1042
      %v1044 = vpop.f32.mrb[0].mxu0
      %1045 = vdwg.mxu0
      %v1046 = vpack.c.bf16 %v1019, %v1016
      %v1047 = vpack.c.bf16 %v1027, %v1024
      %v1048 = vpack.c.bf16 %v1035, %v1032
      %v1049 = vpack.c.bf16 %v1043, %v1040
      %v1054 = vunpack.c.l.b16 %v1046
      %v1055 = vunpack.c.h.b16 %v1046
      %v1056 = vunpack.c.l.b16 %v1047
      %v1057 = vunpack.c.h.b16 %v1047
      %v1058 = vunpack.c.l.b16 %v1048
      %v1059 = vunpack.c.h.b16 %v1048
      %v1060 = vunpack.c.l.b16 %v1049
      %v1061 = vunpack.c.h.b16 %v1049
      %v1062 = vpack.c.b16 %v1054, %v1054
      %v1063 = vpack.c.b16 %v1055, %v1055
      %v1064 = vpack.c.b16 %v1056, %v1056
      %v1065 = vpack.c.b16 %v1057, %v1057
      %v1066 = vpack.c.b16 %v1058, %v1058
      %v1067 = vpack.c.b16 %v1059, %v1059
      %v1068 = vpack.c.b16 %v1060, %v1060
      %v1069 = vpack.c.b16 %v1061, %v1061
      %vm1078 = vcmask 257024
      %1079 = vst.msk [vmem:[%s347] sm:$0xf] %vm1078, %v1062
      %1080 = vst.msk [vmem:[%s347 + $0x4] sm:$0xf] %vm1078, %v1063
      %1081 = vst.msk [vmem:[%s347 + $0x8] sm:$0xf] %vm1078, %v1064
      %1082 = vst.msk [vmem:[%s347 + $0xc] sm:$0xf] %vm1078, %v1065
      %1083 = vst.msk [vmem:[%s347 + $0x10] sm:$0xf] %vm1078, %v1066
      %1084 = vst.msk [vmem:[%s347 + $0x14] sm:$0xf] %vm1078, %v1067
      %1085 = vst.msk [vmem:[%s347 + $0x18] sm:$0xf] %vm1078, %v1068
      %1086 = vst.msk [vmem:[%s347 + $0x1c] sm:$0xf] %vm1078, %v1069
      %v1087 = vld [vmem:[%s3] sm:$0xf]
      %v1088 = vld [vmem:[%s3 + $0x4] sm:$0xf]
      %v1089 = vld [vmem:[%s3 + $0x8] sm:$0xf]
      %v1090 = vld [vmem:[%s3 + $0xc] sm:$0xf]
      %v1091 = vld [vmem:[%s4] sm:$0x1]
      %v1093 = vlaneseq
      %v1094 = vshrl.u32 %v1093, 7
      %v1095 = vsub.s32 0, %v1094
      %v1096 = vrot.slane %v1091, %v1095
      %v1102 = vunpack.c.l.b16 %v1087
      %v1103 = vunpack.c.l.b16 %v1088
      %v1104 = vunpack.c.l.b16 %v1089
      %v1105 = vunpack.c.l.b16 %v1090
      %v1106 = vpack.c.b16 %v1103, %v1102
      %v1107 = vpack.c.b16 %v1105, %v1104
      %v1111 = vsel %vm399, %v1046, 0
      %v1114 = vsel %vm399, %v1047, 0
      %v1117 = vsel %vm399, %v1048, 0
      %v1120 = vsel %vm399, %v1049, 0
      %1122 = vmatprep.subr.bf16.mxu0 0
      %1123 = vmatpush1.bf16.msra.mxu0 %v1106
      %1124 = vmatprep.subr.bf16.mxu0 0
      %1125 = vmatpush1.bf16.msra.mxu0 %v1107
      %1126 = vmatprep.subr.bf16.mxu0 0
      %1127 = vmatpush1.bf16.msra.mxu0 0
      %1128 = vmatprep.subr.bf16.mxu0 0
      %1129 = vmatpush1.bf16.msra.mxu0 0
      %1130 = vmatprep.subr.bf16.mxu0 0
      %1131 = vmatpush1.bf16.msra.mxu0 0
      %1132 = vmatprep.subr.bf16.mxu0 0
      %1133 = vmatpush1.bf16.msra.mxu0 0
      %1134 = vmatprep.subr.bf16.mxu0 0
      %1135 = vmatpush1.bf16.msra.mxu0 0
      %1136 = vmatprep.subr.bf16.mxu0 0
      %1137 = vmatpush1.bf16.msra.mxu0 0
      %1138 = vmatprep.subr.bf16.mxu0 0
      %1139 = vmatpush1.bf16.msra.mxu0 0
      %1140 = vmatprep.subr.bf16.mxu0 0
      %1141 = vmatpush1.bf16.msra.mxu0 0
      %1142 = vmatprep.subr.bf16.mxu0 0
      %1143 = vmatpush1.bf16.msra.mxu0 0
      %1144 = vmatprep.subr.bf16.mxu0 0
      %1145 = vmatpush1.bf16.msra.mxu0 0
      %1146 = vmatprep.subr.bf16.mxu0 0
      %1147 = vmatpush1.bf16.msra.mxu0 0
      %1148 = vmatprep.subr.bf16.mxu0 0
      %1149 = vmatpush1.bf16.msra.mxu0 0
      %1150 = vmatprep.subr.bf16.mxu0 0
      %1151 = vmatpush1.bf16.msra.mxu0 0
      %1152 = vmatprep.subr.bf16.mxu0 0
      %1153 = vmatpush1.bf16.msra.mxu0 0
      %1154 = vmatprep.mubr.bf16.mxu0 0
      %1155 = vmatmul.mubr.bf16.gmra.mrb[0].mxu0 %v1111
      %v1156 = vpop.f32.mrb[0].mxu0
      %v1157 = vadd.f32 %v1096, %v1156
      %v1158 = vpop.f32.mrb[0].mxu0
      %v1159 = vpop.f32.mrb[0].mxu0
      %v1160 = vadd.f32 %v1096, %v1159
      %v1161 = vpop.f32.mrb[0].mxu0
      %1162 = vmatprep.mubr.bf16.mxu0 0
      %1163 = vmatmul.mubr.bf16.gmra.mrb[0].mxu0 %v1114
      %v1164 = vpop.f32.mrb[0].mxu0
      %v1165 = vadd.f32 %v1096, %v1164
      %v1166 = vpop.f32.mrb[0].mxu0
      %v1167 = vpop.f32.mrb[0].mxu0
      %v1168 = vadd.f32 %v1096, %v1167
      %v1169 = vpop.f32.mrb[0].mxu0
      %1170 = vmatprep.mubr.bf16.mxu0 0
      %1171 = vmatmul.mubr.bf16.gmra.mrb[0].mxu0 %v1117
      %v1172 = vpop.f32.mrb[0].mxu0
      %v1173 = vadd.f32 %v1096, %v1172
      %v1174 = vpop.f32.mrb[0].mxu0
      %v1175 = vpop.f32.mrb[0].mxu0
      %v1176 = vadd.f32 %v1096, %v1175
      %v1177 = vpop.f32.mrb[0].mxu0
      %1178 = vmatprep.mubr.bf16.mxu0 0
      %1179 = vmatmul.mubr.bf16.gmra.mrb[0].mxu0 %v1120
      %v1180 = vpop.f32.mrb[0].mxu0
      %v1181 = vadd.f32 %v1096, %v1180
      %v1182 = vpop.f32.mrb[0].mxu0
      %v1183 = vpop.f32.mrb[0].mxu0
      %v1184 = vadd.f32 %v1096, %v1183
      %v1185 = vpop.f32.mrb[0].mxu0
      %1186 = vdwg.mxu0
      %v1187 = vmax.f32 %v1157, 0.0
      %v1188 = vmax.f32 %v1160, 0.0
      %v1189 = vmax.f32 %v1165, 0.0
      %v1190 = vmax.f32 %v1168, 0.0
      %v1191 = vmax.f32 %v1173, 0.0
      %v1192 = vmax.f32 %v1176, 0.0
      %v1193 = vmax.f32 %v1181, 0.0
      %v1194 = vmax.f32 %v1184, 0.0
      %v1195 = vpack.c.bf16 %v1188, %v1187
      %v1196 = vpack.c.bf16 %v1190, %v1189
      %v1197 = vpack.c.bf16 %v1192, %v1191
      %v1198 = vpack.c.bf16 %v1194, %v1193
      %v1203 = vunpack.c.l.b16 %v1195
      %v1204 = vunpack.c.h.b16 %v1195
      %v1205 = vunpack.c.l.b16 %v1196
      %v1206 = vunpack.c.h.b16 %v1196
      %v1207 = vunpack.c.l.b16 %v1197
      %v1208 = vunpack.c.h.b16 %v1197
      %v1209 = vunpack.c.l.b16 %v1198
      %v1210 = vunpack.c.h.b16 %v1198
      %v1211 = vpack.c.b16 %v1203, %v1203
      %v1212 = vpack.c.b16 %v1204, %v1204
      %v1213 = vpack.c.b16 %v1205, %v1205
      %v1214 = vpack.c.b16 %v1206, %v1206
      %v1215 = vpack.c.b16 %v1207, %v1207
      %v1216 = vpack.c.b16 %v1208, %v1208
      %v1217 = vpack.c.b16 %v1209, %v1209
      %v1218 = vpack.c.b16 %v1210, %v1210
      %vm1227 = vcmask 125952
      %1228 = vst.msk [vmem:[%s352] sm:$0xf] %vm1227, %v1211
      %1229 = vst.msk [vmem:[%s352 + $0x4] sm:$0xf] %vm1227, %v1212
      %1230 = vst.msk [vmem:[%s352 + $0x8] sm:$0xf] %vm1227, %v1213
      %1231 = vst.msk [vmem:[%s352 + $0xc] sm:$0xf] %vm1227, %v1214
      %1232 = vst.msk [vmem:[%s352 + $0x10] sm:$0xf] %vm1227, %v1215
      %1233 = vst.msk [vmem:[%s352 + $0x14] sm:$0xf] %vm1227, %v1216
      %1234 = vst.msk [vmem:[%s352 + $0x18] sm:$0xf] %vm1227, %v1217
      %1235 = vst.msk [vmem:[%s352 + $0x1c] sm:$0xf] %vm1227, %v1218
      %v1236 = vld [vmem:[%s5] sm:$0xf]
      %v1237 = vld [vmem:[%s5 + $0x4] sm:$0xf]
      %v1238 = vld [vmem:[%s5 + $0x8] sm:$0xf]
      %v1239 = vld [vmem:[%s5 + $0xc] sm:$0xf]
      %v1240 = vld [vmem:[%s6] sm:$0x1]
      %v1242 = vlaneseq
      %v1243 = vshrl.u32 %v1242, 7
      %v1244 = vsub.s32 0, %v1243
      %v1245 = vrot.slane %v1240, %v1244
      %v1251 = vunpack.c.l.b16 %v1236
      %v1252 = vunpack.c.l.b16 %v1237
      %v1253 = vunpack.c.l.b16 %v1238
      %v1254 = vunpack.c.l.b16 %v1239
      %v1255 = vpack.c.b16 %v1252, %v1251
      %v1256 = vpack.c.b16 %v1254, %v1253
      %1259 = vmatprep.subr.bf16.mxu0 0
      %1260 = vmatpush1.bf16.msra.mxu0 %v1255
      %1261 = vmatprep.subr.bf16.mxu0 0
      %1262 = vmatpush1.bf16.msra.mxu0 %v1256
      %1263 = vmatprep.subr.bf16.mxu0 0
      %1264 = vmatpush1.bf16.msra.mxu0 0
      %1265 = vmatprep.subr.bf16.mxu0 0
      %1266 = vmatpush1.bf16.msra.mxu0 0
      %1267 = vmatprep.subr.bf16.mxu0 0
      %1268 = vmatpush1.bf16.msra.mxu0 0
      %1269 = vmatprep.subr.bf16.mxu0 0
      %1270 = vmatpush1.bf16.msra.mxu0 0
      %1271 = vmatprep.subr.bf16.mxu0 0
      %1272 = vmatpush1.bf16.msra.mxu0 0
      %1273 = vmatprep.subr.bf16.mxu0 0
      %1274 = vmatpush1.bf16.msra.mxu0 0
      %1275 = vmatprep.subr.bf16.mxu0 0
      %1276 = vmatpush1.bf16.msra.mxu0 0
      %1277 = vmatprep.subr.bf16.mxu0 0
      %1278 = vmatpush1.bf16.msra.mxu0 0
      %1279 = vmatprep.subr.bf16.mxu0 0
      %1280 = vmatpush1.bf16.msra.mxu0 0
      %1281 = vmatprep.subr.bf16.mxu0 0
      %1282 = vmatpush1.bf16.msra.mxu0 0
      %1283 = vmatprep.subr.bf16.mxu0 0
      %1284 = vmatpush1.bf16.msra.mxu0 0
      %1285 = vmatprep.subr.bf16.mxu0 0
      %1286 = vmatpush1.bf16.msra.mxu0 0
      %1287 = vmatprep.subr.bf16.mxu0 0
      %1288 = vmatpush1.bf16.msra.mxu0 0
      %1289 = vmatprep.subr.bf16.mxu0 0
      %1290 = vmatpush1.bf16.msra.mxu0 0
      %1291 = vmatprep.mubr.bf16.mxu0 0
      %1292 = vmatmul.mubr.bf16.gmra.mrb[0].mxu0 %v1111
      %v1293 = vpop.f32.mrb[0].mxu0
      %v1294 = vadd.f32 %v1245, %v1293
      %v1295 = vpop.f32.mrb[0].mxu0
      %v1296 = vpop.f32.mrb[0].mxu0
      %v1297 = vadd.f32 %v1245, %v1296
      %v1298 = vpop.f32.mrb[0].mxu0
      %1299 = vmatprep.mubr.bf16.mxu0 0
      %1300 = vmatmul.mubr.bf16.gmra.mrb[0].mxu0 %v1114
      %v1301 = vpop.f32.mrb[0].mxu0
      %v1302 = vadd.f32 %v1245, %v1301
      %v1303 = vpop.f32.mrb[0].mxu0
      %v1304 = vpop.f32.mrb[0].mxu0
      %v1305 = vadd.f32 %v1245, %v1304
      %v1306 = vpop.f32.mrb[0].mxu0
      %1307 = vmatprep.mubr.bf16.mxu0 0
      %1308 = vmatmul.mubr.bf16.gmra.mrb[0].mxu0 %v1117
      %v1309 = vpop.f32.mrb[0].mxu0
      %v1310 = vadd.f32 %v1245, %v1309
      %v1311 = vpop.f32.mrb[0].mxu0
      %v1312 = vpop.f32.mrb[0].mxu0
      %v1313 = vadd.f32 %v1245, %v1312
      %v1314 = vpop.f32.mrb[0].mxu0
      %1315 = vmatprep.mubr.bf16.mxu0 0
      %1316 = vmatmul.mubr.bf16.gmra.mrb[0].mxu0 %v1120
      %v1317 = vpop.f32.mrb[0].mxu0
      %v1318 = vadd.f32 %v1245, %v1317
      %v1319 = vpop.f32.mrb[0].mxu0
      %v1320 = vpop.f32.mrb[0].mxu0
      %v1321 = vadd.f32 %v1245, %v1320
      %v1322 = vpop.f32.mrb[0].mxu0
      %1323 = vdwg.mxu0
      %v1324 = vpack.c.bf16 %v1297, %v1294
      %v1325 = vpack.c.bf16 %v1305, %v1302
      %v1326 = vpack.c.bf16 %v1313, %v1310
      %v1327 = vpack.c.bf16 %v1321, %v1318
      %v1332 = vunpack.c.l.b16 %v1324
      %v1333 = vunpack.c.h.b16 %v1324
      %v1334 = vunpack.c.l.b16 %v1325
      %v1335 = vunpack.c.h.b16 %v1325
      %v1336 = vunpack.c.l.b16 %v1326
      %v1337 = vunpack.c.h.b16 %v1326
      %v1338 = vunpack.c.l.b16 %v1327
      %v1339 = vunpack.c.h.b16 %v1327
      %v1340 = vpack.c.b16 %v1332, %v1332
      %v1341 = vpack.c.b16 %v1333, %v1333
      %v1342 = vpack.c.b16 %v1334, %v1334
      %v1343 = vpack.c.b16 %v1335, %v1335
      %v1344 = vpack.c.b16 %v1336, %v1336
      %v1345 = vpack.c.b16 %v1337, %v1337
      %v1346 = vpack.c.b16 %v1338, %v1338
      %v1347 = vpack.c.b16 %v1339, %v1339
      %1356 = vst.msk [vmem:[%s357] sm:$0xf] %vm1227, %v1340
      %1357 = vst.msk [vmem:[%s357 + $0x4] sm:$0xf] %vm1227, %v1341
      %1358 = vst.msk [vmem:[%s357 + $0x8] sm:$0xf] %vm1227, %v1342
      %1359 = vst.msk [vmem:[%s357 + $0xc] sm:$0xf] %vm1227, %v1343
      %1360 = vst.msk [vmem:[%s357 + $0x10] sm:$0xf] %vm1227, %v1344
      %1361 = vst.msk [vmem:[%s357 + $0x14] sm:$0xf] %vm1227, %v1345
      %1362 = vst.msk [vmem:[%s357 + $0x18] sm:$0xf] %vm1227, %v1346
      %1363 = vst.msk [vmem:[%s357 + $0x1c] sm:$0xf] %vm1227, %v1347
      %p1364 = scmp.lt.s32.totalorder %s21, 1
      %s1365 = scalar_select %p1364, %s21, 1
      %s1366 = smul.addr %s1365, 8
      %s1367 = smul.addr %s1366, 4
      %s1368 = scalar_lea.vmem %s7, %s1367
      %p1369 = scmp.lt.s32.totalorder %s21, 1
      %s1370 = scalar_select %p1369, %s21, 1
      %s1371 = smul.addr %s1370, 8
      %s1372 = smul.addr %s1371, 4
      %s1373 = scalar_lea.vmem %s8, %s1372
      %p1374 = scmp.lt.s32.totalorder %s21, 1
      %s1375 = scalar_select %p1374, %s21, 1
      %s1376 = smul.addr %s1375, 8
      %s1377 = smul.addr %s1376, 4
      %s1378 = scalar_lea.vmem %s9, %s1377
      // Predicated region
      $region49: #{resnet_base_oc_forward.5} parent=47 // pred_check
        %p1379 = pneg %p191
      $region50: #{resnet_base_oc_forward.5} parent=47 // pred_check_branch
        %1381 = sbr.rel (%p1379) target = $region52
      $region51: #{resnet_base_oc_forward.5} parent=47 // pred_region
        _
      $region52: #{resnet_base_oc_forward.5} parent=47 // pred_fallthru
        _
      // Predicated region
      $region53: #{resnet_base_oc_forward.5} parent=47 // pred_check
        %p1382 = pneg %p217
      $region54: #{resnet_base_oc_forward.5} parent=47 // pred_check_branch
        %1384 = sbr.rel (%p1382) target = $region56
      $region55: #{resnet_base_oc_forward.5} parent=47 // pred_region
        _
      $region56: #{resnet_base_oc_forward.5} parent=47 // pred_fallthru
        _
      // Predicated region
      $region57: #{resnet_base_oc_forward.5} parent=47 // pred_check
        %p1385 = pneg %p243
      $region58: #{resnet_base_oc_forward.5} parent=47 // pred_check_branch
        %1387 = sbr.rel (%p1385) target = $region60
      $region59: #{resnet_base_oc_forward.5} parent=47 // pred_region
        _
      $region60: #{resnet_base_oc_forward.5} parent=47 // pred_fallthru
        _
    $region48: #{resnet_base_oc_forward.5} parent=5 // pred_fallthru
      _
    %p1388 = scmp.le.s32.totalorder 2, %s16
    // Predicated region
    $region61: #{resnet_base_oc_forward.5} parent=5 // pred_check
      %p1389 = pneg %p1388
    $region62: #{resnet_base_oc_forward.5} parent=5 // pred_check_branch
      %1391 = sbr.rel (%p1389) target = $region64
    $region63: #{resnet_base_oc_forward.5} parent=5 // pred_region
      %s1392 = ssub.s32 %s16, 2
      // Predicated region
      $region65: #{resnet_base_oc_forward.5} parent=63 // pred_check
        %p1393 = pneg %p197
      $region66: #{resnet_base_oc_forward.5} parent=63 // pred_check_branch
        %1395 = sbr.rel (%p1393) target = $region68
      $region67: #{resnet_base_oc_forward.5} parent=63 // pred_region
        %p1396 = scmp.lt.s32.totalorder %s22, 1
        %s1397 = scalar_select %p1396, %s22, 1
        %s1398 = smul.addr %s1397, 8
        %s1399 = smul.addr %s1398, 4
        %s1400 = scalar_lea.vmem %s7, %s1399
      $region68: #{resnet_base_oc_forward.5} parent=63 // pred_fallthru
        _
      // Predicated region
      $region69: #{resnet_base_oc_forward.5} parent=63 // pred_check
        %p1401 = pneg %p223
      $region70: #{resnet_base_oc_forward.5} parent=63 // pred_check_branch
        %1403 = sbr.rel (%p1401) target = $region72
      $region71: #{resnet_base_oc_forward.5} parent=63 // pred_region
        %p1404 = scmp.lt.s32.totalorder %s22, 1
        %s1405 = scalar_select %p1404, %s22, 1
        %s1406 = smul.addr %s1405, 8
        %s1407 = smul.addr %s1406, 4
        %s1408 = scalar_lea.vmem %s8, %s1407
      $region72: #{resnet_base_oc_forward.5} parent=63 // pred_fallthru
        _
      // Predicated region
      $region73: #{resnet_base_oc_forward.5} parent=63 // pred_check
        %p1409 = pneg %p249
      $region74: #{resnet_base_oc_forward.5} parent=63 // pred_check_branch
        %1411 = sbr.rel (%p1409) target = $region76
      $region75: #{resnet_base_oc_forward.5} parent=63 // pred_region
        %p1412 = scmp.lt.s32.totalorder %s22, 1
        %s1413 = scalar_select %p1412, %s22, 1
        %s1414 = smul.addr %s1413, 8
        %s1415 = smul.addr %s1414, 4
        %s1416 = scalar_lea.vmem %s9, %s1415
      $region76: #{resnet_base_oc_forward.5} parent=63 // pred_fallthru
        _
    $region64: #{resnet_base_oc_forward.5} parent=5 // pred_fallthru
      _
  $region6: #{resnet_base_oc_forward.5} parent=0 // loop_footer
    %s20 = sadd.s32 1, %s16
  $region7: #{resnet_base_oc_forward.5} parent=0 // loop_footer_branch
    %15 = sbr.rel target = $region3
  $region8: #{resnet_base_oc_forward.5} parent=0 // loop_exit
    _

</llo_original>
